<compile_context>
chip_gen: v7x
topology: tpu7x:2x2x1
jax: 0.10.0
libtpu: 0.0.40
codegen_flags: <defaults>
</compile_context>

<pallas_src>
import math

import jax
import jax.numpy as jnp
import numpy as np
from jax.experimental import pallas as pl
from jax.experimental.pallas import tpu as pltpu

# ------------------------- hyper-parameters (small) -------------------------
N_FEATURES = 9
N_AUX      = 3
D_MODEL    = 32
N_HEADS    = 4
N_HIDDEN   = 64
N_LAYERS   = 2
SEQ        = 8
BATCH      = 2
HEAD_DIM   = D_MODEL // N_HEADS
LN_EPS     = 1e-5

BS         = BATCH * SEQ            # flattened (batch, seq) rows
HB         = N_HEADS * BATCH        # merged head-batch dim for attention
HEAD_PAD   = 128                    # lane-dense padded width of the output heads
VEC_PAD    = 64                     # lane width of the per-layer small-vector slab
SQRT_D     = math.sqrt(D_MODEL)
ATTN_SCALE = 1.0 / math.sqrt(HEAD_DIM)

_VMEM = pl.BlockSpec(memory_space=pltpu.MemorySpace.VMEM)


def _vmem_specs(n):
    return [pl.BlockSpec(memory_space=pltpu.MemorySpace.VMEM) for _ in range(n)]


# ------------------------- in-kernel helpers -------------------------
def _mm_t(x, w):
    """x:(M,K) @ w:(N,K)^T -> (M,N), f32 accumulate on the MXU."""
    return jax.lax.dot_general(
        x, w, dimension_numbers=(((1,), (1,)), ((), ())),
        preferred_element_type=jnp.float32)


def _layer_norm(x, g, b):
    mu = jnp.mean(x, axis=-1, keepdims=True)
    var = jnp.mean(jnp.square(x - mu), axis=-1, keepdims=True)
    return (x - mu) * jax.lax.rsqrt(var + LN_EPS) * g + b


def _split_heads(t_bds):
    """(B, D, S) -> (H*B, head_dim, S) via tile-aligned sublane slices (no lane extracts)."""
    return jnp.concatenate(
        [t_bds[:, h * HEAD_DIM:(h + 1) * HEAD_DIM, :] for h in range(N_HEADS)], axis=0)


def _merge_heads(ctx_hbds):
    """(H*B, head_dim, S) -> (B, D, S)."""
    return jnp.concatenate(
        [ctx_hbds[h * BATCH:(h + 1) * BATCH] for h in range(N_HEADS)], axis=1)


# ------------------------- fused forward kernel -------------------------
def _fused_forward_kernel(x_ref, bias_ref, pe_ref, in_w_ref, gvec_ref,
                          wqkv_ref, wo_ref, w1_ref, w2_ref, lvec_ref,
                          outw_ref, auxw_ref, o_ref):
    # ---- global small-vector slab: row0=in_b, row1=out_b(pad), row2=aux_b(pad) ----
    gv = gvec_ref[...]                                  # (3, HEAD_PAD)
    in_b  = gv[0:1, :D_MODEL]
    out_b = gv[1:2, :]
    aux_b = gv[2:3, :]

    # ---- InputLinear(src) * sqrt(d_model) + positional encoding (dropout p=0) ----
    y = (_mm_t(x_ref[...], in_w_ref[...]) + in_b) * SQRT_D + pe_ref[...]   # (BS, D)

    bias = bias_ref[...]                                # (H*B, S, S) causal + key-padding

    for l in range(N_LAYERS):                           # unrolled (N_LAYERS = 2)
        # per-layer small-vector slab: bq,bk,bv,bo,ln1g,ln1b,b1,b2,ln2g,ln2b
        lv = lvec_ref[l]                                # (10, VEC_PAD)
        bq, bk, bv, bo = (lv[r:r + 1, :D_MODEL] for r in range(4))
        ln1_g, ln1_b = lv[4:5, :D_MODEL], lv[5:6, :D_MODEL]
        b1 = lv[6:7, :N_HIDDEN]
        b2 = lv[7:8, :D_MODEL]
        ln2_g, ln2_b = lv[8:9, :D_MODEL], lv[9:10, :D_MODEL]

        # ---- multi-head self-attention: 3 projection matmuls (no fused-QKV slicing) ----
        q = _mm_t(y, wqkv_ref[l, 0]) + bq               # (BS, D)
        k = _mm_t(y, wqkv_ref[l, 1]) + bk
        v = _mm_t(y, wqkv_ref[l, 2]) + bv

        def _to_bds(t):                                 # (BS, D) -> (B, D, S)
            return jnp.swapaxes(t.reshape(BATCH, SEQ, D_MODEL), 1, 2)

        qh = _split_heads(_to_bds(q))                   # (H*B, hd, S)
        kh = _split_heads(_to_bds(k))
        vh = _split_heads(_to_bds(v))
        qhT = jnp.swapaxes(qh, 1, 2)                    # (H*B, S, hd)

        # one batched score matmul + one batched context matmul for ALL heads
        s = jnp.einsum('bqd,bdk->bqk', qhT, kh,
                       preferred_element_type=jnp.float32) * ATTN_SCALE + bias
        s = s - jnp.max(s, axis=-1, keepdims=True)
        p = jnp.exp(s)
        p = p * pl.reciprocal(jnp.sum(p, axis=-1, keepdims=True), approx=True)
        ctx = jnp.einsum('bdk,bqk->bdq', vh, p,
                         preferred_element_type=jnp.float32)       # (H*B, hd, S)

        ctx = jnp.swapaxes(_merge_heads(ctx), 1, 2).reshape(BS, D_MODEL)
        attn = _mm_t(ctx, wo_ref[l]) + bo               # single output projection

        # ---- residual + LayerNorm1, relu FFN, residual + LayerNorm2 (post-norm) ----
        h1 = _layer_norm(y + attn, ln1_g, ln1_b)
        ff = jnp.maximum(_mm_t(h1, w1_ref[l]) + b1, 0.0)
        ff = _mm_t(ff, w2_ref[l]) + b2
        y = _layer_norm(h1 + ff, ln2_g, ln2_b)

    # ---- output heads, zero-padded to 128 lanes -> two dense (BS, 128) stores ----
    yo = _mm_t(y, outw_ref[...]) + out_b                # lanes [0:9] = OutputLinear(x)
    o_ref[0] = 1.0 / (1.0 + jnp.exp(-yo))               # sigmoid head (out1)
    o_ref[1] = _mm_t(yo, auxw_ref[...]) + aux_b         # auxiliary head (out2)


# ------------------------- wrapper -------------------------
def timeseries_transformer_forward(params, src, src_mask, padding_mask):
    """src: (S,B,F) seq-first (PyTorch convention), src_mask: (S,S) additive float,
    padding_mask: (B,S) bool (True = pad).  Returns (out1, out2) seq-first."""
    x = jnp.transpose(src, (1, 0, 2)).astype(jnp.float32).reshape(BS, N_FEATURES)

    # combine causal mask + key_padding_mask once, broadcast over heads (h-major, b-minor
    # to match _split_heads ordering).  PyTorch uses -inf; -1e9 is numerically safe here.
    pad_bias = jnp.where(padding_mask, -1e9, 0.0).astype(jnp.float32)[:, None, :]   # (B,1,S)
    bias = src_mask.astype(jnp.float32)[None, :, :] + pad_bias                      # (B,S,S)
    bias_hb = jnp.broadcast_to(bias[None], (N_HEADS, BATCH, SEQ, SEQ)).reshape(HB, SEQ, SEQ)

    pe_bs = jnp.tile(params["pe"], (BATCH, 1))          # (BS, D), row b*S+s -> pe[s]

    packed = pl.pallas_call(
        _fused_forward_kernel,
        out_shape=jax.ShapeDtypeStruct((2, BS, HEAD_PAD), jnp.float32),
        in_specs=_vmem_specs(12),
        out_specs=_VMEM,
    )(x, bias_hb, pe_bs, params["in_w"], params["gvec"],
      params["wqkv"], params["wo"], params["w1"], params["w2"], params["lvec"],
      params["out_w_pad"], params["aux_w_pad"])

    out1 = packed[0, :, :N_FEATURES].reshape(BATCH, SEQ, N_FEATURES)
    out2 = packed[1, :, :N_AUX].reshape(BATCH, SEQ, N_AUX)
    # back to seq-first like PyTorch
    return jnp.transpose(out1, (1, 0, 2)), jnp.transpose(out2, (1, 0, 2))


# ------------------------- deterministic parameter init -------------------------
def init_params(key):
    keys = jax.random.split(key, 5 + N_LAYERS)
    u = lambda k, shape, a: jax.random.uniform(k, shape, jnp.float32, -a, a)

    def pad_vec(v, width):
        v = jnp.asarray(v, jnp.float32).reshape(-1)
        return jnp.pad(v, (0, width - v.shape[0]))

    # init_weights(): Input/Output weights ~ U(-0.1, 0.1), Output bias = 0
    in_w  = u(keys[0], (D_MODEL, N_FEATURES), 0.1)
    in_b  = u(keys[1], (D_MODEL,), 1.0 / math.sqrt(N_FEATURES))
    out_w = u(keys[2], (N_FEATURES, D_MODEL), 0.1)
    out_b = jnp.zeros((N_FEATURES,), jnp.float32)
    aux_w = u(keys[3], (N_AUX, N_FEATURES), 1.0 / math.sqrt(N_FEATURES))
    aux_b = u(keys[4], (N_AUX,), 1.0 / math.sqrt(N_FEATURES))

    # zero-pad the output heads to 128 lanes (padding rows/cols are exact zeros, so the
    # first 9 / 3 lanes of the kernel's padded head outputs equal the true results).
    out_w_pad = jnp.zeros((HEAD_PAD, D_MODEL), jnp.float32).at[:N_FEATURES].set(out_w)
    aux_w_pad = jnp.zeros((HEAD_PAD, HEAD_PAD), jnp.float32).at[:N_AUX, :N_FEATURES].set(aux_w)
    gvec = jnp.stack([pad_vec(in_b, HEAD_PAD),
                      pad_vec(out_b, HEAD_PAD),
                      pad_vec(aux_b, HEAD_PAD)])                    # (3, 128)

    # PositionalEncoding buffer (same formula as the PyTorch module)
    pos = np.arange(SEQ, dtype=np.float32)[:, None]
    div = np.exp(np.arange(0, D_MODEL, 2, dtype=np.float32) * (-math.log(10000.0) / D_MODEL))
    pe = np.zeros((SEQ, D_MODEL), np.float32)
    pe[:, 0::2] = np.sin(pos * div)
    pe[:, 1::2] = np.cos(pos * div)

    wqkv, wo, w1, w2, lvec = [], [], [], [], []
    a_d = 1.0 / math.sqrt(D_MODEL)
    a_h = 1.0 / math.sqrt(N_HIDDEN)
    ones_d, zeros_d = jnp.ones((D_MODEL,), jnp.float32), jnp.zeros((D_MODEL,), jnp.float32)
    for i in range(N_LAYERS):
        lk = jax.random.split(keys[5 + i], 6)
        wqkv.append(u(lk[0], (3, D_MODEL, D_MODEL), a_d))
        wo.append(u(lk[1], (D_MODEL, D_MODEL), a_d))
        w1.append(u(lk[2], (N_HIDDEN, D_MODEL), a_d))
        w2.append(u(lk[4], (D_MODEL, N_HIDDEN), a_h))
        b1 = u(lk[3], (N_HIDDEN,), a_d)
        b2 = u(lk[5], (D_MODEL,), a_h)
        rows = [zeros_d, zeros_d, zeros_d, zeros_d,     # bq, bk, bv, bo
                ones_d, zeros_d,                        # LayerNorm1 gamma, beta
                b1, b2,                                 # FFN biases
                ones_d, zeros_d]                        # LayerNorm2 gamma, beta
        lvec.append(jnp.stack([pad_vec(r, VEC_PAD) for r in rows]))  # (10, 64)

    return dict(
        in_w=in_w, gvec=gvec, pe=jnp.asarray(pe),
        wqkv=jnp.stack(wqkv), wo=jnp.stack(wo),
        w1=jnp.stack(w1), w2=jnp.stack(w2), lvec=jnp.stack(lvec),
        out_w_pad=out_w_pad, aux_w_pad=aux_w_pad,
    )


# ------------------------- main -------------------------
if __name__ == "__main__":
    key = jax.random.PRNGKey(0)
    pkey, xkey = jax.random.split(key)
    params = init_params(pkey)

    # deterministic example inputs (PyTorch seq-first convention)
    src = jax.random.normal(xkey, (SEQ, BATCH, N_FEATURES), jnp.float32)
    # generate_square_subsequent_mask(S): 0 on/below diagonal, -1e6 above
    src_mask = jnp.where(jnp.tril(jnp.ones((SEQ, SEQ), bool)), 0.0, -1e6).astype(jnp.float32)
    # padding mask: True = padded position (pad last 2 steps of sample 1)
    padding_mask = jnp.zeros((BATCH, SEQ), bool).at[1, -2:].set(True)

    fwd = jax.jit(timeseries_transformer_forward)
    out1, out2 = fwd(params, src, src_mask, padding_mask)
    jax.block_until_ready((out1, out2))

    assert out1.shape == (SEQ, BATCH, N_FEATURES)
    assert out2.shape == (SEQ, BATCH, N_AUX)
    assert bool(jnp.all(jnp.isfinite(out1))) and bool(jnp.all(jnp.isfinite(out2)))
    assert bool(jnp.all(out1 >= 0.0)) and bool(jnp.all(out1 <= 1.0))   # sigmoid range
    print("KERNEL_OK")
</pallas_src>

<mosaic_0001>
module attributes {stable_mosaic.version = 11 : i64} {
  func.func @_fused_forward_kernel(%arg0: memref<16x9xf32, #tpu.memory_space<vmem>>, %arg1: memref<8x8x8xf32, #tpu.memory_space<vmem>>, %arg2: memref<16x32xf32, #tpu.memory_space<vmem>>, %arg3: memref<32x9xf32, #tpu.memory_space<vmem>>, %arg4: memref<3x128xf32, #tpu.memory_space<vmem>>, %arg5: memref<2x3x32x32xf32, #tpu.memory_space<vmem>>, %arg6: memref<2x32x32xf32, #tpu.memory_space<vmem>>, %arg7: memref<2x64x32xf32, #tpu.memory_space<vmem>>, %arg8: memref<2x32x64xf32, #tpu.memory_space<vmem>>, %arg9: memref<2x10x64xf32, #tpu.memory_space<vmem>>, %arg10: memref<128x32xf32, #tpu.memory_space<vmem>>, %arg11: memref<128x128xf32, #tpu.memory_space<vmem>>, %arg12: memref<2x16x128xf32, #tpu.memory_space<vmem>>) attributes {dimension_semantics = [], scalar_prefetch = 0 : i64, scratch_operands = 0 : i64, tpu.core_type = #tpu.core_type<tc>} {
    %c0 = arith.constant 0 : index
    %c0_0 = arith.constant 0 : index
    %0 = vector.load %arg4[%c0, %c0_0] : memref<3x128xf32, #tpu.memory_space<vmem>>, vector<3x128xf32>
    %1 = vector.extract_strided_slice %0 {offsets = [0, 0], sizes = [1, 32], strides = [1, 1]} : vector<3x128xf32> to vector<1x32xf32>
    %2 = vector.extract_strided_slice %0 {offsets = [1, 0], sizes = [1, 128], strides = [1, 1]} : vector<3x128xf32> to vector<1x128xf32>
    %3 = vector.extract_strided_slice %0 {offsets = [2, 0], sizes = [1, 128], strides = [1, 1]} : vector<3x128xf32> to vector<1x128xf32>
    %c0_1 = arith.constant 0 : index
    %c0_2 = arith.constant 0 : index
    %4 = vector.load %arg0[%c0_1, %c0_2] : memref<16x9xf32, #tpu.memory_space<vmem>>, vector<16x9xf32>
    %c0_3 = arith.constant 0 : index
    %c0_4 = arith.constant 0 : index
    %5 = vector.load %arg3[%c0_3, %c0_4] : memref<32x9xf32, #tpu.memory_space<vmem>>, vector<32x9xf32>
    %cst = arith.constant dense<0.000000e+00> : vector<16x32xf32>
    %6 = tpu.matmul %4, %5, %cst {dimension_numbers = #tpu.dot_dimension_numbers<[1], [1], [0], [0], [0, 0, 1, 0], [], []>} : vector<16x9xf32>, vector<32x9xf32>, vector<16x32xf32> -> vector<16x32xf32>
    %7 = vector.broadcast %1 : vector<1x32xf32> to vector<16x32xf32>
    %8 = arith.addf %6, %7 : vector<16x32xf32>
    %cst_5 = arith.constant 5.65685415 : f32
    %9 = vector.broadcast %cst_5 : f32 to vector<16x32xf32>
    %10 = arith.mulf %8, %9 : vector<16x32xf32>
    %c0_6 = arith.constant 0 : index
    %c0_7 = arith.constant 0 : index
    %11 = vector.load %arg2[%c0_6, %c0_7] : memref<16x32xf32, #tpu.memory_space<vmem>>, vector<16x32xf32>
    %12 = arith.addf %10, %11 : vector<16x32xf32>
    %c0_8 = arith.constant 0 : index
    %c0_9 = arith.constant 0 : index
    %c0_10 = arith.constant 0 : index
    %13 = vector.load %arg1[%c0_8, %c0_9, %c0_10] : memref<8x8x8xf32, #tpu.memory_space<vmem>>, vector<8x8x8xf32>
    %c0_11 = arith.constant 0 : index
    %c0_12 = arith.constant 0 : index
    %c0_13 = arith.constant 0 : index
    %14 = vector.load %arg9[%c0_11, %c0_12, %c0_13] : memref<2x10x64xf32, #tpu.memory_space<vmem>>, vector<1x10x64xf32>
    %15 = vector.shape_cast %14 : vector<1x10x64xf32> to vector<10x64xf32>
    %16 = vector.extract_strided_slice %15 {offsets = [0, 0], sizes = [1, 32], strides = [1, 1]} : vector<10x64xf32> to vector<1x32xf32>
    %17 = vector.extract_strided_slice %15 {offsets = [1, 0], sizes = [1, 32], strides = [1, 1]} : vector<10x64xf32> to vector<1x32xf32>
    %18 = vector.extract_strided_slice %15 {offsets = [2, 0], sizes = [1, 32], strides = [1, 1]} : vector<10x64xf32> to vector<1x32xf32>
    %19 = vector.extract_strided_slice %15 {offsets = [3, 0], sizes = [1, 32], strides = [1, 1]} : vector<10x64xf32> to vector<1x32xf32>
    %20 = vector.extract_strided_slice %15 {offsets = [4, 0], sizes = [1, 32], strides = [1, 1]} : vector<10x64xf32> to vector<1x32xf32>
    %21 = vector.extract_strided_slice %15 {offsets = [5, 0], sizes = [1, 32], strides = [1, 1]} : vector<10x64xf32> to vector<1x32xf32>
    %22 = vector.extract_strided_slice %15 {offsets = [6, 0], sizes = [1, 64], strides = [1, 1]} : vector<10x64xf32> to vector<1x64xf32>
    %23 = vector.extract_strided_slice %15 {offsets = [7, 0], sizes = [1, 32], strides = [1, 1]} : vector<10x64xf32> to vector<1x32xf32>
    %24 = vector.extract_strided_slice %15 {offsets = [8, 0], sizes = [1, 32], strides = [1, 1]} : vector<10x64xf32> to vector<1x32xf32>
    %25 = vector.extract_strided_slice %15 {offsets = [9, 0], sizes = [1, 32], strides = [1, 1]} : vector<10x64xf32> to vector<1x32xf32>
    %c0_14 = arith.constant 0 : index
    %c0_15 = arith.constant 0 : index
    %c0_16 = arith.constant 0 : index
    %c0_17 = arith.constant 0 : index
    %26 = vector.load %arg5[%c0_14, %c0_15, %c0_16, %c0_17] : memref<2x3x32x32xf32, #tpu.memory_space<vmem>>, vector<1x1x32x32xf32>
    %27 = vector.shape_cast %26 : vector<1x1x32x32xf32> to vector<32x32xf32>
    %cst_18 = arith.constant dense<0.000000e+00> : vector<16x32xf32>
    %28 = tpu.matmul %12, %27, %cst_18 {dimension_numbers = #tpu.dot_dimension_numbers<[1], [1], [0], [0], [0, 0, 1, 0], [], []>} : vector<16x32xf32>, vector<32x32xf32>, vector<16x32xf32> -> vector<16x32xf32>
    %29 = vector.broadcast %16 : vector<1x32xf32> to vector<16x32xf32>
    %30 = arith.addf %28, %29 : vector<16x32xf32>
    %c0_19 = arith.constant 0 : index
    %c1 = arith.constant 1 : index
    %c0_20 = arith.constant 0 : index
    %c0_21 = arith.constant 0 : index
    %31 = vector.load %arg5[%c0_19, %c1, %c0_20, %c0_21] : memref<2x3x32x32xf32, #tpu.memory_space<vmem>>, vector<1x1x32x32xf32>
    %32 = vector.shape_cast %31 : vector<1x1x32x32xf32> to vector<32x32xf32>
    %cst_22 = arith.constant dense<0.000000e+00> : vector<16x32xf32>
    %33 = tpu.matmul %12, %32, %cst_22 {dimension_numbers = #tpu.dot_dimension_numbers<[1], [1], [0], [0], [0, 0, 1, 0], [], []>} : vector<16x32xf32>, vector<32x32xf32>, vector<16x32xf32> -> vector<16x32xf32>
    %34 = vector.broadcast %17 : vector<1x32xf32> to vector<16x32xf32>
    %35 = arith.addf %33, %34 : vector<16x32xf32>
    %c0_23 = arith.constant 0 : index
    %c2 = arith.constant 2 : index
    %c0_24 = arith.constant 0 : index
    %c0_25 = arith.constant 0 : index
    %36 = vector.load %arg5[%c0_23, %c2, %c0_24, %c0_25] : memref<2x3x32x32xf32, #tpu.memory_space<vmem>>, vector<1x1x32x32xf32>
    %37 = vector.shape_cast %36 : vector<1x1x32x32xf32> to vector<32x32xf32>
    %cst_26 = arith.constant dense<0.000000e+00> : vector<16x32xf32>
    %38 = tpu.matmul %12, %37, %cst_26 {dimension_numbers = #tpu.dot_dimension_numbers<[1], [1], [0], [0], [0, 0, 1, 0], [], []>} : vector<16x32xf32>, vector<32x32xf32>, vector<16x32xf32> -> vector<16x32xf32>
    %39 = vector.broadcast %18 : vector<1x32xf32> to vector<16x32xf32>
    %40 = arith.addf %38, %39 : vector<16x32xf32>
    %41 = vector.shape_cast %30 : vector<16x32xf32> to vector<2x8x32xf32>
    %42 = tpu.transpose %41, [0, 2, 1] : vector<2x8x32xf32> -> vector<2x32x8xf32>
    %43 = vector.extract_strided_slice %42 {offsets = [0, 0, 0], sizes = [2, 8, 8], strides = [1, 1, 1]} : vector<2x32x8xf32> to vector<2x8x8xf32>
    %44 = vector.extract_strided_slice %42 {offsets = [0, 8, 0], sizes = [2, 8, 8], strides = [1, 1, 1]} : vector<2x32x8xf32> to vector<2x8x8xf32>
    %45 = vector.extract_strided_slice %42 {offsets = [0, 16, 0], sizes = [2, 8, 8], strides = [1, 1, 1]} : vector<2x32x8xf32> to vector<2x8x8xf32>
    %46 = vector.extract_strided_slice %42 {offsets = [0, 24, 0], sizes = [2, 8, 8], strides = [1, 1, 1]} : vector<2x32x8xf32> to vector<2x8x8xf32>
    %47 = tpu.concatenate %43, %44, %45, %46 in 0 : vector<2x8x8xf32>, vector<2x8x8xf32>, vector<2x8x8xf32>, vector<2x8x8xf32> -> vector<8x8x8xf32>
    %48 = vector.shape_cast %35 : vector<16x32xf32> to vector<2x8x32xf32>
    %49 = tpu.transpose %48, [0, 2, 1] : vector<2x8x32xf32> -> vector<2x32x8xf32>
    %50 = vector.extract_strided_slice %49 {offsets = [0, 0, 0], sizes = [2, 8, 8], strides = [1, 1, 1]} : vector<2x32x8xf32> to vector<2x8x8xf32>
    %51 = vector.extract_strided_slice %49 {offsets = [0, 8, 0], sizes = [2, 8, 8], strides = [1, 1, 1]} : vector<2x32x8xf32> to vector<2x8x8xf32>
    %52 = vector.extract_strided_slice %49 {offsets = [0, 16, 0], sizes = [2, 8, 8], strides = [1, 1, 1]} : vector<2x32x8xf32> to vector<2x8x8xf32>
    %53 = vector.extract_strided_slice %49 {offsets = [0, 24, 0], sizes = [2, 8, 8], strides = [1, 1, 1]} : vector<2x32x8xf32> to vector<2x8x8xf32>
    %54 = tpu.concatenate %50, %51, %52, %53 in 0 : vector<2x8x8xf32>, vector<2x8x8xf32>, vector<2x8x8xf32>, vector<2x8x8xf32> -> vector<8x8x8xf32>
    %55 = vector.shape_cast %40 : vector<16x32xf32> to vector<2x8x32xf32>
    %56 = tpu.transpose %55, [0, 2, 1] : vector<2x8x32xf32> -> vector<2x32x8xf32>
    %57 = vector.extract_strided_slice %56 {offsets = [0, 0, 0], sizes = [2, 8, 8], strides = [1, 1, 1]} : vector<2x32x8xf32> to vector<2x8x8xf32>
    %58 = vector.extract_strided_slice %56 {offsets = [0, 8, 0], sizes = [2, 8, 8], strides = [1, 1, 1]} : vector<2x32x8xf32> to vector<2x8x8xf32>
    %59 = vector.extract_strided_slice %56 {offsets = [0, 16, 0], sizes = [2, 8, 8], strides = [1, 1, 1]} : vector<2x32x8xf32> to vector<2x8x8xf32>
    %60 = vector.extract_strided_slice %56 {offsets = [0, 24, 0], sizes = [2, 8, 8], strides = [1, 1, 1]} : vector<2x32x8xf32> to vector<2x8x8xf32>
    %61 = tpu.concatenate %57, %58, %59, %60 in 0 : vector<2x8x8xf32>, vector<2x8x8xf32>, vector<2x8x8xf32>, vector<2x8x8xf32> -> vector<8x8x8xf32>
    %62 = tpu.transpose %47, [0, 2, 1] : vector<8x8x8xf32> -> vector<8x8x8xf32>
    "tpu.trace_start"() <{level = 10 : i32, message = "bqd,bdk->bqk"}> : () -> ()
    %cst_27 = arith.constant dense<0.000000e+00> : vector<8x8x8xf32>
    %63 = tpu.matmul %62, %54, %cst_27 {dimension_numbers = #tpu.dot_dimension_numbers<[2], [1], [1], [2], [0, 0, 0, 1, 1, 2], [0], [0]>} : vector<8x8x8xf32>, vector<8x8x8xf32>, vector<8x8x8xf32> -> vector<8x8x8xf32>
    "tpu.trace_stop"() : () -> ()
    %cst_28 = arith.constant 0.353553385 : f32
    %64 = vector.broadcast %cst_28 : f32 to vector<8x8x8xf32>
    %65 = arith.mulf %63, %64 : vector<8x8x8xf32>
    %66 = arith.addf %65, %13 : vector<8x8x8xf32>
    %cst_29 = arith.constant dense<0xFF800000> : vector<8x8xf32>
    %67 = vector.multi_reduction <maximumf>, %66, %cst_29 [2] : vector<8x8x8xf32> to vector<8x8xf32>
    %68 = vector.shape_cast %67 : vector<8x8xf32> to vector<8x8x1xf32>
    %69 = vector.broadcast %68 : vector<8x8x1xf32> to vector<8x8x8xf32>
    %70 = arith.subf %66, %69 : vector<8x8x8xf32>
    %71 = math.exp %70 : vector<8x8x8xf32>
    %cst_30 = arith.constant dense<0.000000e+00> : vector<8x8xf32>
    %72 = vector.multi_reduction <add>, %71, %cst_30 [2] : vector<8x8x8xf32> to vector<8x8xf32>
    %73 = vector.shape_cast %72 : vector<8x8xf32> to vector<8x8x1xf32>
    %74 = tpu.reciprocal %73 {approx = true} : vector<8x8x1xf32> -> vector<8x8x1xf32>
    %75 = vector.broadcast %74 : vector<8x8x1xf32> to vector<8x8x8xf32>
    %76 = arith.mulf %71, %75 : vector<8x8x8xf32>
    "tpu.trace_start"() <{level = 10 : i32, message = "bdk,bqk->bdq"}> : () -> ()
    %cst_31 = arith.constant dense<0.000000e+00> : vector<8x8x8xf32>
    %77 = tpu.matmul %61, %76, %cst_31 {dimension_numbers = #tpu.dot_dimension_numbers<[2], [2], [1], [1], [0, 0, 0, 1, 1, 1], [0], [0]>} : vector<8x8x8xf32>, vector<8x8x8xf32>, vector<8x8x8xf32> -> vector<8x8x8xf32>
    "tpu.trace_stop"() : () -> ()
    %78 = vector.extract_strided_slice %77 {offsets = [0, 0, 0], sizes = [2, 8, 8], strides = [1, 1, 1]} : vector<8x8x8xf32> to vector<2x8x8xf32>
    %79 = vector.extract_strided_slice %77 {offsets = [2, 0, 0], sizes = [2, 8, 8], strides = [1, 1, 1]} : vector<8x8x8xf32> to vector<2x8x8xf32>
    %80 = vector.extract_strided_slice %77 {offsets = [4, 0, 0], sizes = [2, 8, 8], strides = [1, 1, 1]} : vector<8x8x8xf32> to vector<2x8x8xf32>
    %81 = vector.extract_strided_slice %77 {offsets = [6, 0, 0], sizes = [2, 8, 8], strides = [1, 1, 1]} : vector<8x8x8xf32> to vector<2x8x8xf32>
    %82 = tpu.concatenate %78, %79, %80, %81 in 1 : vector<2x8x8xf32>, vector<2x8x8xf32>, vector<2x8x8xf32>, vector<2x8x8xf32> -> vector<2x32x8xf32>
    %83 = tpu.transpose %82, [0, 2, 1] : vector<2x32x8xf32> -> vector<2x8x32xf32>
    %84 = vector.shape_cast %83 : vector<2x8x32xf32> to vector<16x32xf32>
    %c0_32 = arith.constant 0 : index
    %c0_33 = arith.constant 0 : index
    %c0_34 = arith.constant 0 : index
    %85 = vector.load %arg6[%c0_32, %c0_33, %c0_34] : memref<2x32x32xf32, #tpu.memory_space<vmem>>, vector<1x32x32xf32>
    %86 = vector.shape_cast %85 : vector<1x32x32xf32> to vector<32x32xf32>
    %cst_35 = arith.constant dense<0.000000e+00> : vector<16x32xf32>
    %87 = tpu.matmul %84, %86, %cst_35 {dimension_numbers = #tpu.dot_dimension_numbers<[1], [1], [0], [0], [0, 0, 1, 0], [], []>} : vector<16x32xf32>, vector<32x32xf32>, vector<16x32xf32> -> vector<16x32xf32>
    %88 = vector.broadcast %19 : vector<1x32xf32> to vector<16x32xf32>
    %89 = arith.addf %87, %88 : vector<16x32xf32>
    %90 = arith.addf %12, %89 : vector<16x32xf32>
    %cst_36 = arith.constant dense<0.000000e+00> : vector<16xf32>
    %91 = vector.multi_reduction <add>, %90, %cst_36 [1] : vector<16x32xf32> to vector<16xf32>
    %92 = vector.shape_cast %91 : vector<16xf32> to vector<16x1xf32>
    %cst_37 = arith.constant 3.200000e+01 : f32
    %93 = vector.broadcast %cst_37 : f32 to vector<16x1xf32>
    %94 = arith.divf %92, %93 : vector<16x1xf32>
    %95 = vector.broadcast %94 : vector<16x1xf32> to vector<16x32xf32>
    %96 = arith.subf %90, %95 : vector<16x32xf32>
    %97 = arith.mulf %96, %96 : vector<16x32xf32>
    %cst_38 = arith.constant dense<0.000000e+00> : vector<16xf32>
    %98 = vector.multi_reduction <add>, %97, %cst_38 [1] : vector<16x32xf32> to vector<16xf32>
    %99 = vector.shape_cast %98 : vector<16xf32> to vector<16x1xf32>
    %cst_39 = arith.constant 3.200000e+01 : f32
    %100 = vector.broadcast %cst_39 : f32 to vector<16x1xf32>
    %101 = arith.divf %99, %100 : vector<16x1xf32>
    %102 = vector.broadcast %94 : vector<16x1xf32> to vector<16x32xf32>
    %103 = arith.subf %90, %102 : vector<16x32xf32>
    %cst_40 = arith.constant 9.99999974E-6 : f32
    %104 = vector.broadcast %cst_40 : f32 to vector<16x1xf32>
    %105 = arith.addf %101, %104 : vector<16x1xf32>
    %106 = math.rsqrt %105 : vector<16x1xf32>
    %107 = vector.broadcast %106 : vector<16x1xf32> to vector<16x32xf32>
    %108 = arith.mulf %103, %107 : vector<16x32xf32>
    %109 = vector.broadcast %20 : vector<1x32xf32> to vector<16x32xf32>
    %110 = arith.mulf %108, %109 : vector<16x32xf32>
    %111 = vector.broadcast %21 : vector<1x32xf32> to vector<16x32xf32>
    %112 = arith.addf %110, %111 : vector<16x32xf32>
    %c0_41 = arith.constant 0 : index
    %c0_42 = arith.constant 0 : index
    %c0_43 = arith.constant 0 : index
    %113 = vector.load %arg7[%c0_41, %c0_42, %c0_43] : memref<2x64x32xf32, #tpu.memory_space<vmem>>, vector<1x64x32xf32>
    %114 = vector.shape_cast %113 : vector<1x64x32xf32> to vector<64x32xf32>
    %cst_44 = arith.constant dense<0.000000e+00> : vector<16x64xf32>
    %115 = tpu.matmul %112, %114, %cst_44 {dimension_numbers = #tpu.dot_dimension_numbers<[1], [1], [0], [0], [0, 0, 1, 0], [], []>} : vector<16x32xf32>, vector<64x32xf32>, vector<16x64xf32> -> vector<16x64xf32>
    %116 = vector.broadcast %22 : vector<1x64xf32> to vector<16x64xf32>
    %117 = arith.addf %115, %116 : vector<16x64xf32>
    %cst_45 = arith.constant 0.000000e+00 : f32
    %118 = vector.broadcast %cst_45 : f32 to vector<16x64xf32>
    %119 = arith.maximumf %117, %118 : vector<16x64xf32>
    %c0_46 = arith.constant 0 : index
    %c0_47 = arith.constant 0 : index
    %c0_48 = arith.constant 0 : index
    %120 = vector.load %arg8[%c0_46, %c0_47, %c0_48] : memref<2x32x64xf32, #tpu.memory_space<vmem>>, vector<1x32x64xf32>
    %121 = vector.shape_cast %120 : vector<1x32x64xf32> to vector<32x64xf32>
    %cst_49 = arith.constant dense<0.000000e+00> : vector<16x32xf32>
    %122 = tpu.matmul %119, %121, %cst_49 {dimension_numbers = #tpu.dot_dimension_numbers<[1], [1], [0], [0], [0, 0, 1, 0], [], []>} : vector<16x64xf32>, vector<32x64xf32>, vector<16x32xf32> -> vector<16x32xf32>
    %123 = vector.broadcast %23 : vector<1x32xf32> to vector<16x32xf32>
    %124 = arith.addf %122, %123 : vector<16x32xf32>
    %125 = arith.addf %112, %124 : vector<16x32xf32>
    %cst_50 = arith.constant dense<0.000000e+00> : vector<16xf32>
    %126 = vector.multi_reduction <add>, %125, %cst_50 [1] : vector<16x32xf32> to vector<16xf32>
    %127 = vector.shape_cast %126 : vector<16xf32> to vector<16x1xf32>
    %cst_51 = arith.constant 3.200000e+01 : f32
    %128 = vector.broadcast %cst_51 : f32 to vector<16x1xf32>
    %129 = arith.divf %127, %128 : vector<16x1xf32>
    %130 = vector.broadcast %129 : vector<16x1xf32> to vector<16x32xf32>
    %131 = arith.subf %125, %130 : vector<16x32xf32>
    %132 = arith.mulf %131, %131 : vector<16x32xf32>
    %cst_52 = arith.constant dense<0.000000e+00> : vector<16xf32>
    %133 = vector.multi_reduction <add>, %132, %cst_52 [1] : vector<16x32xf32> to vector<16xf32>
    %134 = vector.shape_cast %133 : vector<16xf32> to vector<16x1xf32>
    %cst_53 = arith.constant 3.200000e+01 : f32
    %135 = vector.broadcast %cst_53 : f32 to vector<16x1xf32>
    %136 = arith.divf %134, %135 : vector<16x1xf32>
    %137 = vector.broadcast %129 : vector<16x1xf32> to vector<16x32xf32>
    %138 = arith.subf %125, %137 : vector<16x32xf32>
    %cst_54 = arith.constant 9.99999974E-6 : f32
    %139 = vector.broadcast %cst_54 : f32 to vector<16x1xf32>
    %140 = arith.addf %136, %139 : vector<16x1xf32>
    %141 = math.rsqrt %140 : vector<16x1xf32>
    %142 = vector.broadcast %141 : vector<16x1xf32> to vector<16x32xf32>
    %143 = arith.mulf %138, %142 : vector<16x32xf32>
    %144 = vector.broadcast %24 : vector<1x32xf32> to vector<16x32xf32>
    %145 = arith.mulf %143, %144 : vector<16x32xf32>
    %146 = vector.broadcast %25 : vector<1x32xf32> to vector<16x32xf32>
    %147 = arith.addf %145, %146 : vector<16x32xf32>
    %c1_55 = arith.constant 1 : index
    %c0_56 = arith.constant 0 : index
    %c0_57 = arith.constant 0 : index
    %148 = vector.load %arg9[%c1_55, %c0_56, %c0_57] : memref<2x10x64xf32, #tpu.memory_space<vmem>>, vector<1x10x64xf32>
    %149 = vector.shape_cast %148 : vector<1x10x64xf32> to vector<10x64xf32>
    %150 = vector.extract_strided_slice %149 {offsets = [0, 0], sizes = [1, 32], strides = [1, 1]} : vector<10x64xf32> to vector<1x32xf32>
    %151 = vector.extract_strided_slice %149 {offsets = [1, 0], sizes = [1, 32], strides = [1, 1]} : vector<10x64xf32> to vector<1x32xf32>
    %152 = vector.extract_strided_slice %149 {offsets = [2, 0], sizes = [1, 32], strides = [1, 1]} : vector<10x64xf32> to vector<1x32xf32>
    %153 = vector.extract_strided_slice %149 {offsets = [3, 0], sizes = [1, 32], strides = [1, 1]} : vector<10x64xf32> to vector<1x32xf32>
    %154 = vector.extract_strided_slice %149 {offsets = [4, 0], sizes = [1, 32], strides = [1, 1]} : vector<10x64xf32> to vector<1x32xf32>
    %155 = vector.extract_strided_slice %149 {offsets = [5, 0], sizes = [1, 32], strides = [1, 1]} : vector<10x64xf32> to vector<1x32xf32>
    %156 = vector.extract_strided_slice %149 {offsets = [6, 0], sizes = [1, 64], strides = [1, 1]} : vector<10x64xf32> to vector<1x64xf32>
    %157 = vector.extract_strided_slice %149 {offsets = [7, 0], sizes = [1, 32], strides = [1, 1]} : vector<10x64xf32> to vector<1x32xf32>
    %158 = vector.extract_strided_slice %149 {offsets = [8, 0], sizes = [1, 32], strides = [1, 1]} : vector<10x64xf32> to vector<1x32xf32>
    %159 = vector.extract_strided_slice %149 {offsets = [9, 0], sizes = [1, 32], strides = [1, 1]} : vector<10x64xf32> to vector<1x32xf32>
    %c1_58 = arith.constant 1 : index
    %c0_59 = arith.constant 0 : index
    %c0_60 = arith.constant 0 : index
    %c0_61 = arith.constant 0 : index
    %160 = vector.load %arg5[%c1_58, %c0_59, %c0_60, %c0_61] : memref<2x3x32x32xf32, #tpu.memory_space<vmem>>, vector<1x1x32x32xf32>
    %161 = vector.shape_cast %160 : vector<1x1x32x32xf32> to vector<32x32xf32>
    %cst_62 = arith.constant dense<0.000000e+00> : vector<16x32xf32>
    %162 = tpu.matmul %147, %161, %cst_62 {dimension_numbers = #tpu.dot_dimension_numbers<[1], [1], [0], [0], [0, 0, 1, 0], [], []>} : vector<16x32xf32>, vector<32x32xf32>, vector<16x32xf32> -> vector<16x32xf32>
    %163 = vector.broadcast %150 : vector<1x32xf32> to vector<16x32xf32>
    %164 = arith.addf %162, %163 : vector<16x32xf32>
    %c1_63 = arith.constant 1 : index
    %c1_64 = arith.constant 1 : index
    %c0_65 = arith.constant 0 : index
    %c0_66 = arith.constant 0 : index
    %165 = vector.load %arg5[%c1_63, %c1_64, %c0_65, %c0_66] : memref<2x3x32x32xf32, #tpu.memory_space<vmem>>, vector<1x1x32x32xf32>
    %166 = vector.shape_cast %165 : vector<1x1x32x32xf32> to vector<32x32xf32>
    %cst_67 = arith.constant dense<0.000000e+00> : vector<16x32xf32>
    %167 = tpu.matmul %147, %166, %cst_67 {dimension_numbers = #tpu.dot_dimension_numbers<[1], [1], [0], [0], [0, 0, 1, 0], [], []>} : vector<16x32xf32>, vector<32x32xf32>, vector<16x32xf32> -> vector<16x32xf32>
    %168 = vector.broadcast %151 : vector<1x32xf32> to vector<16x32xf32>
    %169 = arith.addf %167, %168 : vector<16x32xf32>
    %c1_68 = arith.constant 1 : index
    %c2_69 = arith.constant 2 : index
    %c0_70 = arith.constant 0 : index
    %c0_71 = arith.constant 0 : index
    %170 = vector.load %arg5[%c1_68, %c2_69, %c0_70, %c0_71] : memref<2x3x32x32xf32, #tpu.memory_space<vmem>>, vector<1x1x32x32xf32>
    %171 = vector.shape_cast %170 : vector<1x1x32x32xf32> to vector<32x32xf32>
    %cst_72 = arith.constant dense<0.000000e+00> : vector<16x32xf32>
    %172 = tpu.matmul %147, %171, %cst_72 {dimension_numbers = #tpu.dot_dimension_numbers<[1], [1], [0], [0], [0, 0, 1, 0], [], []>} : vector<16x32xf32>, vector<32x32xf32>, vector<16x32xf32> -> vector<16x32xf32>
    %173 = vector.broadcast %152 : vector<1x32xf32> to vector<16x32xf32>
    %174 = arith.addf %172, %173 : vector<16x32xf32>
    %175 = vector.shape_cast %164 : vector<16x32xf32> to vector<2x8x32xf32>
    %176 = tpu.transpose %175, [0, 2, 1] : vector<2x8x32xf32> -> vector<2x32x8xf32>
    %177 = vector.extract_strided_slice %176 {offsets = [0, 0, 0], sizes = [2, 8, 8], strides = [1, 1, 1]} : vector<2x32x8xf32> to vector<2x8x8xf32>
    %178 = vector.extract_strided_slice %176 {offsets = [0, 8, 0], sizes = [2, 8, 8], strides = [1, 1, 1]} : vector<2x32x8xf32> to vector<2x8x8xf32>
    %179 = vector.extract_strided_slice %176 {offsets = [0, 16, 0], sizes = [2, 8, 8], strides = [1, 1, 1]} : vector<2x32x8xf32> to vector<2x8x8xf32>
    %180 = vector.extract_strided_slice %176 {offsets = [0, 24, 0], sizes = [2, 8, 8], strides = [1, 1, 1]} : vector<2x32x8xf32> to vector<2x8x8xf32>
    %181 = tpu.concatenate %177, %178, %179, %180 in 0 : vector<2x8x8xf32>, vector<2x8x8xf32>, vector<2x8x8xf32>, vector<2x8x8xf32> -> vector<8x8x8xf32>
    %182 = vector.shape_cast %169 : vector<16x32xf32> to vector<2x8x32xf32>
    %183 = tpu.transpose %182, [0, 2, 1] : vector<2x8x32xf32> -> vector<2x32x8xf32>
    %184 = vector.extract_strided_slice %183 {offsets = [0, 0, 0], sizes = [2, 8, 8], strides = [1, 1, 1]} : vector<2x32x8xf32> to vector<2x8x8xf32>
    %185 = vector.extract_strided_slice %183 {offsets = [0, 8, 0], sizes = [2, 8, 8], strides = [1, 1, 1]} : vector<2x32x8xf32> to vector<2x8x8xf32>
    %186 = vector.extract_strided_slice %183 {offsets = [0, 16, 0], sizes = [2, 8, 8], strides = [1, 1, 1]} : vector<2x32x8xf32> to vector<2x8x8xf32>
    %187 = vector.extract_strided_slice %183 {offsets = [0, 24, 0], sizes = [2, 8, 8], strides = [1, 1, 1]} : vector<2x32x8xf32> to vector<2x8x8xf32>
    %188 = tpu.concatenate %184, %185, %186, %187 in 0 : vector<2x8x8xf32>, vector<2x8x8xf32>, vector<2x8x8xf32>, vector<2x8x8xf32> -> vector<8x8x8xf32>
    %189 = vector.shape_cast %174 : vector<16x32xf32> to vector<2x8x32xf32>
    %190 = tpu.transpose %189, [0, 2, 1] : vector<2x8x32xf32> -> vector<2x32x8xf32>
    %191 = vector.extract_strided_slice %190 {offsets = [0, 0, 0], sizes = [2, 8, 8], strides = [1, 1, 1]} : vector<2x32x8xf32> to vector<2x8x8xf32>
    %192 = vector.extract_strided_slice %190 {offsets = [0, 8, 0], sizes = [2, 8, 8], strides = [1, 1, 1]} : vector<2x32x8xf32> to vector<2x8x8xf32>
    %193 = vector.extract_strided_slice %190 {offsets = [0, 16, 0], sizes = [2, 8, 8], strides = [1, 1, 1]} : vector<2x32x8xf32> to vector<2x8x8xf32>
    %194 = vector.extract_strided_slice %190 {offsets = [0, 24, 0], sizes = [2, 8, 8], strides = [1, 1, 1]} : vector<2x32x8xf32> to vector<2x8x8xf32>
    %195 = tpu.concatenate %191, %192, %193, %194 in 0 : vector<2x8x8xf32>, vector<2x8x8xf32>, vector<2x8x8xf32>, vector<2x8x8xf32> -> vector<8x8x8xf32>
    %196 = tpu.transpose %181, [0, 2, 1] : vector<8x8x8xf32> -> vector<8x8x8xf32>
    "tpu.trace_start"() <{level = 10 : i32, message = "bqd,bdk->bqk"}> : () -> ()
    %cst_73 = arith.constant dense<0.000000e+00> : vector<8x8x8xf32>
    %197 = tpu.matmul %196, %188, %cst_73 {dimension_numbers = #tpu.dot_dimension_numbers<[2], [1], [1], [2], [0, 0, 0, 1, 1, 2], [0], [0]>} : vector<8x8x8xf32>, vector<8x8x8xf32>, vector<8x8x8xf32> -> vector<8x8x8xf32>
    "tpu.trace_stop"() : () -> ()
    %cst_74 = arith.constant 0.353553385 : f32
    %198 = vector.broadcast %cst_74 : f32 to vector<8x8x8xf32>
    %199 = arith.mulf %197, %198 : vector<8x8x8xf32>
    %200 = arith.addf %199, %13 : vector<8x8x8xf32>
    %cst_75 = arith.constant dense<0xFF800000> : vector<8x8xf32>
    %201 = vector.multi_reduction <maximumf>, %200, %cst_75 [2] : vector<8x8x8xf32> to vector<8x8xf32>
    %202 = vector.shape_cast %201 : vector<8x8xf32> to vector<8x8x1xf32>
    %203 = vector.broadcast %202 : vector<8x8x1xf32> to vector<8x8x8xf32>
    %204 = arith.subf %200, %203 : vector<8x8x8xf32>
    %205 = math.exp %204 : vector<8x8x8xf32>
    %cst_76 = arith.constant dense<0.000000e+00> : vector<8x8xf32>
    %206 = vector.multi_reduction <add>, %205, %cst_76 [2] : vector<8x8x8xf32> to vector<8x8xf32>
    %207 = vector.shape_cast %206 : vector<8x8xf32> to vector<8x8x1xf32>
    %208 = tpu.reciprocal %207 {approx = true} : vector<8x8x1xf32> -> vector<8x8x1xf32>
    %209 = vector.broadcast %208 : vector<8x8x1xf32> to vector<8x8x8xf32>
    %210 = arith.mulf %205, %209 : vector<8x8x8xf32>
    "tpu.trace_start"() <{level = 10 : i32, message = "bdk,bqk->bdq"}> : () -> ()
    %cst_77 = arith.constant dense<0.000000e+00> : vector<8x8x8xf32>
    %211 = tpu.matmul %195, %210, %cst_77 {dimension_numbers = #tpu.dot_dimension_numbers<[2], [2], [1], [1], [0, 0, 0, 1, 1, 1], [0], [0]>} : vector<8x8x8xf32>, vector<8x8x8xf32>, vector<8x8x8xf32> -> vector<8x8x8xf32>
    "tpu.trace_stop"() : () -> ()
    %212 = vector.extract_strided_slice %211 {offsets = [0, 0, 0], sizes = [2, 8, 8], strides = [1, 1, 1]} : vector<8x8x8xf32> to vector<2x8x8xf32>
    %213 = vector.extract_strided_slice %211 {offsets = [2, 0, 0], sizes = [2, 8, 8], strides = [1, 1, 1]} : vector<8x8x8xf32> to vector<2x8x8xf32>
    %214 = vector.extract_strided_slice %211 {offsets = [4, 0, 0], sizes = [2, 8, 8], strides = [1, 1, 1]} : vector<8x8x8xf32> to vector<2x8x8xf32>
    %215 = vector.extract_strided_slice %211 {offsets = [6, 0, 0], sizes = [2, 8, 8], strides = [1, 1, 1]} : vector<8x8x8xf32> to vector<2x8x8xf32>
    %216 = tpu.concatenate %212, %213, %214, %215 in 1 : vector<2x8x8xf32>, vector<2x8x8xf32>, vector<2x8x8xf32>, vector<2x8x8xf32> -> vector<2x32x8xf32>
    %217 = tpu.transpose %216, [0, 2, 1] : vector<2x32x8xf32> -> vector<2x8x32xf32>
    %218 = vector.shape_cast %217 : vector<2x8x32xf32> to vector<16x32xf32>
    %c1_78 = arith.constant 1 : index
    %c0_79 = arith.constant 0 : index
    %c0_80 = arith.constant 0 : index
    %219 = vector.load %arg6[%c1_78, %c0_79, %c0_80] : memref<2x32x32xf32, #tpu.memory_space<vmem>>, vector<1x32x32xf32>
    %220 = vector.shape_cast %219 : vector<1x32x32xf32> to vector<32x32xf32>
    %cst_81 = arith.constant dense<0.000000e+00> : vector<16x32xf32>
    %221 = tpu.matmul %218, %220, %cst_81 {dimension_numbers = #tpu.dot_dimension_numbers<[1], [1], [0], [0], [0, 0, 1, 0], [], []>} : vector<16x32xf32>, vector<32x32xf32>, vector<16x32xf32> -> vector<16x32xf32>
    %222 = vector.broadcast %153 : vector<1x32xf32> to vector<16x32xf32>
    %223 = arith.addf %221, %222 : vector<16x32xf32>
    %224 = arith.addf %147, %223 : vector<16x32xf32>
    %cst_82 = arith.constant dense<0.000000e+00> : vector<16xf32>
    %225 = vector.multi_reduction <add>, %224, %cst_82 [1] : vector<16x32xf32> to vector<16xf32>
    %226 = vector.shape_cast %225 : vector<16xf32> to vector<16x1xf32>
    %cst_83 = arith.constant 3.200000e+01 : f32
    %227 = vector.broadcast %cst_83 : f32 to vector<16x1xf32>
    %228 = arith.divf %226, %227 : vector<16x1xf32>
    %229 = vector.broadcast %228 : vector<16x1xf32> to vector<16x32xf32>
    %230 = arith.subf %224, %229 : vector<16x32xf32>
    %231 = arith.mulf %230, %230 : vector<16x32xf32>
    %cst_84 = arith.constant dense<0.000000e+00> : vector<16xf32>
    %232 = vector.multi_reduction <add>, %231, %cst_84 [1] : vector<16x32xf32> to vector<16xf32>
    %233 = vector.shape_cast %232 : vector<16xf32> to vector<16x1xf32>
    %cst_85 = arith.constant 3.200000e+01 : f32
    %234 = vector.broadcast %cst_85 : f32 to vector<16x1xf32>
    %235 = arith.divf %233, %234 : vector<16x1xf32>
    %236 = vector.broadcast %228 : vector<16x1xf32> to vector<16x32xf32>
    %237 = arith.subf %224, %236 : vector<16x32xf32>
    %cst_86 = arith.constant 9.99999974E-6 : f32
    %238 = vector.broadcast %cst_86 : f32 to vector<16x1xf32>
    %239 = arith.addf %235, %238 : vector<16x1xf32>
    %240 = math.rsqrt %239 : vector<16x1xf32>
    %241 = vector.broadcast %240 : vector<16x1xf32> to vector<16x32xf32>
    %242 = arith.mulf %237, %241 : vector<16x32xf32>
    %243 = vector.broadcast %154 : vector<1x32xf32> to vector<16x32xf32>
    %244 = arith.mulf %242, %243 : vector<16x32xf32>
    %245 = vector.broadcast %155 : vector<1x32xf32> to vector<16x32xf32>
    %246 = arith.addf %244, %245 : vector<16x32xf32>
    %c1_87 = arith.constant 1 : index
    %c0_88 = arith.constant 0 : index
    %c0_89 = arith.constant 0 : index
    %247 = vector.load %arg7[%c1_87, %c0_88, %c0_89] : memref<2x64x32xf32, #tpu.memory_space<vmem>>, vector<1x64x32xf32>
    %248 = vector.shape_cast %247 : vector<1x64x32xf32> to vector<64x32xf32>
    %cst_90 = arith.constant dense<0.000000e+00> : vector<16x64xf32>
    %249 = tpu.matmul %246, %248, %cst_90 {dimension_numbers = #tpu.dot_dimension_numbers<[1], [1], [0], [0], [0, 0, 1, 0], [], []>} : vector<16x32xf32>, vector<64x32xf32>, vector<16x64xf32> -> vector<16x64xf32>
    %250 = vector.broadcast %156 : vector<1x64xf32> to vector<16x64xf32>
    %251 = arith.addf %249, %250 : vector<16x64xf32>
    %cst_91 = arith.constant 0.000000e+00 : f32
    %252 = vector.broadcast %cst_91 : f32 to vector<16x64xf32>
    %253 = arith.maximumf %251, %252 : vector<16x64xf32>
    %c1_92 = arith.constant 1 : index
    %c0_93 = arith.constant 0 : index
    %c0_94 = arith.constant 0 : index
    %254 = vector.load %arg8[%c1_92, %c0_93, %c0_94] : memref<2x32x64xf32, #tpu.memory_space<vmem>>, vector<1x32x64xf32>
    %255 = vector.shape_cast %254 : vector<1x32x64xf32> to vector<32x64xf32>
    %cst_95 = arith.constant dense<0.000000e+00> : vector<16x32xf32>
    %256 = tpu.matmul %253, %255, %cst_95 {dimension_numbers = #tpu.dot_dimension_numbers<[1], [1], [0], [0], [0, 0, 1, 0], [], []>} : vector<16x64xf32>, vector<32x64xf32>, vector<16x32xf32> -> vector<16x32xf32>
    %257 = vector.broadcast %157 : vector<1x32xf32> to vector<16x32xf32>
    %258 = arith.addf %256, %257 : vector<16x32xf32>
    %259 = arith.addf %246, %258 : vector<16x32xf32>
    %cst_96 = arith.constant dense<0.000000e+00> : vector<16xf32>
    %260 = vector.multi_reduction <add>, %259, %cst_96 [1] : vector<16x32xf32> to vector<16xf32>
    %261 = vector.shape_cast %260 : vector<16xf32> to vector<16x1xf32>
    %cst_97 = arith.constant 3.200000e+01 : f32
    %262 = vector.broadcast %cst_97 : f32 to vector<16x1xf32>
    %263 = arith.divf %261, %262 : vector<16x1xf32>
    %264 = vector.broadcast %263 : vector<16x1xf32> to vector<16x32xf32>
    %265 = arith.subf %259, %264 : vector<16x32xf32>
    %266 = arith.mulf %265, %265 : vector<16x32xf32>
    %cst_98 = arith.constant dense<0.000000e+00> : vector<16xf32>
    %267 = vector.multi_reduction <add>, %266, %cst_98 [1] : vector<16x32xf32> to vector<16xf32>
    %268 = vector.shape_cast %267 : vector<16xf32> to vector<16x1xf32>
    %cst_99 = arith.constant 3.200000e+01 : f32
    %269 = vector.broadcast %cst_99 : f32 to vector<16x1xf32>
    %270 = arith.divf %268, %269 : vector<16x1xf32>
    %271 = vector.broadcast %263 : vector<16x1xf32> to vector<16x32xf32>
    %272 = arith.subf %259, %271 : vector<16x32xf32>
    %cst_100 = arith.constant 9.99999974E-6 : f32
    %273 = vector.broadcast %cst_100 : f32 to vector<16x1xf32>
    %274 = arith.addf %270, %273 : vector<16x1xf32>
    %275 = math.rsqrt %274 : vector<16x1xf32>
    %276 = vector.broadcast %275 : vector<16x1xf32> to vector<16x32xf32>
    %277 = arith.mulf %272, %276 : vector<16x32xf32>
    %278 = vector.broadcast %158 : vector<1x32xf32> to vector<16x32xf32>
    %279 = arith.mulf %277, %278 : vector<16x32xf32>
    %280 = vector.broadcast %159 : vector<1x32xf32> to vector<16x32xf32>
    %281 = arith.addf %279, %280 : vector<16x32xf32>
    %c0_101 = arith.constant 0 : index
    %c0_102 = arith.constant 0 : index
    %282 = vector.load %arg10[%c0_101, %c0_102] : memref<128x32xf32, #tpu.memory_space<vmem>>, vector<128x32xf32>
    %cst_103 = arith.constant dense<0.000000e+00> : vector<16x128xf32>
    %283 = tpu.matmul %281, %282, %cst_103 {dimension_numbers = #tpu.dot_dimension_numbers<[1], [1], [0], [0], [0, 0, 1, 0], [], []>} : vector<16x32xf32>, vector<128x32xf32>, vector<16x128xf32> -> vector<16x128xf32>
    %284 = vector.broadcast %2 : vector<1x128xf32> to vector<16x128xf32>
    %285 = arith.addf %283, %284 : vector<16x128xf32>
    %cst_104 = arith.constant 0.000000e+00 : f32
    %286 = vector.broadcast %cst_104 : f32 to vector<16x128xf32>
    %287 = arith.subf %286, %285 : vector<16x128xf32>
    %288 = math.exp %287 : vector<16x128xf32>
    %cst_105 = arith.constant 1.000000e+00 : f32
    %289 = vector.broadcast %cst_105 : f32 to vector<16x128xf32>
    %290 = arith.addf %289, %288 : vector<16x128xf32>
    %cst_106 = arith.constant 1.000000e+00 : f32
    %291 = vector.broadcast %cst_106 : f32 to vector<16x128xf32>
    %292 = arith.divf %291, %290 : vector<16x128xf32>
    %c0_107 = arith.constant 0 : index
    %c0_108 = arith.constant 0 : index
    %c0_109 = arith.constant 0 : index
    %293 = vector.load %arg12[%c0_107, %c0_108, %c0_109] : memref<2x16x128xf32, #tpu.memory_space<vmem>>, vector<1x16x128xf32>
    %294 = vector.shape_cast %293 : vector<1x16x128xf32> to vector<16x128xf32>
    %295 = vector.shape_cast %292 : vector<16x128xf32> to vector<1x16x128xf32>
    tpu.vector_store %arg12[%c0_107, %c0_108, %c0_109], %295 {strides = array<i32>} : memref<2x16x128xf32, #tpu.memory_space<vmem>>, vector<1x16x128xf32>,
    %c0_110 = arith.constant 0 : index
    %c0_111 = arith.constant 0 : index
    %296 = vector.load %arg11[%c0_110, %c0_111] : memref<128x128xf32, #tpu.memory_space<vmem>>, vector<128x128xf32>
    %cst_112 = arith.constant dense<0.000000e+00> : vector<16x128xf32>
    %297 = tpu.matmul %285, %296, %cst_112 {dimension_numbers = #tpu.dot_dimension_numbers<[1], [1], [0], [0], [0, 0, 1, 0], [], []>} : vector<16x128xf32>, vector<128x128xf32>, vector<16x128xf32> -> vector<16x128xf32>
    %298 = vector.broadcast %3 : vector<1x128xf32> to vector<16x128xf32>
    %299 = arith.addf %297, %298 : vector<16x128xf32>
    %c1_113 = arith.constant 1 : index
    %c0_114 = arith.constant 0 : index
    %c0_115 = arith.constant 0 : index
    %300 = vector.load %arg12[%c1_113, %c0_114, %c0_115] : memref<2x16x128xf32, #tpu.memory_space<vmem>>, vector<1x16x128xf32>
    %301 = vector.shape_cast %300 : vector<1x16x128xf32> to vector<16x128xf32>
    %302 = vector.shape_cast %299 : vector<16x128xf32> to vector<1x16x128xf32>
    tpu.vector_store %arg12[%c1_113, %c0_114, %c0_115], %302 {strides = array<i32>} : memref<2x16x128xf32, #tpu.memory_space<vmem>>, vector<1x16x128xf32>,
    return
  }
}

</mosaic_0001>

<llo_original>
// kernel: timeseries_transformer_forward.1
$region0: #{timeseries_transformer_forward.1}
  #allocation0 [shape = 'u32[]', space=smem, size = 0x4, offset = 0x4, fixed_abs, tag = 'smem constant byte address 0x4 - core index']
  #allocation1 [shape = 'u32[144,128]{1,0:T(1,128)}', space=vmem, size = 0x12000, scoped, tag = 'internal scratch']
  %s0 = inlined_call_operand.vmem [shape: f32[16,9], index: 0, kind: input, shape index: {}]
  %s1 = inlined_call_operand.vmem [shape: f32[8,8,8], index: 1, kind: input, shape index: {}]
  %s2 = inlined_call_operand.vmem [shape: f32[16,32], index: 2, kind: input, shape index: {}]
  %s3 = inlined_call_operand.vmem [shape: f32[32,9], index: 3, kind: input, shape index: {}]
  %s4 = inlined_call_operand.vmem [shape: f32[3,128], index: 4, kind: input, shape index: {}]
  %s5 = inlined_call_operand.vmem [shape: f32[2,3,32,32], index: 5, kind: input, shape index: {}]
  %s6 = inlined_call_operand.vmem [shape: f32[2,32,32], index: 6, kind: input, shape index: {}]
  %s7 = inlined_call_operand.vmem [shape: f32[2,64,32], index: 7, kind: input, shape index: {}]
  %s8 = inlined_call_operand.vmem [shape: f32[2,32,64], index: 8, kind: input, shape index: {}]
  %s9 = inlined_call_operand.vmem [shape: f32[2,10,64], index: 9, kind: input, shape index: {}]
  %s10 = inlined_call_operand.vmem [shape: f32[128,32], index: 10, kind: input, shape index: {}]
  %s11 = inlined_call_operand.vmem [shape: f32[128,128], index: 11, kind: input, shape index: {}]
  %s12 = inlined_call_operand.vmem [shape: f32[2,16,128], index: 12, kind: output, shape index: {}]
  %s13 = sld [smem:[#allocation0]]
  $region58: #{timeseries_transformer_forward.1} parent=0
    _
  %s15 = ssub.s32 1, %s13
  %s16 = scalar_select 0, %s15, %s13
  // Predicated region
  $region2: #{timeseries_transformer_forward.1} parent=0 // pred_check
    _
  $region3: #{timeseries_transformer_forward.1} parent=0 // pred_check_branch
    %18 = sbr.rel (0) target = $region5
  $region4: #{timeseries_transformer_forward.1} parent=0 // pred_region
    _
  $region5: #{timeseries_transformer_forward.1} parent=0 // pred_fallthru
    _
  // Predicated region
  $region6: #{timeseries_transformer_forward.1} parent=0 // pred_check
    _
  $region7: #{timeseries_transformer_forward.1} parent=0 // pred_check_branch
    %20 = sbr.rel (0) target = $region9
  $region8: #{timeseries_transformer_forward.1} parent=0 // pred_region
    _
  $region9: #{timeseries_transformer_forward.1} parent=0 // pred_fallthru
    _
  // Predicated region
  $region10: #{timeseries_transformer_forward.1} parent=0 // pred_check
    _
  $region11: #{timeseries_transformer_forward.1} parent=0 // pred_check_branch
    %22 = sbr.rel (0) target = $region13
  $region12: #{timeseries_transformer_forward.1} parent=0 // pred_region
    _
  $region13: #{timeseries_transformer_forward.1} parent=0 // pred_fallthru
    _
  // Predicated region
  $region14: #{timeseries_transformer_forward.1} parent=0 // pred_check
    _
  $region15: #{timeseries_transformer_forward.1} parent=0 // pred_check_branch
    %24 = sbr.rel (0) target = $region17
  $region16: #{timeseries_transformer_forward.1} parent=0 // pred_region
    _
  $region17: #{timeseries_transformer_forward.1} parent=0 // pred_fallthru
    _
  // Predicated region
  $region18: #{timeseries_transformer_forward.1} parent=0 // pred_check
    _
  $region19: #{timeseries_transformer_forward.1} parent=0 // pred_check_branch
    %26 = sbr.rel (0) target = $region21
  $region20: #{timeseries_transformer_forward.1} parent=0 // pred_region
    _
  $region21: #{timeseries_transformer_forward.1} parent=0 // pred_fallthru
    _
  // Predicated region
  $region22: #{timeseries_transformer_forward.1} parent=0 // pred_check
    _
  $region23: #{timeseries_transformer_forward.1} parent=0 // pred_check_branch
    %28 = sbr.rel (0) target = $region25
  $region24: #{timeseries_transformer_forward.1} parent=0 // pred_region
    _
  $region25: #{timeseries_transformer_forward.1} parent=0 // pred_fallthru
    _
  // Predicated region
  $region26: #{timeseries_transformer_forward.1} parent=0 // pred_check
    _
  $region27: #{timeseries_transformer_forward.1} parent=0 // pred_check_branch
    %30 = sbr.rel (0) target = $region29
  $region28: #{timeseries_transformer_forward.1} parent=0 // pred_region
    _
  $region29: #{timeseries_transformer_forward.1} parent=0 // pred_fallthru
    _
  // Predicated region
  $region30: #{timeseries_transformer_forward.1} parent=0 // pred_check
    _
  $region31: #{timeseries_transformer_forward.1} parent=0 // pred_check_branch
    %32 = sbr.rel (0) target = $region33
  $region32: #{timeseries_transformer_forward.1} parent=0 // pred_region
    _
  $region33: #{timeseries_transformer_forward.1} parent=0 // pred_fallthru
    _
  // Predicated region
  $region34: #{timeseries_transformer_forward.1} parent=0 // pred_check
    _
  $region35: #{timeseries_transformer_forward.1} parent=0 // pred_check_branch
    %34 = sbr.rel (0) target = $region37
  $region36: #{timeseries_transformer_forward.1} parent=0 // pred_region
    _
  $region37: #{timeseries_transformer_forward.1} parent=0 // pred_fallthru
    _
  // Predicated region
  $region38: #{timeseries_transformer_forward.1} parent=0 // pred_check
    _
  $region39: #{timeseries_transformer_forward.1} parent=0 // pred_check_branch
    %36 = sbr.rel (0) target = $region41
  $region40: #{timeseries_transformer_forward.1} parent=0 // pred_region
    _
  $region41: #{timeseries_transformer_forward.1} parent=0 // pred_fallthru
    _
  // Predicated region
  $region42: #{timeseries_transformer_forward.1} parent=0 // pred_check
    _
  $region43: #{timeseries_transformer_forward.1} parent=0 // pred_check_branch
    %38 = sbr.rel (0) target = $region45
  $region44: #{timeseries_transformer_forward.1} parent=0 // pred_region
    _
  $region45: #{timeseries_transformer_forward.1} parent=0 // pred_fallthru
    _
  // Predicated region
  $region46: #{timeseries_transformer_forward.1} parent=0 // pred_check
    _
  $region47: #{timeseries_transformer_forward.1} parent=0 // pred_check_branch
    %40 = sbr.rel (0) target = $region49
  $region48: #{timeseries_transformer_forward.1} parent=0 // pred_region
    _
  $region49: #{timeseries_transformer_forward.1} parent=0 // pred_fallthru
    _
  %v41 = vld [vmem:[%s4] sm:$0x7]
  %v42 = vld [vmem:[%s0] sm:$0xff]
  %v43 = vld [vmem:[%s0 + $0x8] sm:$0xff]
  %v44 = vld [vmem:[%s3] sm:$0xff]
  %v45 = vld [vmem:[%s3 + $0x8] sm:$0xff]
  %v46 = vld [vmem:[%s3 + $0x10] sm:$0xff]
  %v47 = vld [vmem:[%s3 + $0x18] sm:$0xff]
  %v48 = vlaneseq
  %v49 = vshrl.u32 %v48, 7
  %v50 = vsub.s32 0, %v49
  %v51 = vrot.slane %v41, %v50
  %vm52 = vcmask 72704
  %v54 = vsel %vm52, %v42, 0
  %v57 = vsel %vm52, %v43, 0
  %v60 = vsel %vm52, %v44, 0
  %v63 = vsel %vm52, %v45, 0
  %v66 = vsel %vm52, %v46, 0
  %v69 = vsel %vm52, %v47, 0
  %71 = vmatprep.subr.mxu0 0.0
  %72 = vmatpush1.xpose.msra.mxu0 %v60
  %73 = vmatprep.subr.mxu0 0.0
  %74 = vmatpush1.xpose.msra.mxu0 %v63
  %75 = vmatprep.subr.mxu0 0.0
  %76 = vmatpush1.xpose.msra.mxu0 %v66
  %77 = vmatprep.subr.mxu0 0.0
  %78 = vmatpush1.xpose.msra.mxu0 %v69
  %79 = vmatprep.subr.mxu0 0.0
  %80 = vmatpush1.xpose.msra.mxu0 0.0
  %81 = vmatprep.subr.mxu0 0.0
  %82 = vmatpush1.xpose.msra.mxu0 0.0
  %83 = vmatprep.subr.mxu0 0.0
  %84 = vmatpush1.xpose.msra.mxu0 0.0
  %85 = vmatprep.subr.mxu0 0.0
  %86 = vmatpush1.xpose.msra.mxu0 0.0
  %87 = vmatprep.subr.mxu0 0.0
  %88 = vmatpush1.xpose.msra.mxu0 0.0
  %89 = vmatprep.subr.mxu0 0.0
  %90 = vmatpush1.xpose.msra.mxu0 0.0
  %91 = vmatprep.subr.mxu0 0.0
  %92 = vmatpush1.xpose.msra.mxu0 0.0
  %93 = vmatprep.subr.mxu0 0.0
  %94 = vmatpush1.xpose.msra.mxu0 0.0
  %95 = vmatprep.subr.mxu0 0.0
  %96 = vmatpush1.xpose.msra.mxu0 0.0
  %97 = vmatprep.subr.mxu0 0.0
  %98 = vmatpush1.xpose.msra.mxu0 0.0
  %99 = vmatprep.subr.mxu0 0.0
  %100 = vmatpush1.xpose.msra.mxu0 0.0
  %101 = vmatprep.subr.mxu0 0.0
  %102 = vmatpush1.xpose.msra.mxu0 0.0
  %103 = vmatprep.subr.mxu0 0.0
  %104 = vmatpush1.xpose.msra.mxu0 0.0
  %105 = vmatprep.subr.mxu0 0.0
  %106 = vmatpush1.xpose.msra.mxu0 0.0
  %107 = vmatprep.subr.mxu0 0.0
  %108 = vmatpush1.xpose.msra.mxu0 0.0
  %109 = vmatprep.subr.mxu0 0.0
  %110 = vmatpush1.xpose.msra.mxu0 0.0
  %111 = vmatprep.subr.mxu0 0.0
  %112 = vmatpush1.xpose.msra.mxu0 0.0
  %113 = vmatprep.subr.mxu0 0.0
  %114 = vmatpush1.xpose.msra.mxu0 0.0
  %115 = vmatprep.subr.mxu0 0.0
  %116 = vmatpush1.xpose.msra.mxu0 0.0
  %117 = vmatprep.subr.mxu0 0.0
  %118 = vmatpush1.xpose.msra.mxu0 0.0
  %119 = vmatprep.subr.mxu0 0.0
  %120 = vmatpush1.xpose.msra.mxu0 0.0
  %121 = vmatprep.subr.mxu0 0.0
  %122 = vmatpush1.xpose.msra.mxu0 0.0
  %123 = vmatprep.subr.mxu0 0.0
  %124 = vmatpush1.xpose.msra.mxu0 0.0
  %125 = vmatprep.subr.mxu0 0.0
  %126 = vmatpush1.xpose.msra.mxu0 0.0
  %127 = vmatprep.subr.mxu0 0.0
  %128 = vmatpush1.xpose.msra.mxu0 0.0
  %129 = vmatprep.subr.mxu0 0.0
  %130 = vmatpush1.xpose.msra.mxu0 0.0
  %131 = vmatprep.subr.mxu0 0.0
  %132 = vmatpush1.xpose.msra.mxu0 0.0
  %133 = vmatprep.subr.mxu0 0.0
  %134 = vmatpush1.xpose.msra.mxu0 0.0
  %135 = vmatprep.mubr.f32.mxu0 0.0
  %136 = vmatmul.mubr.f32.gmra.mrb[0].mxu0 %v54
  %v137 = vpop.f32.mrb[0].mxu0
  %v138 = vadd.f32 %v51, %v137
  %v139 = vpop.f32.mrb[0].mxu0
  %140 = vmatprep.mubr.f32.mxu0 0.0
  %141 = vmatmul.mubr.f32.gmra.mrb[0].mxu0 %v57
  %v142 = vpop.f32.mrb[0].mxu0
  %v143 = vadd.f32 %v51, %v142
  %v144 = vpop.f32.mrb[0].mxu0
  %145 = vdwg.mxu0
  %v146 = vmul.f32 %v138, 5.656854
  %v147 = vmul.f32 %v143, 5.656854
  %v148 = vld [vmem:[%s2] sm:$0xff]
  %v149 = vld [vmem:[%s2 + $0x8] sm:$0xff]
  %v150 = vadd.f32 %v146, %v148
  %v151 = vadd.f32 %v147, %v149
  %v152 = vld [vmem:[%s1] sm:$0xff]
  %v153 = vld [vmem:[%s1 + $0x8] sm:$0xff]
  %v154 = vld [vmem:[%s1 + $0x10] sm:$0xff]
  %v155 = vld [vmem:[%s1 + $0x18] sm:$0xff]
  %v156 = vld [vmem:[%s1 + $0x20] sm:$0xff]
  %v157 = vld [vmem:[%s1 + $0x28] sm:$0xff]
  %v158 = vld [vmem:[%s1 + $0x30] sm:$0xff]
  %v159 = vld [vmem:[%s1 + $0x38] sm:$0xff]
  %v160 = vld [vmem:[%s9] sm:$0xff]
  %v161 = vld [vmem:[%s9 + $0x8] sm:$0x3]
  %v162 = vld [vmem:[%s5] sm:$0xff]
  %v163 = vld [vmem:[%s5 + $0x8] sm:$0xff]
  %v164 = vld [vmem:[%s5 + $0x10] sm:$0xff]
  %v165 = vld [vmem:[%s5 + $0x18] sm:$0xff]
  %v166 = vlaneseq
  %v167 = vshrl.u32 %v166, 7
  %v168 = vsub.s32 0, %v167
  %v169 = vrot.slane %v160, %v168
  %vm170 = vcmask 261120
  %v172 = vsel %vm170, %v150, 0
  %v175 = vsel %vm170, %v151, 0
  %v178 = vsel %vm170, %v162, 0
  %v181 = vsel %vm170, %v163, 0
  %v184 = vsel %vm170, %v164, 0
  %v187 = vsel %vm170, %v165, 0
  %189 = vmatprep.subr.mxu0 0.0
  %190 = vmatpush1.xpose.msra.mxu0 %v178
  %191 = vmatprep.subr.mxu0 0.0
  %192 = vmatpush1.xpose.msra.mxu0 %v181
  %193 = vmatprep.subr.mxu0 0.0
  %194 = vmatpush1.xpose.msra.mxu0 %v184
  %195 = vmatprep.subr.mxu0 0.0
  %196 = vmatpush1.xpose.msra.mxu0 %v187
  %197 = vmatprep.subr.mxu0 0.0
  %198 = vmatpush1.xpose.msra.mxu0 0.0
  %199 = vmatprep.subr.mxu0 0.0
  %200 = vmatpush1.xpose.msra.mxu0 0.0
  %201 = vmatprep.subr.mxu0 0.0
  %202 = vmatpush1.xpose.msra.mxu0 0.0
  %203 = vmatprep.subr.mxu0 0.0
  %204 = vmatpush1.xpose.msra.mxu0 0.0
  %205 = vmatprep.subr.mxu0 0.0
  %206 = vmatpush1.xpose.msra.mxu0 0.0
  %207 = vmatprep.subr.mxu0 0.0
  %208 = vmatpush1.xpose.msra.mxu0 0.0
  %209 = vmatprep.subr.mxu0 0.0
  %210 = vmatpush1.xpose.msra.mxu0 0.0
  %211 = vmatprep.subr.mxu0 0.0
  %212 = vmatpush1.xpose.msra.mxu0 0.0
  %213 = vmatprep.subr.mxu0 0.0
  %214 = vmatpush1.xpose.msra.mxu0 0.0
  %215 = vmatprep.subr.mxu0 0.0
  %216 = vmatpush1.xpose.msra.mxu0 0.0
  %217 = vmatprep.subr.mxu0 0.0
  %218 = vmatpush1.xpose.msra.mxu0 0.0
  %219 = vmatprep.subr.mxu0 0.0
  %220 = vmatpush1.xpose.msra.mxu0 0.0
  %221 = vmatprep.subr.mxu0 0.0
  %222 = vmatpush1.xpose.msra.mxu0 0.0
  %223 = vmatprep.subr.mxu0 0.0
  %224 = vmatpush1.xpose.msra.mxu0 0.0
  %225 = vmatprep.subr.mxu0 0.0
  %226 = vmatpush1.xpose.msra.mxu0 0.0
  %227 = vmatprep.subr.mxu0 0.0
  %228 = vmatpush1.xpose.msra.mxu0 0.0
  %229 = vmatprep.subr.mxu0 0.0
  %230 = vmatpush1.xpose.msra.mxu0 0.0
  %231 = vmatprep.subr.mxu0 0.0
  %232 = vmatpush1.xpose.msra.mxu0 0.0
  %233 = vmatprep.subr.mxu0 0.0
  %234 = vmatpush1.xpose.msra.mxu0 0.0
  %235 = vmatprep.subr.mxu0 0.0
  %236 = vmatpush1.xpose.msra.mxu0 0.0
  %237 = vmatprep.subr.mxu0 0.0
  %238 = vmatpush1.xpose.msra.mxu0 0.0
  %239 = vmatprep.subr.mxu0 0.0
  %240 = vmatpush1.xpose.msra.mxu0 0.0
  %241 = vmatprep.subr.mxu0 0.0
  %242 = vmatpush1.xpose.msra.mxu0 0.0
  %243 = vmatprep.subr.mxu0 0.0
  %244 = vmatpush1.xpose.msra.mxu0 0.0
  %245 = vmatprep.subr.mxu0 0.0
  %246 = vmatpush1.xpose.msra.mxu0 0.0
  %247 = vmatprep.subr.mxu0 0.0
  %248 = vmatpush1.xpose.msra.mxu0 0.0
  %249 = vmatprep.subr.mxu0 0.0
  %250 = vmatpush1.xpose.msra.mxu0 0.0
  %251 = vmatprep.subr.mxu0 0.0
  %252 = vmatpush1.xpose.msra.mxu0 0.0
  %253 = vmatprep.mubr.f32.mxu0 0.0
  %254 = vmatmul.mubr.f32.gmra.mrb[0].mxu0 %v172
  %v255 = vpop.f32.mrb[0].mxu0
  %v256 = vadd.f32 %v169, %v255
  %v257 = vpop.f32.mrb[0].mxu0
  %258 = vmatprep.mubr.f32.mxu0 0.0
  %259 = vmatmul.mubr.f32.gmra.mrb[0].mxu0 %v175
  %v260 = vpop.f32.mrb[0].mxu0
  %v261 = vadd.f32 %v169, %v260
  %v262 = vpop.f32.mrb[0].mxu0
  %263 = vdwg.mxu0
  %s264 = scalar_lea.vmem %s5, 32
  %v265 = vld [vmem:[%s264] sm:$0xff]
  %v266 = vld [vmem:[%s264 + $0x8] sm:$0xff]
  %v267 = vld [vmem:[%s264 + $0x10] sm:$0xff]
  %v268 = vld [vmem:[%s264 + $0x18] sm:$0xff]
  %v269 = vlaneseq
  %v270 = vshrl.u32 %v269, 7
  %v271 = vsub.s32 1, %v270
  %v272 = vrot.slane %v160, %v271
  %v274 = vsel %vm170, %v265, 0
  %v277 = vsel %vm170, %v266, 0
  %v280 = vsel %vm170, %v267, 0
  %v283 = vsel %vm170, %v268, 0
  %285 = vmatprep.subr.mxu0 0.0
  %286 = vmatpush1.xpose.msra.mxu0 %v274
  %287 = vmatprep.subr.mxu0 0.0
  %288 = vmatpush1.xpose.msra.mxu0 %v277
  %289 = vmatprep.subr.mxu0 0.0
  %290 = vmatpush1.xpose.msra.mxu0 %v280
  %291 = vmatprep.subr.mxu0 0.0
  %292 = vmatpush1.xpose.msra.mxu0 %v283
  %293 = vmatprep.subr.mxu0 0.0
  %294 = vmatpush1.xpose.msra.mxu0 0.0
  %295 = vmatprep.subr.mxu0 0.0
  %296 = vmatpush1.xpose.msra.mxu0 0.0
  %297 = vmatprep.subr.mxu0 0.0
  %298 = vmatpush1.xpose.msra.mxu0 0.0
  %299 = vmatprep.subr.mxu0 0.0
  %300 = vmatpush1.xpose.msra.mxu0 0.0
  %301 = vmatprep.subr.mxu0 0.0
  %302 = vmatpush1.xpose.msra.mxu0 0.0
  %303 = vmatprep.subr.mxu0 0.0
  %304 = vmatpush1.xpose.msra.mxu0 0.0
  %305 = vmatprep.subr.mxu0 0.0
  %306 = vmatpush1.xpose.msra.mxu0 0.0
  %307 = vmatprep.subr.mxu0 0.0
  %308 = vmatpush1.xpose.msra.mxu0 0.0
  %309 = vmatprep.subr.mxu0 0.0
  %310 = vmatpush1.xpose.msra.mxu0 0.0
  %311 = vmatprep.subr.mxu0 0.0
  %312 = vmatpush1.xpose.msra.mxu0 0.0
  %313 = vmatprep.subr.mxu0 0.0
  %314 = vmatpush1.xpose.msra.mxu0 0.0
  %315 = vmatprep.subr.mxu0 0.0
  %316 = vmatpush1.xpose.msra.mxu0 0.0
  %317 = vmatprep.subr.mxu0 0.0
  %318 = vmatpush1.xpose.msra.mxu0 0.0
  %319 = vmatprep.subr.mxu0 0.0
  %320 = vmatpush1.xpose.msra.mxu0 0.0
  %321 = vmatprep.subr.mxu0 0.0
  %322 = vmatpush1.xpose.msra.mxu0 0.0
  %323 = vmatprep.subr.mxu0 0.0
  %324 = vmatpush1.xpose.msra.mxu0 0.0
  %325 = vmatprep.subr.mxu0 0.0
  %326 = vmatpush1.xpose.msra.mxu0 0.0
  %327 = vmatprep.subr.mxu0 0.0
  %328 = vmatpush1.xpose.msra.mxu0 0.0
  %329 = vmatprep.subr.mxu0 0.0
  %330 = vmatpush1.xpose.msra.mxu0 0.0
  %331 = vmatprep.subr.mxu0 0.0
  %332 = vmatpush1.xpose.msra.mxu0 0.0
  %333 = vmatprep.subr.mxu0 0.0
  %334 = vmatpush1.xpose.msra.mxu0 0.0
  %335 = vmatprep.subr.mxu0 0.0
  %336 = vmatpush1.xpose.msra.mxu0 0.0
  %337 = vmatprep.subr.mxu0 0.0
  %338 = vmatpush1.xpose.msra.mxu0 0.0
  %339 = vmatprep.subr.mxu0 0.0
  %340 = vmatpush1.xpose.msra.mxu0 0.0
  %341 = vmatprep.subr.mxu0 0.0
  %342 = vmatpush1.xpose.msra.mxu0 0.0
  %343 = vmatprep.subr.mxu0 0.0
  %344 = vmatpush1.xpose.msra.mxu0 0.0
  %345 = vmatprep.subr.mxu0 0.0
  %346 = vmatpush1.xpose.msra.mxu0 0.0
  %347 = vmatprep.subr.mxu0 0.0
  %348 = vmatpush1.xpose.msra.mxu0 0.0
  %349 = vmatprep.mubr.f32.mxu0 0.0
  %350 = vmatmul.mubr.f32.gmra.mrb[0].mxu0 %v172
  %v351 = vpop.f32.mrb[0].mxu0
  %v352 = vadd.f32 %v272, %v351
  %v353 = vpop.f32.mrb[0].mxu0
  %354 = vmatprep.mubr.f32.mxu0 0.0
  %355 = vmatmul.mubr.f32.gmra.mrb[0].mxu0 %v175
  %v356 = vpop.f32.mrb[0].mxu0
  %v357 = vadd.f32 %v272, %v356
  %v358 = vpop.f32.mrb[0].mxu0
  %359 = vdwg.mxu0
  %s360 = scalar_lea.vmem %s5, 64
  %v361 = vld [vmem:[%s360] sm:$0xff]
  %v362 = vld [vmem:[%s360 + $0x8] sm:$0xff]
  %v363 = vld [vmem:[%s360 + $0x10] sm:$0xff]
  %v364 = vld [vmem:[%s360 + $0x18] sm:$0xff]
  %v365 = vlaneseq
  %v366 = vshrl.u32 %v365, 7
  %v367 = vsub.s32 2, %v366
  %v368 = vrot.slane %v160, %v367
  %v370 = vsel %vm170, %v361, 0
  %v373 = vsel %vm170, %v362, 0
  %v376 = vsel %vm170, %v363, 0
  %v379 = vsel %vm170, %v364, 0
  %381 = vmatprep.subr.mxu0 0.0
  %382 = vmatpush1.xpose.msra.mxu0 %v370
  %383 = vmatprep.subr.mxu0 0.0
  %384 = vmatpush1.xpose.msra.mxu0 %v373
  %385 = vmatprep.subr.mxu0 0.0
  %386 = vmatpush1.xpose.msra.mxu0 %v376
  %387 = vmatprep.subr.mxu0 0.0
  %388 = vmatpush1.xpose.msra.mxu0 %v379
  %389 = vmatprep.subr.mxu0 0.0
  %390 = vmatpush1.xpose.msra.mxu0 0.0
  %391 = vmatprep.subr.mxu0 0.0
  %392 = vmatpush1.xpose.msra.mxu0 0.0
  %393 = vmatprep.subr.mxu0 0.0
  %394 = vmatpush1.xpose.msra.mxu0 0.0
  %395 = vmatprep.subr.mxu0 0.0
  %396 = vmatpush1.xpose.msra.mxu0 0.0
  %397 = vmatprep.subr.mxu0 0.0
  %398 = vmatpush1.xpose.msra.mxu0 0.0
  %399 = vmatprep.subr.mxu0 0.0
  %400 = vmatpush1.xpose.msra.mxu0 0.0
  %401 = vmatprep.subr.mxu0 0.0
  %402 = vmatpush1.xpose.msra.mxu0 0.0
  %403 = vmatprep.subr.mxu0 0.0
  %404 = vmatpush1.xpose.msra.mxu0 0.0
  %405 = vmatprep.subr.mxu0 0.0
  %406 = vmatpush1.xpose.msra.mxu0 0.0
  %407 = vmatprep.subr.mxu0 0.0
  %408 = vmatpush1.xpose.msra.mxu0 0.0
  %409 = vmatprep.subr.mxu0 0.0
  %410 = vmatpush1.xpose.msra.mxu0 0.0
  %411 = vmatprep.subr.mxu0 0.0
  %412 = vmatpush1.xpose.msra.mxu0 0.0
  %413 = vmatprep.subr.mxu0 0.0
  %414 = vmatpush1.xpose.msra.mxu0 0.0
  %415 = vmatprep.subr.mxu0 0.0
  %416 = vmatpush1.xpose.msra.mxu0 0.0
  %417 = vmatprep.subr.mxu0 0.0
  %418 = vmatpush1.xpose.msra.mxu0 0.0
  %419 = vmatprep.subr.mxu0 0.0
  %420 = vmatpush1.xpose.msra.mxu0 0.0
  %421 = vmatprep.subr.mxu0 0.0
  %422 = vmatpush1.xpose.msra.mxu0 0.0
  %423 = vmatprep.subr.mxu0 0.0
  %424 = vmatpush1.xpose.msra.mxu0 0.0
  %425 = vmatprep.subr.mxu0 0.0
  %426 = vmatpush1.xpose.msra.mxu0 0.0
  %427 = vmatprep.subr.mxu0 0.0
  %428 = vmatpush1.xpose.msra.mxu0 0.0
  %429 = vmatprep.subr.mxu0 0.0
  %430 = vmatpush1.xpose.msra.mxu0 0.0
  %431 = vmatprep.subr.mxu0 0.0
  %432 = vmatpush1.xpose.msra.mxu0 0.0
  %433 = vmatprep.subr.mxu0 0.0
  %434 = vmatpush1.xpose.msra.mxu0 0.0
  %435 = vmatprep.subr.mxu0 0.0
  %436 = vmatpush1.xpose.msra.mxu0 0.0
  %437 = vmatprep.subr.mxu0 0.0
  %438 = vmatpush1.xpose.msra.mxu0 0.0
  %439 = vmatprep.subr.mxu0 0.0
  %440 = vmatpush1.xpose.msra.mxu0 0.0
  %441 = vmatprep.subr.mxu0 0.0
  %442 = vmatpush1.xpose.msra.mxu0 0.0
  %443 = vmatprep.subr.mxu0 0.0
  %444 = vmatpush1.xpose.msra.mxu0 0.0
  %445 = vmatprep.mubr.f32.mxu0 0.0
  %446 = vmatmul.mubr.f32.gmra.mrb[0].mxu0 %v172
  %v447 = vpop.f32.mrb[0].mxu0
  %v448 = vadd.f32 %v368, %v447
  %v449 = vpop.f32.mrb[0].mxu0
  %450 = vmatprep.mubr.f32.mxu0 0.0
  %451 = vmatmul.mubr.f32.gmra.mrb[0].mxu0 %v175
  %v452 = vpop.f32.mrb[0].mxu0
  %v453 = vadd.f32 %v368, %v452
  %v454 = vpop.f32.mrb[0].mxu0
  %455 = vdwg.mxu0
  %456 = vxpose.xlu0.b32.start [1/16] %v256, 128
  %457 = vxpose.xlu0.b32.cont [2/16] 0.0, 128
  %458 = vxpose.xlu0.b32.cont [3/16] 0.0, 128
  %459 = vxpose.xlu0.b32.cont [4/16] 0.0, 128
  %460 = vxpose.xlu0.b32.cont [5/16] 0.0, 128
  %461 = vxpose.xlu0.b32.cont [6/16] 0.0, 128
  %462 = vxpose.xlu0.b32.cont [7/16] 0.0, 128
  %463 = vxpose.xlu0.b32.cont [8/16] 0.0, 128
  %464 = vxpose.xlu0.b32.cont [9/16] 0.0, 128
  %465 = vxpose.xlu0.b32.cont [10/16] 0.0, 128
  %466 = vxpose.xlu0.b32.cont [11/16] 0.0, 128
  %467 = vxpose.xlu0.b32.cont [12/16] 0.0, 128
  %468 = vxpose.xlu0.b32.cont [13/16] 0.0, 128
  %469 = vxpose.xlu0.b32.cont [14/16] 0.0, 128
  %470 = vxpose.xlu0.b32.cont [15/16] 0.0, 128
  %471 = vxpose.xlu0.b32.end [16/16] 0.0, 128
  %v472 = vpop.trf.xlu0
  %v473 = vpop.trf.xlu0
  %v474 = vpop.trf.xlu0
  %v475 = vpop.trf.xlu0
  %v476 = vpop.trf.xlu0
  %v477 = vpop.trf.xlu0
  %v478 = vpop.trf.xlu0
  %v479 = vpop.trf.xlu0
  %v480 = vpop.trf.xlu0
  %v481 = vpop.trf.xlu0
  %v482 = vpop.trf.xlu0
  %v483 = vpop.trf.xlu0
  %v484 = vpop.trf.xlu0
  %v485 = vpop.trf.xlu0
  %v486 = vpop.trf.xlu0
  %v487 = vpop.trf.xlu0
  %488 = vxpose.xlu0.b32.start [1/16] %v261, 128
  %489 = vxpose.xlu0.b32.cont [2/16] 0.0, 128
  %490 = vxpose.xlu0.b32.cont [3/16] 0.0, 128
  %491 = vxpose.xlu0.b32.cont [4/16] 0.0, 128
  %492 = vxpose.xlu0.b32.cont [5/16] 0.0, 128
  %493 = vxpose.xlu0.b32.cont [6/16] 0.0, 128
  %494 = vxpose.xlu0.b32.cont [7/16] 0.0, 128
  %495 = vxpose.xlu0.b32.cont [8/16] 0.0, 128
  %496 = vxpose.xlu0.b32.cont [9/16] 0.0, 128
  %497 = vxpose.xlu0.b32.cont [10/16] 0.0, 128
  %498 = vxpose.xlu0.b32.cont [11/16] 0.0, 128
  %499 = vxpose.xlu0.b32.cont [12/16] 0.0, 128
  %500 = vxpose.xlu0.b32.cont [13/16] 0.0, 128
  %501 = vxpose.xlu0.b32.cont [14/16] 0.0, 128
  %502 = vxpose.xlu0.b32.cont [15/16] 0.0, 128
  %503 = vxpose.xlu0.b32.end [16/16] 0.0, 128
  %v504 = vpop.trf.xlu0
  %v505 = vpop.trf.xlu0
  %v506 = vpop.trf.xlu0
  %v507 = vpop.trf.xlu0
  %v508 = vpop.trf.xlu0
  %v509 = vpop.trf.xlu0
  %v510 = vpop.trf.xlu0
  %v511 = vpop.trf.xlu0
  %v512 = vpop.trf.xlu0
  %v513 = vpop.trf.xlu0
  %v514 = vpop.trf.xlu0
  %v515 = vpop.trf.xlu0
  %v516 = vpop.trf.xlu0
  %v517 = vpop.trf.xlu0
  %v518 = vpop.trf.xlu0
  %v519 = vpop.trf.xlu0
  %520 = vxpose.xlu0.b32.start [1/16] %v352, 128
  %521 = vxpose.xlu0.b32.cont [2/16] 0.0, 128
  %522 = vxpose.xlu0.b32.cont [3/16] 0.0, 128
  %523 = vxpose.xlu0.b32.cont [4/16] 0.0, 128
  %524 = vxpose.xlu0.b32.cont [5/16] 0.0, 128
  %525 = vxpose.xlu0.b32.cont [6/16] 0.0, 128
  %526 = vxpose.xlu0.b32.cont [7/16] 0.0, 128
  %527 = vxpose.xlu0.b32.cont [8/16] 0.0, 128
  %528 = vxpose.xlu0.b32.cont [9/16] 0.0, 128
  %529 = vxpose.xlu0.b32.cont [10/16] 0.0, 128
  %530 = vxpose.xlu0.b32.cont [11/16] 0.0, 128
  %531 = vxpose.xlu0.b32.cont [12/16] 0.0, 128
  %532 = vxpose.xlu0.b32.cont [13/16] 0.0, 128
  %533 = vxpose.xlu0.b32.cont [14/16] 0.0, 128
  %534 = vxpose.xlu0.b32.cont [15/16] 0.0, 128
  %535 = vxpose.xlu0.b32.end [16/16] 0.0, 128
  %v536 = vpop.trf.xlu0
  %v537 = vpop.trf.xlu0
  %v538 = vpop.trf.xlu0
  %v539 = vpop.trf.xlu0
  %v540 = vpop.trf.xlu0
  %v541 = vpop.trf.xlu0
  %v542 = vpop.trf.xlu0
  %v543 = vpop.trf.xlu0
  %v544 = vpop.trf.xlu0
  %v545 = vpop.trf.xlu0
  %v546 = vpop.trf.xlu0
  %v547 = vpop.trf.xlu0
  %v548 = vpop.trf.xlu0
  %v549 = vpop.trf.xlu0
  %v550 = vpop.trf.xlu0
  %v551 = vpop.trf.xlu0
  %552 = vxpose.xlu0.b32.start [1/16] %v357, 128
  %553 = vxpose.xlu0.b32.cont [2/16] 0.0, 128
  %554 = vxpose.xlu0.b32.cont [3/16] 0.0, 128
  %555 = vxpose.xlu0.b32.cont [4/16] 0.0, 128
  %556 = vxpose.xlu0.b32.cont [5/16] 0.0, 128
  %557 = vxpose.xlu0.b32.cont [6/16] 0.0, 128
  %558 = vxpose.xlu0.b32.cont [7/16] 0.0, 128
  %559 = vxpose.xlu0.b32.cont [8/16] 0.0, 128
  %560 = vxpose.xlu0.b32.cont [9/16] 0.0, 128
  %561 = vxpose.xlu0.b32.cont [10/16] 0.0, 128
  %562 = vxpose.xlu0.b32.cont [11/16] 0.0, 128
  %563 = vxpose.xlu0.b32.cont [12/16] 0.0, 128
  %564 = vxpose.xlu0.b32.cont [13/16] 0.0, 128
  %565 = vxpose.xlu0.b32.cont [14/16] 0.0, 128
  %566 = vxpose.xlu0.b32.cont [15/16] 0.0, 128
  %567 = vxpose.xlu0.b32.end [16/16] 0.0, 128
  %v568 = vpop.trf.xlu0
  %v569 = vpop.trf.xlu0
  %v570 = vpop.trf.xlu0
  %v571 = vpop.trf.xlu0
  %v572 = vpop.trf.xlu0
  %v573 = vpop.trf.xlu0
  %v574 = vpop.trf.xlu0
  %v575 = vpop.trf.xlu0
  %v576 = vpop.trf.xlu0
  %v577 = vpop.trf.xlu0
  %v578 = vpop.trf.xlu0
  %v579 = vpop.trf.xlu0
  %v580 = vpop.trf.xlu0
  %v581 = vpop.trf.xlu0
  %v582 = vpop.trf.xlu0
  %v583 = vpop.trf.xlu0
  %584 = vxpose.xlu0.b32.start [1/16] %v448, 128
  %585 = vxpose.xlu0.b32.cont [2/16] 0.0, 128
  %586 = vxpose.xlu0.b32.cont [3/16] 0.0, 128
  %587 = vxpose.xlu0.b32.cont [4/16] 0.0, 128
  %588 = vxpose.xlu0.b32.cont [5/16] 0.0, 128
  %589 = vxpose.xlu0.b32.cont [6/16] 0.0, 128
  %590 = vxpose.xlu0.b32.cont [7/16] 0.0, 128
  %591 = vxpose.xlu0.b32.cont [8/16] 0.0, 128
  %592 = vxpose.xlu0.b32.cont [9/16] 0.0, 128
  %593 = vxpose.xlu0.b32.cont [10/16] 0.0, 128
  %594 = vxpose.xlu0.b32.cont [11/16] 0.0, 128
  %595 = vxpose.xlu0.b32.cont [12/16] 0.0, 128
  %596 = vxpose.xlu0.b32.cont [13/16] 0.0, 128
  %597 = vxpose.xlu0.b32.cont [14/16] 0.0, 128
  %598 = vxpose.xlu0.b32.cont [15/16] 0.0, 128
  %599 = vxpose.xlu0.b32.end [16/16] 0.0, 128
  %v600 = vpop.trf.xlu0
  %v601 = vpop.trf.xlu0
  %v602 = vpop.trf.xlu0
  %v603 = vpop.trf.xlu0
  %v604 = vpop.trf.xlu0
  %v605 = vpop.trf.xlu0
  %v606 = vpop.trf.xlu0
  %v607 = vpop.trf.xlu0
  %v608 = vpop.trf.xlu0
  %v609 = vpop.trf.xlu0
  %v610 = vpop.trf.xlu0
  %v611 = vpop.trf.xlu0
  %v612 = vpop.trf.xlu0
  %v613 = vpop.trf.xlu0
  %v614 = vpop.trf.xlu0
  %v615 = vpop.trf.xlu0
  %616 = vxpose.xlu0.b32.start [1/16] %v453, 128
  %617 = vxpose.xlu0.b32.cont [2/16] 0.0, 128
  %618 = vxpose.xlu0.b32.cont [3/16] 0.0, 128
  %619 = vxpose.xlu0.b32.cont [4/16] 0.0, 128
  %620 = vxpose.xlu0.b32.cont [5/16] 0.0, 128
  %621 = vxpose.xlu0.b32.cont [6/16] 0.0, 128
  %622 = vxpose.xlu0.b32.cont [7/16] 0.0, 128
  %623 = vxpose.xlu0.b32.cont [8/16] 0.0, 128
  %624 = vxpose.xlu0.b32.cont [9/16] 0.0, 128
  %625 = vxpose.xlu0.b32.cont [10/16] 0.0, 128
  %626 = vxpose.xlu0.b32.cont [11/16] 0.0, 128
  %627 = vxpose.xlu0.b32.cont [12/16] 0.0, 128
  %628 = vxpose.xlu0.b32.cont [13/16] 0.0, 128
  %629 = vxpose.xlu0.b32.cont [14/16] 0.0, 128
  %630 = vxpose.xlu0.b32.cont [15/16] 0.0, 128
  %631 = vxpose.xlu0.b32.end [16/16] 0.0, 128
  %v632 = vpop.trf.xlu0
  %v633 = vpop.trf.xlu0
  %v634 = vpop.trf.xlu0
  %v635 = vpop.trf.xlu0
  %v636 = vpop.trf.xlu0
  %v637 = vpop.trf.xlu0
  %v638 = vpop.trf.xlu0
  %v639 = vpop.trf.xlu0
  %v640 = vpop.trf.xlu0
  %v641 = vpop.trf.xlu0
  %v642 = vpop.trf.xlu0
  %v643 = vpop.trf.xlu0
  %v644 = vpop.trf.xlu0
  %v645 = vpop.trf.xlu0
  %v646 = vpop.trf.xlu0
  %v647 = vpop.trf.xlu0
  %648 = vxpose.xlu0.b32.start [1/16] %v472, 128
  %649 = vxpose.xlu0.b32.cont [2/16] 0.0, 128
  %650 = vxpose.xlu0.b32.cont [3/16] 0.0, 128
  %651 = vxpose.xlu0.b32.cont [4/16] 0.0, 128
  %652 = vxpose.xlu0.b32.cont [5/16] 0.0, 128
  %653 = vxpose.xlu0.b32.cont [6/16] 0.0, 128
  %654 = vxpose.xlu0.b32.cont [7/16] 0.0, 128
  %655 = vxpose.xlu0.b32.cont [8/16] 0.0, 128
  %656 = vxpose.xlu0.b32.cont [9/16] 0.0, 128
  %657 = vxpose.xlu0.b32.cont [10/16] 0.0, 128
  %658 = vxpose.xlu0.b32.cont [11/16] 0.0, 128
  %659 = vxpose.xlu0.b32.cont [12/16] 0.0, 128
  %660 = vxpose.xlu0.b32.cont [13/16] 0.0, 128
  %661 = vxpose.xlu0.b32.cont [14/16] 0.0, 128
  %662 = vxpose.xlu0.b32.cont [15/16] 0.0, 128
  %663 = vxpose.xlu0.b32.end [16/16] 0.0, 128
  %v664 = vpop.trf.xlu0
  %v665 = vpop.trf.xlu0
  %v666 = vpop.trf.xlu0
  %v667 = vpop.trf.xlu0
  %v668 = vpop.trf.xlu0
  %v669 = vpop.trf.xlu0
  %v670 = vpop.trf.xlu0
  %v671 = vpop.trf.xlu0
  %v672 = vpop.trf.xlu0
  %v673 = vpop.trf.xlu0
  %v674 = vpop.trf.xlu0
  %v675 = vpop.trf.xlu0
  %v676 = vpop.trf.xlu0
  %v677 = vpop.trf.xlu0
  %v678 = vpop.trf.xlu0
  %v679 = vpop.trf.xlu0
  %680 = vxpose.xlu0.b32.start [1/16] %v504, 128
  %681 = vxpose.xlu0.b32.cont [2/16] 0.0, 128
  %682 = vxpose.xlu0.b32.cont [3/16] 0.0, 128
  %683 = vxpose.xlu0.b32.cont [4/16] 0.0, 128
  %684 = vxpose.xlu0.b32.cont [5/16] 0.0, 128
  %685 = vxpose.xlu0.b32.cont [6/16] 0.0, 128
  %686 = vxpose.xlu0.b32.cont [7/16] 0.0, 128
  %687 = vxpose.xlu0.b32.cont [8/16] 0.0, 128
  %688 = vxpose.xlu0.b32.cont [9/16] 0.0, 128
  %689 = vxpose.xlu0.b32.cont [10/16] 0.0, 128
  %690 = vxpose.xlu0.b32.cont [11/16] 0.0, 128
  %691 = vxpose.xlu0.b32.cont [12/16] 0.0, 128
  %692 = vxpose.xlu0.b32.cont [13/16] 0.0, 128
  %693 = vxpose.xlu0.b32.cont [14/16] 0.0, 128
  %694 = vxpose.xlu0.b32.cont [15/16] 0.0, 128
  %695 = vxpose.xlu0.b32.end [16/16] 0.0, 128
  %v696 = vpop.trf.xlu0
  %v697 = vpop.trf.xlu0
  %v698 = vpop.trf.xlu0
  %v699 = vpop.trf.xlu0
  %v700 = vpop.trf.xlu0
  %v701 = vpop.trf.xlu0
  %v702 = vpop.trf.xlu0
  %v703 = vpop.trf.xlu0
  %v704 = vpop.trf.xlu0
  %v705 = vpop.trf.xlu0
  %v706 = vpop.trf.xlu0
  %v707 = vpop.trf.xlu0
  %v708 = vpop.trf.xlu0
  %v709 = vpop.trf.xlu0
  %v710 = vpop.trf.xlu0
  %v711 = vpop.trf.xlu0
  %712 = vxpose.xlu0.b32.start [1/16] %v473, 128
  %713 = vxpose.xlu0.b32.cont [2/16] 0.0, 128
  %714 = vxpose.xlu0.b32.cont [3/16] 0.0, 128
  %715 = vxpose.xlu0.b32.cont [4/16] 0.0, 128
  %716 = vxpose.xlu0.b32.cont [5/16] 0.0, 128
  %717 = vxpose.xlu0.b32.cont [6/16] 0.0, 128
  %718 = vxpose.xlu0.b32.cont [7/16] 0.0, 128
  %719 = vxpose.xlu0.b32.cont [8/16] 0.0, 128
  %720 = vxpose.xlu0.b32.cont [9/16] 0.0, 128
  %721 = vxpose.xlu0.b32.cont [10/16] 0.0, 128
  %722 = vxpose.xlu0.b32.cont [11/16] 0.0, 128
  %723 = vxpose.xlu0.b32.cont [12/16] 0.0, 128
  %724 = vxpose.xlu0.b32.cont [13/16] 0.0, 128
  %725 = vxpose.xlu0.b32.cont [14/16] 0.0, 128
  %726 = vxpose.xlu0.b32.cont [15/16] 0.0, 128
  %727 = vxpose.xlu0.b32.end [16/16] 0.0, 128
  %v728 = vpop.trf.xlu0
  %v729 = vpop.trf.xlu0
  %v730 = vpop.trf.xlu0
  %v731 = vpop.trf.xlu0
  %v732 = vpop.trf.xlu0
  %v733 = vpop.trf.xlu0
  %v734 = vpop.trf.xlu0
  %v735 = vpop.trf.xlu0
  %v736 = vpop.trf.xlu0
  %v737 = vpop.trf.xlu0
  %v738 = vpop.trf.xlu0
  %v739 = vpop.trf.xlu0
  %v740 = vpop.trf.xlu0
  %v741 = vpop.trf.xlu0
  %v742 = vpop.trf.xlu0
  %v743 = vpop.trf.xlu0
  %744 = vxpose.xlu0.b32.start [1/16] %v505, 128
  %745 = vxpose.xlu0.b32.cont [2/16] 0.0, 128
  %746 = vxpose.xlu0.b32.cont [3/16] 0.0, 128
  %747 = vxpose.xlu0.b32.cont [4/16] 0.0, 128
  %748 = vxpose.xlu0.b32.cont [5/16] 0.0, 128
  %749 = vxpose.xlu0.b32.cont [6/16] 0.0, 128
  %750 = vxpose.xlu0.b32.cont [7/16] 0.0, 128
  %751 = vxpose.xlu0.b32.cont [8/16] 0.0, 128
  %752 = vxpose.xlu0.b32.cont [9/16] 0.0, 128
  %753 = vxpose.xlu0.b32.cont [10/16] 0.0, 128
  %754 = vxpose.xlu0.b32.cont [11/16] 0.0, 128
  %755 = vxpose.xlu0.b32.cont [12/16] 0.0, 128
  %756 = vxpose.xlu0.b32.cont [13/16] 0.0, 128
  %757 = vxpose.xlu0.b32.cont [14/16] 0.0, 128
  %758 = vxpose.xlu0.b32.cont [15/16] 0.0, 128
  %759 = vxpose.xlu0.b32.end [16/16] 0.0, 128
  %v760 = vpop.trf.xlu0
  %v761 = vpop.trf.xlu0
  %v762 = vpop.trf.xlu0
  %v763 = vpop.trf.xlu0
  %v764 = vpop.trf.xlu0
  %v765 = vpop.trf.xlu0
  %v766 = vpop.trf.xlu0
  %v767 = vpop.trf.xlu0
  %v768 = vpop.trf.xlu0
  %v769 = vpop.trf.xlu0
  %v770 = vpop.trf.xlu0
  %v771 = vpop.trf.xlu0
  %v772 = vpop.trf.xlu0
  %v773 = vpop.trf.xlu0
  %v774 = vpop.trf.xlu0
  %v775 = vpop.trf.xlu0
  %776 = vxpose.xlu0.b32.start [1/16] %v474, 128
  %777 = vxpose.xlu0.b32.cont [2/16] 0.0, 128
  %778 = vxpose.xlu0.b32.cont [3/16] 0.0, 128
  %779 = vxpose.xlu0.b32.cont [4/16] 0.0, 128
  %780 = vxpose.xlu0.b32.cont [5/16] 0.0, 128
  %781 = vxpose.xlu0.b32.cont [6/16] 0.0, 128
  %782 = vxpose.xlu0.b32.cont [7/16] 0.0, 128
  %783 = vxpose.xlu0.b32.cont [8/16] 0.0, 128
  %784 = vxpose.xlu0.b32.cont [9/16] 0.0, 128
  %785 = vxpose.xlu0.b32.cont [10/16] 0.0, 128
  %786 = vxpose.xlu0.b32.cont [11/16] 0.0, 128
  %787 = vxpose.xlu0.b32.cont [12/16] 0.0, 128
  %788 = vxpose.xlu0.b32.cont [13/16] 0.0, 128
  %789 = vxpose.xlu0.b32.cont [14/16] 0.0, 128
  %790 = vxpose.xlu0.b32.cont [15/16] 0.0, 128
  %791 = vxpose.xlu0.b32.end [16/16] 0.0, 128
  %v792 = vpop.trf.xlu0
  %v793 = vpop.trf.xlu0
  %v794 = vpop.trf.xlu0
  %v795 = vpop.trf.xlu0
  %v796 = vpop.trf.xlu0
  %v797 = vpop.trf.xlu0
  %v798 = vpop.trf.xlu0
  %v799 = vpop.trf.xlu0
  %v800 = vpop.trf.xlu0
  %v801 = vpop.trf.xlu0
  %v802 = vpop.trf.xlu0
  %v803 = vpop.trf.xlu0
  %v804 = vpop.trf.xlu0
  %v805 = vpop.trf.xlu0
  %v806 = vpop.trf.xlu0
  %v807 = vpop.trf.xlu0
  %808 = vxpose.xlu0.b32.start [1/16] %v506, 128
  %809 = vxpose.xlu0.b32.cont [2/16] 0.0, 128
  %810 = vxpose.xlu0.b32.cont [3/16] 0.0, 128
  %811 = vxpose.xlu0.b32.cont [4/16] 0.0, 128
  %812 = vxpose.xlu0.b32.cont [5/16] 0.0, 128
  %813 = vxpose.xlu0.b32.cont [6/16] 0.0, 128
  %814 = vxpose.xlu0.b32.cont [7/16] 0.0, 128
  %815 = vxpose.xlu0.b32.cont [8/16] 0.0, 128
  %816 = vxpose.xlu0.b32.cont [9/16] 0.0, 128
  %817 = vxpose.xlu0.b32.cont [10/16] 0.0, 128
  %818 = vxpose.xlu0.b32.cont [11/16] 0.0, 128
  %819 = vxpose.xlu0.b32.cont [12/16] 0.0, 128
  %820 = vxpose.xlu0.b32.cont [13/16] 0.0, 128
  %821 = vxpose.xlu0.b32.cont [14/16] 0.0, 128
  %822 = vxpose.xlu0.b32.cont [15/16] 0.0, 128
  %823 = vxpose.xlu0.b32.end [16/16] 0.0, 128
  %v824 = vpop.trf.xlu0
  %v825 = vpop.trf.xlu0
  %v826 = vpop.trf.xlu0
  %v827 = vpop.trf.xlu0
  %v828 = vpop.trf.xlu0
  %v829 = vpop.trf.xlu0
  %v830 = vpop.trf.xlu0
  %v831 = vpop.trf.xlu0
  %v832 = vpop.trf.xlu0
  %v833 = vpop.trf.xlu0
  %v834 = vpop.trf.xlu0
  %v835 = vpop.trf.xlu0
  %v836 = vpop.trf.xlu0
  %v837 = vpop.trf.xlu0
  %v838 = vpop.trf.xlu0
  %v839 = vpop.trf.xlu0
  %840 = vxpose.xlu0.b32.start [1/16] %v475, 128
  %841 = vxpose.xlu0.b32.cont [2/16] 0.0, 128
  %842 = vxpose.xlu0.b32.cont [3/16] 0.0, 128
  %843 = vxpose.xlu0.b32.cont [4/16] 0.0, 128
  %844 = vxpose.xlu0.b32.cont [5/16] 0.0, 128
  %845 = vxpose.xlu0.b32.cont [6/16] 0.0, 128
  %846 = vxpose.xlu0.b32.cont [7/16] 0.0, 128
  %847 = vxpose.xlu0.b32.cont [8/16] 0.0, 128
  %848 = vxpose.xlu0.b32.cont [9/16] 0.0, 128
  %849 = vxpose.xlu0.b32.cont [10/16] 0.0, 128
  %850 = vxpose.xlu0.b32.cont [11/16] 0.0, 128
  %851 = vxpose.xlu0.b32.cont [12/16] 0.0, 128
  %852 = vxpose.xlu0.b32.cont [13/16] 0.0, 128
  %853 = vxpose.xlu0.b32.cont [14/16] 0.0, 128
  %854 = vxpose.xlu0.b32.cont [15/16] 0.0, 128
  %855 = vxpose.xlu0.b32.end [16/16] 0.0, 128
  %v856 = vpop.trf.xlu0
  %v857 = vpop.trf.xlu0
  %v858 = vpop.trf.xlu0
  %v859 = vpop.trf.xlu0
  %v860 = vpop.trf.xlu0
  %v861 = vpop.trf.xlu0
  %v862 = vpop.trf.xlu0
  %v863 = vpop.trf.xlu0
  %v864 = vpop.trf.xlu0
  %v865 = vpop.trf.xlu0
  %v866 = vpop.trf.xlu0
  %v867 = vpop.trf.xlu0
  %v868 = vpop.trf.xlu0
  %v869 = vpop.trf.xlu0
  %v870 = vpop.trf.xlu0
  %v871 = vpop.trf.xlu0
  %872 = vxpose.xlu0.b32.start [1/16] %v507, 128
  %873 = vxpose.xlu0.b32.cont [2/16] 0.0, 128
  %874 = vxpose.xlu0.b32.cont [3/16] 0.0, 128
  %875 = vxpose.xlu0.b32.cont [4/16] 0.0, 128
  %876 = vxpose.xlu0.b32.cont [5/16] 0.0, 128
  %877 = vxpose.xlu0.b32.cont [6/16] 0.0, 128
  %878 = vxpose.xlu0.b32.cont [7/16] 0.0, 128
  %879 = vxpose.xlu0.b32.cont [8/16] 0.0, 128
  %880 = vxpose.xlu0.b32.cont [9/16] 0.0, 128
  %881 = vxpose.xlu0.b32.cont [10/16] 0.0, 128
  %882 = vxpose.xlu0.b32.cont [11/16] 0.0, 128
  %883 = vxpose.xlu0.b32.cont [12/16] 0.0, 128
  %884 = vxpose.xlu0.b32.cont [13/16] 0.0, 128
  %885 = vxpose.xlu0.b32.cont [14/16] 0.0, 128
  %886 = vxpose.xlu0.b32.cont [15/16] 0.0, 128
  %887 = vxpose.xlu0.b32.end [16/16] 0.0, 128
  %v888 = vpop.trf.xlu0
  %v889 = vpop.trf.xlu0
  %v890 = vpop.trf.xlu0
  %v891 = vpop.trf.xlu0
  %v892 = vpop.trf.xlu0
  %v893 = vpop.trf.xlu0
  %v894 = vpop.trf.xlu0
  %v895 = vpop.trf.xlu0
  %v896 = vpop.trf.xlu0
  %v897 = vpop.trf.xlu0
  %v898 = vpop.trf.xlu0
  %v899 = vpop.trf.xlu0
  %v900 = vpop.trf.xlu0
  %v901 = vpop.trf.xlu0
  %v902 = vpop.trf.xlu0
  %v903 = vpop.trf.xlu0
  %vm904 = vcmask 64512
  %v906 = vsel %vm904, %v664, 0
  %908 = vmatprep.subr.mxu0 0.0
  %909 = vmatpush1.msra.mxu0 %v536
  %910 = vmatprep.subr.mxu0 0.0
  %911 = vmatpush1.msra.mxu0 0.0
  %912 = vmatprep.subr.mxu0 0.0
  %913 = vmatpush1.msra.mxu0 0.0
  %914 = vmatprep.subr.mxu0 0.0
  %915 = vmatpush1.msra.mxu0 0.0
  %916 = vmatprep.subr.mxu0 0.0
  %917 = vmatpush1.msra.mxu0 0.0
  %918 = vmatprep.subr.mxu0 0.0
  %919 = vmatpush1.msra.mxu0 0.0
  %920 = vmatprep.subr.mxu0 0.0
  %921 = vmatpush1.msra.mxu0 0.0
  %922 = vmatprep.subr.mxu0 0.0
  %923 = vmatpush1.msra.mxu0 0.0
  %924 = vmatprep.subr.mxu0 0.0
  %925 = vmatpush1.msra.mxu0 0.0
  %926 = vmatprep.subr.mxu0 0.0
  %927 = vmatpush1.msra.mxu0 0.0
  %928 = vmatprep.subr.mxu0 0.0
  %929 = vmatpush1.msra.mxu0 0.0
  %930 = vmatprep.subr.mxu0 0.0
  %931 = vmatpush1.msra.mxu0 0.0
  %932 = vmatprep.subr.mxu0 0.0
  %933 = vmatpush1.msra.mxu0 0.0
  %934 = vmatprep.subr.mxu0 0.0
  %935 = vmatpush1.msra.mxu0 0.0
  %936 = vmatprep.subr.mxu0 0.0
  %937 = vmatpush1.msra.mxu0 0.0
  %938 = vmatprep.subr.mxu0 0.0
  %939 = vmatpush1.msra.mxu0 0.0
  %940 = vmatprep.subr.mxu0 0.0
  %941 = vmatpush1.msra.mxu0 0.0
  %942 = vmatprep.subr.mxu0 0.0
  %943 = vmatpush1.msra.mxu0 0.0
  %944 = vmatprep.subr.mxu0 0.0
  %945 = vmatpush1.msra.mxu0 0.0
  %946 = vmatprep.subr.mxu0 0.0
  %947 = vmatpush1.msra.mxu0 0.0
  %948 = vmatprep.subr.mxu0 0.0
  %949 = vmatpush1.msra.mxu0 0.0
  %950 = vmatprep.subr.mxu0 0.0
  %951 = vmatpush1.msra.mxu0 0.0
  %952 = vmatprep.subr.mxu0 0.0
  %953 = vmatpush1.msra.mxu0 0.0
  %954 = vmatprep.subr.mxu0 0.0
  %955 = vmatpush1.msra.mxu0 0.0
  %956 = vmatprep.subr.mxu0 0.0
  %957 = vmatpush1.msra.mxu0 0.0
  %958 = vmatprep.subr.mxu0 0.0
  %959 = vmatpush1.msra.mxu0 0.0
  %960 = vmatprep.subr.mxu0 0.0
  %961 = vmatpush1.msra.mxu0 0.0
  %962 = vmatprep.subr.mxu0 0.0
  %963 = vmatpush1.msra.mxu0 0.0
  %964 = vmatprep.subr.mxu0 0.0
  %965 = vmatpush1.msra.mxu0 0.0
  %966 = vmatprep.subr.mxu0 0.0
  %967 = vmatpush1.msra.mxu0 0.0
  %968 = vmatprep.subr.mxu0 0.0
  %969 = vmatpush1.msra.mxu0 0.0
  %970 = vmatprep.subr.mxu0 0.0
  %971 = vmatpush1.msra.mxu0 0.0
  %972 = vmatprep.mubr.f32.mxu0 0.0
  %973 = vmatmul.mubr.f32.gmra.mrb[0].mxu0 %v906
  %v974 = vpop.f32.mrb[0].mxu0
  %v975 = vadd.f32 0.0, %v974
  %v976 = vpop.f32.mrb[0].mxu0
  %977 = vdwg.mxu0
  %v979 = vsel %vm904, %v696, 0
  %981 = vmatprep.subr.mxu0 0.0
  %982 = vmatpush1.msra.mxu0 %v568
  %983 = vmatprep.subr.mxu0 0.0
  %984 = vmatpush1.msra.mxu0 0.0
  %985 = vmatprep.subr.mxu0 0.0
  %986 = vmatpush1.msra.mxu0 0.0
  %987 = vmatprep.subr.mxu0 0.0
  %988 = vmatpush1.msra.mxu0 0.0
  %989 = vmatprep.subr.mxu0 0.0
  %990 = vmatpush1.msra.mxu0 0.0
  %991 = vmatprep.subr.mxu0 0.0
  %992 = vmatpush1.msra.mxu0 0.0
  %993 = vmatprep.subr.mxu0 0.0
  %994 = vmatpush1.msra.mxu0 0.0
  %995 = vmatprep.subr.mxu0 0.0
  %996 = vmatpush1.msra.mxu0 0.0
  %997 = vmatprep.subr.mxu0 0.0
  %998 = vmatpush1.msra.mxu0 0.0
  %999 = vmatprep.subr.mxu0 0.0
  %1000 = vmatpush1.msra.mxu0 0.0
  %1001 = vmatprep.subr.mxu0 0.0
  %1002 = vmatpush1.msra.mxu0 0.0
  %1003 = vmatprep.subr.mxu0 0.0
  %1004 = vmatpush1.msra.mxu0 0.0
  %1005 = vmatprep.subr.mxu0 0.0
  %1006 = vmatpush1.msra.mxu0 0.0
  %1007 = vmatprep.subr.mxu0 0.0
  %1008 = vmatpush1.msra.mxu0 0.0
  %1009 = vmatprep.subr.mxu0 0.0
  %1010 = vmatpush1.msra.mxu0 0.0
  %1011 = vmatprep.subr.mxu0 0.0
  %1012 = vmatpush1.msra.mxu0 0.0
  %1013 = vmatprep.subr.mxu0 0.0
  %1014 = vmatpush1.msra.mxu0 0.0
  %1015 = vmatprep.subr.mxu0 0.0
  %1016 = vmatpush1.msra.mxu0 0.0
  %1017 = vmatprep.subr.mxu0 0.0
  %1018 = vmatpush1.msra.mxu0 0.0
  %1019 = vmatprep.subr.mxu0 0.0
  %1020 = vmatpush1.msra.mxu0 0.0
  %1021 = vmatprep.subr.mxu0 0.0
  %1022 = vmatpush1.msra.mxu0 0.0
  %1023 = vmatprep.subr.mxu0 0.0
  %1024 = vmatpush1.msra.mxu0 0.0
  %1025 = vmatprep.subr.mxu0 0.0
  %1026 = vmatpush1.msra.mxu0 0.0
  %1027 = vmatprep.subr.mxu0 0.0
  %1028 = vmatpush1.msra.mxu0 0.0
  %1029 = vmatprep.subr.mxu0 0.0
  %1030 = vmatpush1.msra.mxu0 0.0
  %1031 = vmatprep.subr.mxu0 0.0
  %1032 = vmatpush1.msra.mxu0 0.0
  %1033 = vmatprep.subr.mxu0 0.0
  %1034 = vmatpush1.msra.mxu0 0.0
  %1035 = vmatprep.subr.mxu0 0.0
  %1036 = vmatpush1.msra.mxu0 0.0
  %1037 = vmatprep.subr.mxu0 0.0
  %1038 = vmatpush1.msra.mxu0 0.0
  %1039 = vmatprep.subr.mxu0 0.0
  %1040 = vmatpush1.msra.mxu0 0.0
  %1041 = vmatprep.subr.mxu0 0.0
  %1042 = vmatpush1.msra.mxu0 0.0
  %1043 = vmatprep.subr.mxu0 0.0
  %1044 = vmatpush1.msra.mxu0 0.0
  %1045 = vmatprep.mubr.f32.mxu0 0.0
  %1046 = vmatmul.mubr.f32.gmra.mrb[0].mxu0 %v979
  %v1047 = vpop.f32.mrb[0].mxu0
  %v1048 = vadd.f32 0.0, %v1047
  %v1049 = vpop.f32.mrb[0].mxu0
  %1050 = vdwg.mxu0
  %v1052 = vsel %vm904, %v728, 0
  %1054 = vmatprep.subr.mxu0 0.0
  %1055 = vmatpush1.msra.mxu0 %v537
  %1056 = vmatprep.subr.mxu0 0.0
  %1057 = vmatpush1.msra.mxu0 0.0
  %1058 = vmatprep.subr.mxu0 0.0
  %1059 = vmatpush1.msra.mxu0 0.0
  %1060 = vmatprep.subr.mxu0 0.0
  %1061 = vmatpush1.msra.mxu0 0.0
  %1062 = vmatprep.subr.mxu0 0.0
  %1063 = vmatpush1.msra.mxu0 0.0
  %1064 = vmatprep.subr.mxu0 0.0
  %1065 = vmatpush1.msra.mxu0 0.0
  %1066 = vmatprep.subr.mxu0 0.0
  %1067 = vmatpush1.msra.mxu0 0.0
  %1068 = vmatprep.subr.mxu0 0.0
  %1069 = vmatpush1.msra.mxu0 0.0
  %1070 = vmatprep.subr.mxu0 0.0
  %1071 = vmatpush1.msra.mxu0 0.0
  %1072 = vmatprep.subr.mxu0 0.0
  %1073 = vmatpush1.msra.mxu0 0.0
  %1074 = vmatprep.subr.mxu0 0.0
  %1075 = vmatpush1.msra.mxu0 0.0
  %1076 = vmatprep.subr.mxu0 0.0
  %1077 = vmatpush1.msra.mxu0 0.0
  %1078 = vmatprep.subr.mxu0 0.0
  %1079 = vmatpush1.msra.mxu0 0.0
  %1080 = vmatprep.subr.mxu0 0.0
  %1081 = vmatpush1.msra.mxu0 0.0
  %1082 = vmatprep.subr.mxu0 0.0
  %1083 = vmatpush1.msra.mxu0 0.0
  %1084 = vmatprep.subr.mxu0 0.0
  %1085 = vmatpush1.msra.mxu0 0.0
  %1086 = vmatprep.subr.mxu0 0.0
  %1087 = vmatpush1.msra.mxu0 0.0
  %1088 = vmatprep.subr.mxu0 0.0
  %1089 = vmatpush1.msra.mxu0 0.0
  %1090 = vmatprep.subr.mxu0 0.0
  %1091 = vmatpush1.msra.mxu0 0.0
  %1092 = vmatprep.subr.mxu0 0.0
  %1093 = vmatpush1.msra.mxu0 0.0
  %1094 = vmatprep.subr.mxu0 0.0
  %1095 = vmatpush1.msra.mxu0 0.0
  %1096 = vmatprep.subr.mxu0 0.0
  %1097 = vmatpush1.msra.mxu0 0.0
  %1098 = vmatprep.subr.mxu0 0.0
  %1099 = vmatpush1.msra.mxu0 0.0
  %1100 = vmatprep.subr.mxu0 0.0
  %1101 = vmatpush1.msra.mxu0 0.0
  %1102 = vmatprep.subr.mxu0 0.0
  %1103 = vmatpush1.msra.mxu0 0.0
  %1104 = vmatprep.subr.mxu0 0.0
  %1105 = vmatpush1.msra.mxu0 0.0
  %1106 = vmatprep.subr.mxu0 0.0
  %1107 = vmatpush1.msra.mxu0 0.0
  %1108 = vmatprep.subr.mxu0 0.0
  %1109 = vmatpush1.msra.mxu0 0.0
  %1110 = vmatprep.subr.mxu0 0.0
  %1111 = vmatpush1.msra.mxu0 0.0
  %1112 = vmatprep.subr.mxu0 0.0
  %1113 = vmatpush1.msra.mxu0 0.0
  %1114 = vmatprep.subr.mxu0 0.0
  %1115 = vmatpush1.msra.mxu0 0.0
  %1116 = vmatprep.subr.mxu0 0.0
  %1117 = vmatpush1.msra.mxu0 0.0
  %1118 = vmatprep.mubr.f32.mxu0 0.0
  %1119 = vmatmul.mubr.f32.gmra.mrb[0].mxu0 %v1052
  %v1120 = vpop.f32.mrb[0].mxu0
  %v1121 = vadd.f32 0.0, %v1120
  %v1122 = vpop.f32.mrb[0].mxu0
  %1123 = vdwg.mxu0
  %v1125 = vsel %vm904, %v760, 0
  %1127 = vmatprep.subr.mxu0 0.0
  %1128 = vmatpush1.msra.mxu0 %v569
  %1129 = vmatprep.subr.mxu0 0.0
  %1130 = vmatpush1.msra.mxu0 0.0
  %1131 = vmatprep.subr.mxu0 0.0
  %1132 = vmatpush1.msra.mxu0 0.0
  %1133 = vmatprep.subr.mxu0 0.0
  %1134 = vmatpush1.msra.mxu0 0.0
  %1135 = vmatprep.subr.mxu0 0.0
  %1136 = vmatpush1.msra.mxu0 0.0
  %1137 = vmatprep.subr.mxu0 0.0
  %1138 = vmatpush1.msra.mxu0 0.0
  %1139 = vmatprep.subr.mxu0 0.0
  %1140 = vmatpush1.msra.mxu0 0.0
  %1141 = vmatprep.subr.mxu0 0.0
  %1142 = vmatpush1.msra.mxu0 0.0
  %1143 = vmatprep.subr.mxu0 0.0
  %1144 = vmatpush1.msra.mxu0 0.0
  %1145 = vmatprep.subr.mxu0 0.0
  %1146 = vmatpush1.msra.mxu0 0.0
  %1147 = vmatprep.subr.mxu0 0.0
  %1148 = vmatpush1.msra.mxu0 0.0
  %1149 = vmatprep.subr.mxu0 0.0
  %1150 = vmatpush1.msra.mxu0 0.0
  %1151 = vmatprep.subr.mxu0 0.0
  %1152 = vmatpush1.msra.mxu0 0.0
  %1153 = vmatprep.subr.mxu0 0.0
  %1154 = vmatpush1.msra.mxu0 0.0
  %1155 = vmatprep.subr.mxu0 0.0
  %1156 = vmatpush1.msra.mxu0 0.0
  %1157 = vmatprep.subr.mxu0 0.0
  %1158 = vmatpush1.msra.mxu0 0.0
  %1159 = vmatprep.subr.mxu0 0.0
  %1160 = vmatpush1.msra.mxu0 0.0
  %1161 = vmatprep.subr.mxu0 0.0
  %1162 = vmatpush1.msra.mxu0 0.0
  %1163 = vmatprep.subr.mxu0 0.0
  %1164 = vmatpush1.msra.mxu0 0.0
  %1165 = vmatprep.subr.mxu0 0.0
  %1166 = vmatpush1.msra.mxu0 0.0
  %1167 = vmatprep.subr.mxu0 0.0
  %1168 = vmatpush1.msra.mxu0 0.0
  %1169 = vmatprep.subr.mxu0 0.0
  %1170 = vmatpush1.msra.mxu0 0.0
  %1171 = vmatprep.subr.mxu0 0.0
  %1172 = vmatpush1.msra.mxu0 0.0
  %1173 = vmatprep.subr.mxu0 0.0
  %1174 = vmatpush1.msra.mxu0 0.0
  %1175 = vmatprep.subr.mxu0 0.0
  %1176 = vmatpush1.msra.mxu0 0.0
  %1177 = vmatprep.subr.mxu0 0.0
  %1178 = vmatpush1.msra.mxu0 0.0
  %1179 = vmatprep.subr.mxu0 0.0
  %1180 = vmatpush1.msra.mxu0 0.0
  %1181 = vmatprep.subr.mxu0 0.0
  %1182 = vmatpush1.msra.mxu0 0.0
  %1183 = vmatprep.subr.mxu0 0.0
  %1184 = vmatpush1.msra.mxu0 0.0
  %1185 = vmatprep.subr.mxu0 0.0
  %1186 = vmatpush1.msra.mxu0 0.0
  %1187 = vmatprep.subr.mxu0 0.0
  %1188 = vmatpush1.msra.mxu0 0.0
  %1189 = vmatprep.subr.mxu0 0.0
  %1190 = vmatpush1.msra.mxu0 0.0
  %1191 = vmatprep.mubr.f32.mxu0 0.0
  %1192 = vmatmul.mubr.f32.gmra.mrb[0].mxu0 %v1125
  %v1193 = vpop.f32.mrb[0].mxu0
  %v1194 = vadd.f32 0.0, %v1193
  %v1195 = vpop.f32.mrb[0].mxu0
  %1196 = vdwg.mxu0
  %v1198 = vsel %vm904, %v792, 0
  %1200 = vmatprep.subr.mxu0 0.0
  %1201 = vmatpush1.msra.mxu0 %v538
  %1202 = vmatprep.subr.mxu0 0.0
  %1203 = vmatpush1.msra.mxu0 0.0
  %1204 = vmatprep.subr.mxu0 0.0
  %1205 = vmatpush1.msra.mxu0 0.0
  %1206 = vmatprep.subr.mxu0 0.0
  %1207 = vmatpush1.msra.mxu0 0.0
  %1208 = vmatprep.subr.mxu0 0.0
  %1209 = vmatpush1.msra.mxu0 0.0
  %1210 = vmatprep.subr.mxu0 0.0
  %1211 = vmatpush1.msra.mxu0 0.0
  %1212 = vmatprep.subr.mxu0 0.0
  %1213 = vmatpush1.msra.mxu0 0.0
  %1214 = vmatprep.subr.mxu0 0.0
  %1215 = vmatpush1.msra.mxu0 0.0
  %1216 = vmatprep.subr.mxu0 0.0
  %1217 = vmatpush1.msra.mxu0 0.0
  %1218 = vmatprep.subr.mxu0 0.0
  %1219 = vmatpush1.msra.mxu0 0.0
  %1220 = vmatprep.subr.mxu0 0.0
  %1221 = vmatpush1.msra.mxu0 0.0
  %1222 = vmatprep.subr.mxu0 0.0
  %1223 = vmatpush1.msra.mxu0 0.0
  %1224 = vmatprep.subr.mxu0 0.0
  %1225 = vmatpush1.msra.mxu0 0.0
  %1226 = vmatprep.subr.mxu0 0.0
  %1227 = vmatpush1.msra.mxu0 0.0
  %1228 = vmatprep.subr.mxu0 0.0
  %1229 = vmatpush1.msra.mxu0 0.0
  %1230 = vmatprep.subr.mxu0 0.0
  %1231 = vmatpush1.msra.mxu0 0.0
  %1232 = vmatprep.subr.mxu0 0.0
  %1233 = vmatpush1.msra.mxu0 0.0
  %1234 = vmatprep.subr.mxu0 0.0
  %1235 = vmatpush1.msra.mxu0 0.0
  %1236 = vmatprep.subr.mxu0 0.0
  %1237 = vmatpush1.msra.mxu0 0.0
  %1238 = vmatprep.subr.mxu0 0.0
  %1239 = vmatpush1.msra.mxu0 0.0
  %1240 = vmatprep.subr.mxu0 0.0
  %1241 = vmatpush1.msra.mxu0 0.0
  %1242 = vmatprep.subr.mxu0 0.0
  %1243 = vmatpush1.msra.mxu0 0.0
  %1244 = vmatprep.subr.mxu0 0.0
  %1245 = vmatpush1.msra.mxu0 0.0
  %1246 = vmatprep.subr.mxu0 0.0
  %1247 = vmatpush1.msra.mxu0 0.0
  %1248 = vmatprep.subr.mxu0 0.0
  %1249 = vmatpush1.msra.mxu0 0.0
  %1250 = vmatprep.subr.mxu0 0.0
  %1251 = vmatpush1.msra.mxu0 0.0
  %1252 = vmatprep.subr.mxu0 0.0
  %1253 = vmatpush1.msra.mxu0 0.0
  %1254 = vmatprep.subr.mxu0 0.0
  %1255 = vmatpush1.msra.mxu0 0.0
  %1256 = vmatprep.subr.mxu0 0.0
  %1257 = vmatpush1.msra.mxu0 0.0
  %1258 = vmatprep.subr.mxu0 0.0
  %1259 = vmatpush1.msra.mxu0 0.0
  %1260 = vmatprep.subr.mxu0 0.0
  %1261 = vmatpush1.msra.mxu0 0.0
  %1262 = vmatprep.subr.mxu0 0.0
  %1263 = vmatpush1.msra.mxu0 0.0
  %1264 = vmatprep.mubr.f32.mxu0 0.0
  %1265 = vmatmul.mubr.f32.gmra.mrb[0].mxu0 %v1198
  %v1266 = vpop.f32.mrb[0].mxu0
  %v1267 = vadd.f32 0.0, %v1266
  %v1268 = vpop.f32.mrb[0].mxu0
  %1269 = vdwg.mxu0
  %v1271 = vsel %vm904, %v824, 0
  %1273 = vmatprep.subr.mxu0 0.0
  %1274 = vmatpush1.msra.mxu0 %v570
  %1275 = vmatprep.subr.mxu0 0.0
  %1276 = vmatpush1.msra.mxu0 0.0
  %1277 = vmatprep.subr.mxu0 0.0
  %1278 = vmatpush1.msra.mxu0 0.0
  %1279 = vmatprep.subr.mxu0 0.0
  %1280 = vmatpush1.msra.mxu0 0.0
  %1281 = vmatprep.subr.mxu0 0.0
  %1282 = vmatpush1.msra.mxu0 0.0
  %1283 = vmatprep.subr.mxu0 0.0
  %1284 = vmatpush1.msra.mxu0 0.0
  %1285 = vmatprep.subr.mxu0 0.0
  %1286 = vmatpush1.msra.mxu0 0.0
  %1287 = vmatprep.subr.mxu0 0.0
  %1288 = vmatpush1.msra.mxu0 0.0
  %1289 = vmatprep.subr.mxu0 0.0
  %1290 = vmatpush1.msra.mxu0 0.0
  %1291 = vmatprep.subr.mxu0 0.0
  %1292 = vmatpush1.msra.mxu0 0.0
  %1293 = vmatprep.subr.mxu0 0.0
  %1294 = vmatpush1.msra.mxu0 0.0
  %1295 = vmatprep.subr.mxu0 0.0
  %1296 = vmatpush1.msra.mxu0 0.0
  %1297 = vmatprep.subr.mxu0 0.0
  %1298 = vmatpush1.msra.mxu0 0.0
  %1299 = vmatprep.subr.mxu0 0.0
  %1300 = vmatpush1.msra.mxu0 0.0
  %1301 = vmatprep.subr.mxu0 0.0
  %1302 = vmatpush1.msra.mxu0 0.0
  %1303 = vmatprep.subr.mxu0 0.0
  %1304 = vmatpush1.msra.mxu0 0.0
  %1305 = vmatprep.subr.mxu0 0.0
  %1306 = vmatpush1.msra.mxu0 0.0
  %1307 = vmatprep.subr.mxu0 0.0
  %1308 = vmatpush1.msra.mxu0 0.0
  %1309 = vmatprep.subr.mxu0 0.0
  %1310 = vmatpush1.msra.mxu0 0.0
  %1311 = vmatprep.subr.mxu0 0.0
  %1312 = vmatpush1.msra.mxu0 0.0
  %1313 = vmatprep.subr.mxu0 0.0
  %1314 = vmatpush1.msra.mxu0 0.0
  %1315 = vmatprep.subr.mxu0 0.0
  %1316 = vmatpush1.msra.mxu0 0.0
  %1317 = vmatprep.subr.mxu0 0.0
  %1318 = vmatpush1.msra.mxu0 0.0
  %1319 = vmatprep.subr.mxu0 0.0
  %1320 = vmatpush1.msra.mxu0 0.0
  %1321 = vmatprep.subr.mxu0 0.0
  %1322 = vmatpush1.msra.mxu0 0.0
  %1323 = vmatprep.subr.mxu0 0.0
  %1324 = vmatpush1.msra.mxu0 0.0
  %1325 = vmatprep.subr.mxu0 0.0
  %1326 = vmatpush1.msra.mxu0 0.0
  %1327 = vmatprep.subr.mxu0 0.0
  %1328 = vmatpush1.msra.mxu0 0.0
  %1329 = vmatprep.subr.mxu0 0.0
  %1330 = vmatpush1.msra.mxu0 0.0
  %1331 = vmatprep.subr.mxu0 0.0
  %1332 = vmatpush1.msra.mxu0 0.0
  %1333 = vmatprep.subr.mxu0 0.0
  %1334 = vmatpush1.msra.mxu0 0.0
  %1335 = vmatprep.subr.mxu0 0.0
  %1336 = vmatpush1.msra.mxu0 0.0
  %1337 = vmatprep.mubr.f32.mxu0 0.0
  %1338 = vmatmul.mubr.f32.gmra.mrb[0].mxu0 %v1271
  %v1339 = vpop.f32.mrb[0].mxu0
  %v1340 = vadd.f32 0.0, %v1339
  %v1341 = vpop.f32.mrb[0].mxu0
  %1342 = vdwg.mxu0
  %v1344 = vsel %vm904, %v856, 0
  %1346 = vmatprep.subr.mxu0 0.0
  %1347 = vmatpush1.msra.mxu0 %v539
  %1348 = vmatprep.subr.mxu0 0.0
  %1349 = vmatpush1.msra.mxu0 0.0
  %1350 = vmatprep.subr.mxu0 0.0
  %1351 = vmatpush1.msra.mxu0 0.0
  %1352 = vmatprep.subr.mxu0 0.0
  %1353 = vmatpush1.msra.mxu0 0.0
  %1354 = vmatprep.subr.mxu0 0.0
  %1355 = vmatpush1.msra.mxu0 0.0
  %1356 = vmatprep.subr.mxu0 0.0
  %1357 = vmatpush1.msra.mxu0 0.0
  %1358 = vmatprep.subr.mxu0 0.0
  %1359 = vmatpush1.msra.mxu0 0.0
  %1360 = vmatprep.subr.mxu0 0.0
  %1361 = vmatpush1.msra.mxu0 0.0
  %1362 = vmatprep.subr.mxu0 0.0
  %1363 = vmatpush1.msra.mxu0 0.0
  %1364 = vmatprep.subr.mxu0 0.0
  %1365 = vmatpush1.msra.mxu0 0.0
  %1366 = vmatprep.subr.mxu0 0.0
  %1367 = vmatpush1.msra.mxu0 0.0
  %1368 = vmatprep.subr.mxu0 0.0
  %1369 = vmatpush1.msra.mxu0 0.0
  %1370 = vmatprep.subr.mxu0 0.0
  %1371 = vmatpush1.msra.mxu0 0.0
  %1372 = vmatprep.subr.mxu0 0.0
  %1373 = vmatpush1.msra.mxu0 0.0
  %1374 = vmatprep.subr.mxu0 0.0
  %1375 = vmatpush1.msra.mxu0 0.0
  %1376 = vmatprep.subr.mxu0 0.0
  %1377 = vmatpush1.msra.mxu0 0.0
  %1378 = vmatprep.subr.mxu0 0.0
  %1379 = vmatpush1.msra.mxu0 0.0
  %1380 = vmatprep.subr.mxu0 0.0
  %1381 = vmatpush1.msra.mxu0 0.0
  %1382 = vmatprep.subr.mxu0 0.0
  %1383 = vmatpush1.msra.mxu0 0.0
  %1384 = vmatprep.subr.mxu0 0.0
  %1385 = vmatpush1.msra.mxu0 0.0
  %1386 = vmatprep.subr.mxu0 0.0
  %1387 = vmatpush1.msra.mxu0 0.0
  %1388 = vmatprep.subr.mxu0 0.0
  %1389 = vmatpush1.msra.mxu0 0.0
  %1390 = vmatprep.subr.mxu0 0.0
  %1391 = vmatpush1.msra.mxu0 0.0
  %1392 = vmatprep.subr.mxu0 0.0
  %1393 = vmatpush1.msra.mxu0 0.0
  %1394 = vmatprep.subr.mxu0 0.0
  %1395 = vmatpush1.msra.mxu0 0.0
  %1396 = vmatprep.subr.mxu0 0.0
  %1397 = vmatpush1.msra.mxu0 0.0
  %1398 = vmatprep.subr.mxu0 0.0
  %1399 = vmatpush1.msra.mxu0 0.0
  %1400 = vmatprep.subr.mxu0 0.0
  %1401 = vmatpush1.msra.mxu0 0.0
  %1402 = vmatprep.subr.mxu0 0.0
  %1403 = vmatpush1.msra.mxu0 0.0
  %1404 = vmatprep.subr.mxu0 0.0
  %1405 = vmatpush1.msra.mxu0 0.0
  %1406 = vmatprep.subr.mxu0 0.0
  %1407 = vmatpush1.msra.mxu0 0.0
  %1408 = vmatprep.subr.mxu0 0.0
  %1409 = vmatpush1.msra.mxu0 0.0
  %1410 = vmatprep.mubr.f32.mxu0 0.0
  %1411 = vmatmul.mubr.f32.gmra.mrb[0].mxu0 %v1344
  %v1412 = vpop.f32.mrb[0].mxu0
  %v1413 = vadd.f32 0.0, %v1412
  %v1414 = vpop.f32.mrb[0].mxu0
  %1415 = vdwg.mxu0
  %v1417 = vsel %vm904, %v888, 0
  %1419 = vmatprep.subr.mxu0 0.0
  %1420 = vmatpush1.msra.mxu0 %v571
  %1421 = vmatprep.subr.mxu0 0.0
  %1422 = vmatpush1.msra.mxu0 0.0
  %1423 = vmatprep.subr.mxu0 0.0
  %1424 = vmatpush1.msra.mxu0 0.0
  %1425 = vmatprep.subr.mxu0 0.0
  %1426 = vmatpush1.msra.mxu0 0.0
  %1427 = vmatprep.subr.mxu0 0.0
  %1428 = vmatpush1.msra.mxu0 0.0
  %1429 = vmatprep.subr.mxu0 0.0
  %1430 = vmatpush1.msra.mxu0 0.0
  %1431 = vmatprep.subr.mxu0 0.0
  %1432 = vmatpush1.msra.mxu0 0.0
  %1433 = vmatprep.subr.mxu0 0.0
  %1434 = vmatpush1.msra.mxu0 0.0
  %1435 = vmatprep.subr.mxu0 0.0
  %1436 = vmatpush1.msra.mxu0 0.0
  %1437 = vmatprep.subr.mxu0 0.0
  %1438 = vmatpush1.msra.mxu0 0.0
  %1439 = vmatprep.subr.mxu0 0.0
  %1440 = vmatpush1.msra.mxu0 0.0
  %1441 = vmatprep.subr.mxu0 0.0
  %1442 = vmatpush1.msra.mxu0 0.0
  %1443 = vmatprep.subr.mxu0 0.0
  %1444 = vmatpush1.msra.mxu0 0.0
  %1445 = vmatprep.subr.mxu0 0.0
  %1446 = vmatpush1.msra.mxu0 0.0
  %1447 = vmatprep.subr.mxu0 0.0
  %1448 = vmatpush1.msra.mxu0 0.0
  %1449 = vmatprep.subr.mxu0 0.0
  %1450 = vmatpush1.msra.mxu0 0.0
  %1451 = vmatprep.subr.mxu0 0.0
  %1452 = vmatpush1.msra.mxu0 0.0
  %1453 = vmatprep.subr.mxu0 0.0
  %1454 = vmatpush1.msra.mxu0 0.0
  %1455 = vmatprep.subr.mxu0 0.0
  %1456 = vmatpush1.msra.mxu0 0.0
  %1457 = vmatprep.subr.mxu0 0.0
  %1458 = vmatpush1.msra.mxu0 0.0
  %1459 = vmatprep.subr.mxu0 0.0
  %1460 = vmatpush1.msra.mxu0 0.0
  %1461 = vmatprep.subr.mxu0 0.0
  %1462 = vmatpush1.msra.mxu0 0.0
  %1463 = vmatprep.subr.mxu0 0.0
  %1464 = vmatpush1.msra.mxu0 0.0
  %1465 = vmatprep.subr.mxu0 0.0
  %1466 = vmatpush1.msra.mxu0 0.0
  %1467 = vmatprep.subr.mxu0 0.0
  %1468 = vmatpush1.msra.mxu0 0.0
  %1469 = vmatprep.subr.mxu0 0.0
  %1470 = vmatpush1.msra.mxu0 0.0
  %1471 = vmatprep.subr.mxu0 0.0
  %1472 = vmatpush1.msra.mxu0 0.0
  %1473 = vmatprep.subr.mxu0 0.0
  %1474 = vmatpush1.msra.mxu0 0.0
  %1475 = vmatprep.subr.mxu0 0.0
  %1476 = vmatpush1.msra.mxu0 0.0
  %1477 = vmatprep.subr.mxu0 0.0
  %1478 = vmatpush1.msra.mxu0 0.0
  %1479 = vmatprep.subr.mxu0 0.0
  %1480 = vmatpush1.msra.mxu0 0.0
  %1481 = vmatprep.subr.mxu0 0.0
  %1482 = vmatpush1.msra.mxu0 0.0
  %1483 = vmatprep.mubr.f32.mxu0 0.0
  %1484 = vmatmul.mubr.f32.gmra.mrb[0].mxu0 %v1417
  %v1485 = vpop.f32.mrb[0].mxu0
  %v1486 = vadd.f32 0.0, %v1485
  %v1487 = vpop.f32.mrb[0].mxu0
  %1488 = vdwg.mxu0
  %v1489 = vmul.f32 %v975, 0.35355338
  %v1490 = vmul.f32 %v1048, 0.35355338
  %v1491 = vmul.f32 %v1121, 0.35355338
  %v1492 = vmul.f32 %v1194, 0.35355338
  %v1493 = vmul.f32 %v1267, 0.35355338
  %v1494 = vmul.f32 %v1340, 0.35355338
  %v1495 = vmul.f32 %v1413, 0.35355338
  %v1496 = vmul.f32 %v1486, 0.35355338
  %v1497 = vadd.f32 %v1489, %v152
  %v1498 = vadd.f32 %v1490, %v153
  %v1499 = vadd.f32 %v1491, %v154
  %v1500 = vadd.f32 %v1492, %v155
  %v1501 = vadd.f32 %v1493, %v156
  %v1502 = vadd.f32 %v1494, %v157
  %v1503 = vadd.f32 %v1495, %v158
  %v1504 = vadd.f32 %v1496, %v159
  %v1505 = vsel %vm904, %v1497, -inf
  %1506 = vmax.xlane.f32.xlu0 %v1505
  %v1507 = vpop.xlane.xlu0 %1506
  %v1508 = vsel %vm904, %v1498, -inf
  %1509 = vmax.xlane.f32.xlu0 %v1508
  %v1510 = vpop.xlane.xlu0 %1509
  %v1511 = vsel %vm904, %v1499, -inf
  %1512 = vmax.xlane.f32.xlu0 %v1511
  %v1513 = vpop.xlane.xlu0 %1512
  %v1514 = vsel %vm904, %v1500, -inf
  %1515 = vmax.xlane.f32.xlu0 %v1514
  %v1516 = vpop.xlane.xlu0 %1515
  %v1517 = vsel %vm904, %v1501, -inf
  %1518 = vmax.xlane.f32.xlu0 %v1517
  %v1519 = vpop.xlane.xlu0 %1518
  %v1520 = vsel %vm904, %v1502, -inf
  %1521 = vmax.xlane.f32.xlu0 %v1520
  %v1522 = vpop.xlane.xlu0 %1521
  %v1523 = vsel %vm904, %v1503, -inf
  %1524 = vmax.xlane.f32.xlu0 %v1523
  %v1525 = vpop.xlane.xlu0 %1524
  %v1526 = vsel %vm904, %v1504, -inf
  %1527 = vmax.xlane.f32.xlu0 %v1526
  %v1528 = vpop.xlane.xlu0 %1527
  %v1529 = vsub.f32 %v1497, %v1507
  %v1530 = vsub.f32 %v1498, %v1510
  %v1531 = vsub.f32 %v1499, %v1513
  %v1532 = vsub.f32 %v1500, %v1516
  %v1533 = vsub.f32 %v1501, %v1519
  %v1534 = vsub.f32 %v1502, %v1522
  %v1535 = vsub.f32 %v1503, %v1525
  %v1536 = vsub.f32 %v1504, %v1528
  %v1537 = vmul.f32 %v1529, 1.442695
  %v1538 = vpow.pop %v1537
  %v1539 = vmul.f32 %v1530, 1.442695
  %v1540 = vpow.pop %v1539
  %v1541 = vmul.f32 %v1531, 1.442695
  %v1542 = vpow.pop %v1541
  %v1543 = vmul.f32 %v1532, 1.442695
  %v1544 = vpow.pop %v1543
  %v1545 = vmul.f32 %v1533, 1.442695
  %v1546 = vpow.pop %v1545
  %v1547 = vmul.f32 %v1534, 1.442695
  %v1548 = vpow.pop %v1547
  %v1549 = vmul.f32 %v1535, 1.442695
  %v1550 = vpow.pop %v1549
  %v1551 = vmul.f32 %v1536, 1.442695
  %v1552 = vpow.pop %v1551
  %v1553 = vsel %vm904, %v1538, 0.0
  %1554 = vadd.xlane.f32.xlu0 %v1553
  %v1555 = vpop.xlane.xlu0 %1554
  %v1556 = vsel %vm904, %v1540, 0.0
  %1557 = vadd.xlane.f32.xlu0 %v1556
  %v1558 = vpop.xlane.xlu0 %1557
  %v1559 = vsel %vm904, %v1542, 0.0
  %1560 = vadd.xlane.f32.xlu0 %v1559
  %v1561 = vpop.xlane.xlu0 %1560
  %v1562 = vsel %vm904, %v1544, 0.0
  %1563 = vadd.xlane.f32.xlu0 %v1562
  %v1564 = vpop.xlane.xlu0 %1563
  %v1565 = vsel %vm904, %v1546, 0.0
  %1566 = vadd.xlane.f32.xlu0 %v1565
  %v1567 = vpop.xlane.xlu0 %1566
  %v1568 = vsel %vm904, %v1548, 0.0
  %1569 = vadd.xlane.f32.xlu0 %v1568
  %v1570 = vpop.xlane.xlu0 %1569
  %v1571 = vsel %vm904, %v1550, 0.0
  %1572 = vadd.xlane.f32.xlu0 %v1571
  %v1573 = vpop.xlane.xlu0 %1572
  %v1574 = vsel %vm904, %v1552, 0.0
  %1575 = vadd.xlane.f32.xlu0 %v1574
  %v1576 = vpop.xlane.xlu0 %1575
  %v1577 = vrcp.pop %v1555
  %v1578 = vrcp.pop %v1558
  %v1579 = vrcp.pop %v1561
  %v1580 = vrcp.pop %v1564
  %v1581 = vrcp.pop %v1567
  %v1582 = vrcp.pop %v1570
  %v1583 = vrcp.pop %v1573
  %v1584 = vrcp.pop %v1576
  %v1585 = vmul.f32 %v1538, %v1577
  %v1586 = vmul.f32 %v1540, %v1578
  %v1587 = vmul.f32 %v1542, %v1579
  %v1588 = vmul.f32 %v1544, %v1580
  %v1589 = vmul.f32 %v1546, %v1581
  %v1590 = vmul.f32 %v1548, %v1582
  %v1591 = vmul.f32 %v1550, %v1583
  %v1592 = vmul.f32 %v1552, %v1584
  %v1594 = vsel %vm904, %v600, 0
  %v1597 = vsel %vm904, %v1585, 0
  %1599 = vmatprep.subr.mxu0 0.0
  %1600 = vmatpush1.xpose.msra.mxu0 %v1597
  %1601 = vmatprep.subr.mxu0 0.0
  %1602 = vmatpush1.xpose.msra.mxu0 0.0
  %1603 = vmatprep.subr.mxu0 0.0
  %1604 = vmatpush1.xpose.msra.mxu0 0.0
  %1605 = vmatprep.subr.mxu0 0.0
  %1606 = vmatpush1.xpose.msra.mxu0 0.0
  %1607 = vmatprep.subr.mxu0 0.0
  %1608 = vmatpush1.xpose.msra.mxu0 0.0
  %1609 = vmatprep.subr.mxu0 0.0
  %1610 = vmatpush1.xpose.msra.mxu0 0.0
  %1611 = vmatprep.subr.mxu0 0.0
  %1612 = vmatpush1.xpose.msra.mxu0 0.0
  %1613 = vmatprep.subr.mxu0 0.0
  %1614 = vmatpush1.xpose.msra.mxu0 0.0
  %1615 = vmatprep.subr.mxu0 0.0
  %1616 = vmatpush1.xpose.msra.mxu0 0.0
  %1617 = vmatprep.subr.mxu0 0.0
  %1618 = vmatpush1.xpose.msra.mxu0 0.0
  %1619 = vmatprep.subr.mxu0 0.0
  %1620 = vmatpush1.xpose.msra.mxu0 0.0
  %1621 = vmatprep.subr.mxu0 0.0
  %1622 = vmatpush1.xpose.msra.mxu0 0.0
  %1623 = vmatprep.subr.mxu0 0.0
  %1624 = vmatpush1.xpose.msra.mxu0 0.0
  %1625 = vmatprep.subr.mxu0 0.0
  %1626 = vmatpush1.xpose.msra.mxu0 0.0
  %1627 = vmatprep.subr.mxu0 0.0
  %1628 = vmatpush1.xpose.msra.mxu0 0.0
  %1629 = vmatprep.subr.mxu0 0.0
  %1630 = vmatpush1.xpose.msra.mxu0 0.0
  %1631 = vmatprep.subr.mxu0 0.0
  %1632 = vmatpush1.xpose.msra.mxu0 0.0
  %1633 = vmatprep.subr.mxu0 0.0
  %1634 = vmatpush1.xpose.msra.mxu0 0.0
  %1635 = vmatprep.subr.mxu0 0.0
  %1636 = vmatpush1.xpose.msra.mxu0 0.0
  %1637 = vmatprep.subr.mxu0 0.0
  %1638 = vmatpush1.xpose.msra.mxu0 0.0
  %1639 = vmatprep.subr.mxu0 0.0
  %1640 = vmatpush1.xpose.msra.mxu0 0.0
  %1641 = vmatprep.subr.mxu0 0.0
  %1642 = vmatpush1.xpose.msra.mxu0 0.0
  %1643 = vmatprep.subr.mxu0 0.0
  %1644 = vmatpush1.xpose.msra.mxu0 0.0
  %1645 = vmatprep.subr.mxu0 0.0
  %1646 = vmatpush1.xpose.msra.mxu0 0.0
  %1647 = vmatprep.subr.mxu0 0.0
  %1648 = vmatpush1.xpose.msra.mxu0 0.0
  %1649 = vmatprep.subr.mxu0 0.0
  %1650 = vmatpush1.xpose.msra.mxu0 0.0
  %1651 = vmatprep.subr.mxu0 0.0
  %1652 = vmatpush1.xpose.msra.mxu0 0.0
  %1653 = vmatprep.subr.mxu0 0.0
  %1654 = vmatpush1.xpose.msra.mxu0 0.0
  %1655 = vmatprep.subr.mxu0 0.0
  %1656 = vmatpush1.xpose.msra.mxu0 0.0
  %1657 = vmatprep.subr.mxu0 0.0
  %1658 = vmatpush1.xpose.msra.mxu0 0.0
  %1659 = vmatprep.subr.mxu0 0.0
  %1660 = vmatpush1.xpose.msra.mxu0 0.0
  %1661 = vmatprep.subr.mxu0 0.0
  %1662 = vmatpush1.xpose.msra.mxu0 0.0
  %1663 = vmatprep.mubr.f32.mxu0 0.0
  %1664 = vmatmul.mubr.f32.gmra.mrb[0].mxu0 %v1594
  %v1665 = vpop.f32.mrb[0].mxu0
  %v1666 = vadd.f32 0.0, %v1665
  %v1667 = vpop.f32.mrb[0].mxu0
  %1668 = vdwg.mxu0
  %v1670 = vsel %vm904, %v632, 0
  %v1673 = vsel %vm904, %v1586, 0
  %1675 = vmatprep.subr.mxu0 0.0
  %1676 = vmatpush1.xpose.msra.mxu0 %v1673
  %1677 = vmatprep.subr.mxu0 0.0
  %1678 = vmatpush1.xpose.msra.mxu0 0.0
  %1679 = vmatprep.subr.mxu0 0.0
  %1680 = vmatpush1.xpose.msra.mxu0 0.0
  %1681 = vmatprep.subr.mxu0 0.0
  %1682 = vmatpush1.xpose.msra.mxu0 0.0
  %1683 = vmatprep.subr.mxu0 0.0
  %1684 = vmatpush1.xpose.msra.mxu0 0.0
  %1685 = vmatprep.subr.mxu0 0.0
  %1686 = vmatpush1.xpose.msra.mxu0 0.0
  %1687 = vmatprep.subr.mxu0 0.0
  %1688 = vmatpush1.xpose.msra.mxu0 0.0
  %1689 = vmatprep.subr.mxu0 0.0
  %1690 = vmatpush1.xpose.msra.mxu0 0.0
  %1691 = vmatprep.subr.mxu0 0.0
  %1692 = vmatpush1.xpose.msra.mxu0 0.0
  %1693 = vmatprep.subr.mxu0 0.0
  %1694 = vmatpush1.xpose.msra.mxu0 0.0
  %1695 = vmatprep.subr.mxu0 0.0
  %1696 = vmatpush1.xpose.msra.mxu0 0.0
  %1697 = vmatprep.subr.mxu0 0.0
  %1698 = vmatpush1.xpose.msra.mxu0 0.0
  %1699 = vmatprep.subr.mxu0 0.0
  %1700 = vmatpush1.xpose.msra.mxu0 0.0
  %1701 = vmatprep.subr.mxu0 0.0
  %1702 = vmatpush1.xpose.msra.mxu0 0.0
  %1703 = vmatprep.subr.mxu0 0.0
  %1704 = vmatpush1.xpose.msra.mxu0 0.0
  %1705 = vmatprep.subr.mxu0 0.0
  %1706 = vmatpush1.xpose.msra.mxu0 0.0
  %1707 = vmatprep.subr.mxu0 0.0
  %1708 = vmatpush1.xpose.msra.mxu0 0.0
  %1709 = vmatprep.subr.mxu0 0.0
  %1710 = vmatpush1.xpose.msra.mxu0 0.0
  %1711 = vmatprep.subr.mxu0 0.0
  %1712 = vmatpush1.xpose.msra.mxu0 0.0
  %1713 = vmatprep.subr.mxu0 0.0
  %1714 = vmatpush1.xpose.msra.mxu0 0.0
  %1715 = vmatprep.subr.mxu0 0.0
  %1716 = vmatpush1.xpose.msra.mxu0 0.0
  %1717 = vmatprep.subr.mxu0 0.0
  %1718 = vmatpush1.xpose.msra.mxu0 0.0
  %1719 = vmatprep.subr.mxu0 0.0
  %1720 = vmatpush1.xpose.msra.mxu0 0.0
  %1721 = vmatprep.subr.mxu0 0.0
  %1722 = vmatpush1.xpose.msra.mxu0 0.0
  %1723 = vmatprep.subr.mxu0 0.0
  %1724 = vmatpush1.xpose.msra.mxu0 0.0
  %1725 = vmatprep.subr.mxu0 0.0
  %1726 = vmatpush1.xpose.msra.mxu0 0.0
  %1727 = vmatprep.subr.mxu0 0.0
  %1728 = vmatpush1.xpose.msra.mxu0 0.0
  %1729 = vmatprep.subr.mxu0 0.0
  %1730 = vmatpush1.xpose.msra.mxu0 0.0
  %1731 = vmatprep.subr.mxu0 0.0
  %1732 = vmatpush1.xpose.msra.mxu0 0.0
  %1733 = vmatprep.subr.mxu0 0.0
  %1734 = vmatpush1.xpose.msra.mxu0 0.0
  %1735 = vmatprep.subr.mxu0 0.0
  %1736 = vmatpush1.xpose.msra.mxu0 0.0
  %1737 = vmatprep.subr.mxu0 0.0
  %1738 = vmatpush1.xpose.msra.mxu0 0.0
  %1739 = vmatprep.mubr.f32.mxu0 0.0
  %1740 = vmatmul.mubr.f32.gmra.mrb[0].mxu0 %v1670
  %v1741 = vpop.f32.mrb[0].mxu0
  %v1742 = vadd.f32 0.0, %v1741
  %v1743 = vpop.f32.mrb[0].mxu0
  %1744 = vdwg.mxu0
  %v1746 = vsel %vm904, %v601, 0
  %v1749 = vsel %vm904, %v1587, 0
  %1751 = vmatprep.subr.mxu0 0.0
  %1752 = vmatpush1.xpose.msra.mxu0 %v1749
  %1753 = vmatprep.subr.mxu0 0.0
  %1754 = vmatpush1.xpose.msra.mxu0 0.0
  %1755 = vmatprep.subr.mxu0 0.0
  %1756 = vmatpush1.xpose.msra.mxu0 0.0
  %1757 = vmatprep.subr.mxu0 0.0
  %1758 = vmatpush1.xpose.msra.mxu0 0.0
  %1759 = vmatprep.subr.mxu0 0.0
  %1760 = vmatpush1.xpose.msra.mxu0 0.0
  %1761 = vmatprep.subr.mxu0 0.0
  %1762 = vmatpush1.xpose.msra.mxu0 0.0
  %1763 = vmatprep.subr.mxu0 0.0
  %1764 = vmatpush1.xpose.msra.mxu0 0.0
  %1765 = vmatprep.subr.mxu0 0.0
  %1766 = vmatpush1.xpose.msra.mxu0 0.0
  %1767 = vmatprep.subr.mxu0 0.0
  %1768 = vmatpush1.xpose.msra.mxu0 0.0
  %1769 = vmatprep.subr.mxu0 0.0
  %1770 = vmatpush1.xpose.msra.mxu0 0.0
  %1771 = vmatprep.subr.mxu0 0.0
  %1772 = vmatpush1.xpose.msra.mxu0 0.0
  %1773 = vmatprep.subr.mxu0 0.0
  %1774 = vmatpush1.xpose.msra.mxu0 0.0
  %1775 = vmatprep.subr.mxu0 0.0
  %1776 = vmatpush1.xpose.msra.mxu0 0.0
  %1777 = vmatprep.subr.mxu0 0.0
  %1778 = vmatpush1.xpose.msra.mxu0 0.0
  %1779 = vmatprep.subr.mxu0 0.0
  %1780 = vmatpush1.xpose.msra.mxu0 0.0
  %1781 = vmatprep.subr.mxu0 0.0
  %1782 = vmatpush1.xpose.msra.mxu0 0.0
  %1783 = vmatprep.subr.mxu0 0.0
  %1784 = vmatpush1.xpose.msra.mxu0 0.0
  %1785 = vmatprep.subr.mxu0 0.0
  %1786 = vmatpush1.xpose.msra.mxu0 0.0
  %1787 = vmatprep.subr.mxu0 0.0
  %1788 = vmatpush1.xpose.msra.mxu0 0.0
  %1789 = vmatprep.subr.mxu0 0.0
  %1790 = vmatpush1.xpose.msra.mxu0 0.0
  %1791 = vmatprep.subr.mxu0 0.0
  %1792 = vmatpush1.xpose.msra.mxu0 0.0
  %1793 = vmatprep.subr.mxu0 0.0
  %1794 = vmatpush1.xpose.msra.mxu0 0.0
  %1795 = vmatprep.subr.mxu0 0.0
  %1796 = vmatpush1.xpose.msra.mxu0 0.0
  %1797 = vmatprep.subr.mxu0 0.0
  %1798 = vmatpush1.xpose.msra.mxu0 0.0
  %1799 = vmatprep.subr.mxu0 0.0
  %1800 = vmatpush1.xpose.msra.mxu0 0.0
  %1801 = vmatprep.subr.mxu0 0.0
  %1802 = vmatpush1.xpose.msra.mxu0 0.0
  %1803 = vmatprep.subr.mxu0 0.0
  %1804 = vmatpush1.xpose.msra.mxu0 0.0
  %1805 = vmatprep.subr.mxu0 0.0
  %1806 = vmatpush1.xpose.msra.mxu0 0.0
  %1807 = vmatprep.subr.mxu0 0.0
  %1808 = vmatpush1.xpose.msra.mxu0 0.0
  %1809 = vmatprep.subr.mxu0 0.0
  %1810 = vmatpush1.xpose.msra.mxu0 0.0
  %1811 = vmatprep.subr.mxu0 0.0
  %1812 = vmatpush1.xpose.msra.mxu0 0.0
  %1813 = vmatprep.subr.mxu0 0.0
  %1814 = vmatpush1.xpose.msra.mxu0 0.0
  %1815 = vmatprep.mubr.f32.mxu0 0.0
  %1816 = vmatmul.mubr.f32.gmra.mrb[0].mxu0 %v1746
  %v1817 = vpop.f32.mrb[0].mxu0
  %v1818 = vadd.f32 0.0, %v1817
  %v1819 = vpop.f32.mrb[0].mxu0
  %1820 = vdwg.mxu0
  %v1822 = vsel %vm904, %v633, 0
  %v1825 = vsel %vm904, %v1588, 0
  %1827 = vmatprep.subr.mxu0 0.0
  %1828 = vmatpush1.xpose.msra.mxu0 %v1825
  %1829 = vmatprep.subr.mxu0 0.0
  %1830 = vmatpush1.xpose.msra.mxu0 0.0
  %1831 = vmatprep.subr.mxu0 0.0
  %1832 = vmatpush1.xpose.msra.mxu0 0.0
  %1833 = vmatprep.subr.mxu0 0.0
  %1834 = vmatpush1.xpose.msra.mxu0 0.0
  %1835 = vmatprep.subr.mxu0 0.0
  %1836 = vmatpush1.xpose.msra.mxu0 0.0
  %1837 = vmatprep.subr.mxu0 0.0
  %1838 = vmatpush1.xpose.msra.mxu0 0.0
  %1839 = vmatprep.subr.mxu0 0.0
  %1840 = vmatpush1.xpose.msra.mxu0 0.0
  %1841 = vmatprep.subr.mxu0 0.0
  %1842 = vmatpush1.xpose.msra.mxu0 0.0
  %1843 = vmatprep.subr.mxu0 0.0
  %1844 = vmatpush1.xpose.msra.mxu0 0.0
  %1845 = vmatprep.subr.mxu0 0.0
  %1846 = vmatpush1.xpose.msra.mxu0 0.0
  %1847 = vmatprep.subr.mxu0 0.0
  %1848 = vmatpush1.xpose.msra.mxu0 0.0
  %1849 = vmatprep.subr.mxu0 0.0
  %1850 = vmatpush1.xpose.msra.mxu0 0.0
  %1851 = vmatprep.subr.mxu0 0.0
  %1852 = vmatpush1.xpose.msra.mxu0 0.0
  %1853 = vmatprep.subr.mxu0 0.0
  %1854 = vmatpush1.xpose.msra.mxu0 0.0
  %1855 = vmatprep.subr.mxu0 0.0
  %1856 = vmatpush1.xpose.msra.mxu0 0.0
  %1857 = vmatprep.subr.mxu0 0.0
  %1858 = vmatpush1.xpose.msra.mxu0 0.0
  %1859 = vmatprep.subr.mxu0 0.0
  %1860 = vmatpush1.xpose.msra.mxu0 0.0
  %1861 = vmatprep.subr.mxu0 0.0
  %1862 = vmatpush1.xpose.msra.mxu0 0.0
  %1863 = vmatprep.subr.mxu0 0.0
  %1864 = vmatpush1.xpose.msra.mxu0 0.0
  %1865 = vmatprep.subr.mxu0 0.0
  %1866 = vmatpush1.xpose.msra.mxu0 0.0
  %1867 = vmatprep.subr.mxu0 0.0
  %1868 = vmatpush1.xpose.msra.mxu0 0.0
  %1869 = vmatprep.subr.mxu0 0.0
  %1870 = vmatpush1.xpose.msra.mxu0 0.0
  %1871 = vmatprep.subr.mxu0 0.0
  %1872 = vmatpush1.xpose.msra.mxu0 0.0
  %1873 = vmatprep.subr.mxu0 0.0
  %1874 = vmatpush1.xpose.msra.mxu0 0.0
  %1875 = vmatprep.subr.mxu0 0.0
  %1876 = vmatpush1.xpose.msra.mxu0 0.0
  %1877 = vmatprep.subr.mxu0 0.0
  %1878 = vmatpush1.xpose.msra.mxu0 0.0
  %1879 = vmatprep.subr.mxu0 0.0
  %1880 = vmatpush1.xpose.msra.mxu0 0.0
  %1881 = vmatprep.subr.mxu0 0.0
  %1882 = vmatpush1.xpose.msra.mxu0 0.0
  %1883 = vmatprep.subr.mxu0 0.0
  %1884 = vmatpush1.xpose.msra.mxu0 0.0
  %1885 = vmatprep.subr.mxu0 0.0
  %1886 = vmatpush1.xpose.msra.mxu0 0.0
  %1887 = vmatprep.subr.mxu0 0.0
  %1888 = vmatpush1.xpose.msra.mxu0 0.0
  %1889 = vmatprep.subr.mxu0 0.0
  %1890 = vmatpush1.xpose.msra.mxu0 0.0
  %1891 = vmatprep.mubr.f32.mxu0 0.0
  %1892 = vmatmul.mubr.f32.gmra.mrb[0].mxu0 %v1822
  %v1893 = vpop.f32.mrb[0].mxu0
  %v1894 = vadd.f32 0.0, %v1893
  %v1895 = vpop.f32.mrb[0].mxu0
  %1896 = vdwg.mxu0
  %v1898 = vsel %vm904, %v602, 0
  %v1901 = vsel %vm904, %v1589, 0
  %1903 = vmatprep.subr.mxu0 0.0
  %1904 = vmatpush1.xpose.msra.mxu0 %v1901
  %1905 = vmatprep.subr.mxu0 0.0
  %1906 = vmatpush1.xpose.msra.mxu0 0.0
  %1907 = vmatprep.subr.mxu0 0.0
  %1908 = vmatpush1.xpose.msra.mxu0 0.0
  %1909 = vmatprep.subr.mxu0 0.0
  %1910 = vmatpush1.xpose.msra.mxu0 0.0
  %1911 = vmatprep.subr.mxu0 0.0
  %1912 = vmatpush1.xpose.msra.mxu0 0.0
  %1913 = vmatprep.subr.mxu0 0.0
  %1914 = vmatpush1.xpose.msra.mxu0 0.0
  %1915 = vmatprep.subr.mxu0 0.0
  %1916 = vmatpush1.xpose.msra.mxu0 0.0
  %1917 = vmatprep.subr.mxu0 0.0
  %1918 = vmatpush1.xpose.msra.mxu0 0.0
  %1919 = vmatprep.subr.mxu0 0.0
  %1920 = vmatpush1.xpose.msra.mxu0 0.0
  %1921 = vmatprep.subr.mxu0 0.0
  %1922 = vmatpush1.xpose.msra.mxu0 0.0
  %1923 = vmatprep.subr.mxu0 0.0
  %1924 = vmatpush1.xpose.msra.mxu0 0.0
  %1925 = vmatprep.subr.mxu0 0.0
  %1926 = vmatpush1.xpose.msra.mxu0 0.0
  %1927 = vmatprep.subr.mxu0 0.0
  %1928 = vmatpush1.xpose.msra.mxu0 0.0
  %1929 = vmatprep.subr.mxu0 0.0
  %1930 = vmatpush1.xpose.msra.mxu0 0.0
  %1931 = vmatprep.subr.mxu0 0.0
  %1932 = vmatpush1.xpose.msra.mxu0 0.0
  %1933 = vmatprep.subr.mxu0 0.0
  %1934 = vmatpush1.xpose.msra.mxu0 0.0
  %1935 = vmatprep.subr.mxu0 0.0
  %1936 = vmatpush1.xpose.msra.mxu0 0.0
  %1937 = vmatprep.subr.mxu0 0.0
  %1938 = vmatpush1.xpose.msra.mxu0 0.0
  %1939 = vmatprep.subr.mxu0 0.0
  %1940 = vmatpush1.xpose.msra.mxu0 0.0
  %1941 = vmatprep.subr.mxu0 0.0
  %1942 = vmatpush1.xpose.msra.mxu0 0.0
  %1943 = vmatprep.subr.mxu0 0.0
  %1944 = vmatpush1.xpose.msra.mxu0 0.0
  %1945 = vmatprep.subr.mxu0 0.0
  %1946 = vmatpush1.xpose.msra.mxu0 0.0
  %1947 = vmatprep.subr.mxu0 0.0
  %1948 = vmatpush1.xpose.msra.mxu0 0.0
  %1949 = vmatprep.subr.mxu0 0.0
  %1950 = vmatpush1.xpose.msra.mxu0 0.0
  %1951 = vmatprep.subr.mxu0 0.0
  %1952 = vmatpush1.xpose.msra.mxu0 0.0
  %1953 = vmatprep.subr.mxu0 0.0
  %1954 = vmatpush1.xpose.msra.mxu0 0.0
  %1955 = vmatprep.subr.mxu0 0.0
  %1956 = vmatpush1.xpose.msra.mxu0 0.0
  %1957 = vmatprep.subr.mxu0 0.0
  %1958 = vmatpush1.xpose.msra.mxu0 0.0
  %1959 = vmatprep.subr.mxu0 0.0
  %1960 = vmatpush1.xpose.msra.mxu0 0.0
  %1961 = vmatprep.subr.mxu0 0.0
  %1962 = vmatpush1.xpose.msra.mxu0 0.0
  %1963 = vmatprep.subr.mxu0 0.0
  %1964 = vmatpush1.xpose.msra.mxu0 0.0
  %1965 = vmatprep.subr.mxu0 0.0
  %1966 = vmatpush1.xpose.msra.mxu0 0.0
  %1967 = vmatprep.mubr.f32.mxu0 0.0
  %1968 = vmatmul.mubr.f32.gmra.mrb[0].mxu0 %v1898
  %v1969 = vpop.f32.mrb[0].mxu0
  %v1970 = vadd.f32 0.0, %v1969
  %v1971 = vpop.f32.mrb[0].mxu0
  %1972 = vdwg.mxu0
  %v1974 = vsel %vm904, %v634, 0
  %v1977 = vsel %vm904, %v1590, 0
  %1979 = vmatprep.subr.mxu0 0.0
  %1980 = vmatpush1.xpose.msra.mxu0 %v1977
  %1981 = vmatprep.subr.mxu0 0.0
  %1982 = vmatpush1.xpose.msra.mxu0 0.0
  %1983 = vmatprep.subr.mxu0 0.0
  %1984 = vmatpush1.xpose.msra.mxu0 0.0
  %1985 = vmatprep.subr.mxu0 0.0
  %1986 = vmatpush1.xpose.msra.mxu0 0.0
  %1987 = vmatprep.subr.mxu0 0.0
  %1988 = vmatpush1.xpose.msra.mxu0 0.0
  %1989 = vmatprep.subr.mxu0 0.0
  %1990 = vmatpush1.xpose.msra.mxu0 0.0
  %1991 = vmatprep.subr.mxu0 0.0
  %1992 = vmatpush1.xpose.msra.mxu0 0.0
  %1993 = vmatprep.subr.mxu0 0.0
  %1994 = vmatpush1.xpose.msra.mxu0 0.0
  %1995 = vmatprep.subr.mxu0 0.0
  %1996 = vmatpush1.xpose.msra.mxu0 0.0
  %1997 = vmatprep.subr.mxu0 0.0
  %1998 = vmatpush1.xpose.msra.mxu0 0.0
  %1999 = vmatprep.subr.mxu0 0.0
  %2000 = vmatpush1.xpose.msra.mxu0 0.0
  %2001 = vmatprep.subr.mxu0 0.0
  %2002 = vmatpush1.xpose.msra.mxu0 0.0
  %2003 = vmatprep.subr.mxu0 0.0
  %2004 = vmatpush1.xpose.msra.mxu0 0.0
  %2005 = vmatprep.subr.mxu0 0.0
  %2006 = vmatpush1.xpose.msra.mxu0 0.0
  %2007 = vmatprep.subr.mxu0 0.0
  %2008 = vmatpush1.xpose.msra.mxu0 0.0
  %2009 = vmatprep.subr.mxu0 0.0
  %2010 = vmatpush1.xpose.msra.mxu0 0.0
  %2011 = vmatprep.subr.mxu0 0.0
  %2012 = vmatpush1.xpose.msra.mxu0 0.0
  %2013 = vmatprep.subr.mxu0 0.0
  %2014 = vmatpush1.xpose.msra.mxu0 0.0
  %2015 = vmatprep.subr.mxu0 0.0
  %2016 = vmatpush1.xpose.msra.mxu0 0.0
  %2017 = vmatprep.subr.mxu0 0.0
  %2018 = vmatpush1.xpose.msra.mxu0 0.0
  %2019 = vmatprep.subr.mxu0 0.0
  %2020 = vmatpush1.xpose.msra.mxu0 0.0
  %2021 = vmatprep.subr.mxu0 0.0
  %2022 = vmatpush1.xpose.msra.mxu0 0.0
  %2023 = vmatprep.subr.mxu0 0.0
  %2024 = vmatpush1.xpose.msra.mxu0 0.0
  %2025 = vmatprep.subr.mxu0 0.0
  %2026 = vmatpush1.xpose.msra.mxu0 0.0
  %2027 = vmatprep.subr.mxu0 0.0
  %2028 = vmatpush1.xpose.msra.mxu0 0.0
  %2029 = vmatprep.subr.mxu0 0.0
  %2030 = vmatpush1.xpose.msra.mxu0 0.0
  %2031 = vmatprep.subr.mxu0 0.0
  %2032 = vmatpush1.xpose.msra.mxu0 0.0
  %2033 = vmatprep.subr.mxu0 0.0
  %2034 = vmatpush1.xpose.msra.mxu0 0.0
  %2035 = vmatprep.subr.mxu0 0.0
  %2036 = vmatpush1.xpose.msra.mxu0 0.0
  %2037 = vmatprep.subr.mxu0 0.0
  %2038 = vmatpush1.xpose.msra.mxu0 0.0
  %2039 = vmatprep.subr.mxu0 0.0
  %2040 = vmatpush1.xpose.msra.mxu0 0.0
  %2041 = vmatprep.subr.mxu0 0.0
  %2042 = vmatpush1.xpose.msra.mxu0 0.0
  %2043 = vmatprep.mubr.f32.mxu0 0.0
  %2044 = vmatmul.mubr.f32.gmra.mrb[0].mxu0 %v1974
  %v2045 = vpop.f32.mrb[0].mxu0
  %v2046 = vadd.f32 0.0, %v2045
  %v2047 = vpop.f32.mrb[0].mxu0
  %2048 = vdwg.mxu0
  %v2050 = vsel %vm904, %v603, 0
  %v2053 = vsel %vm904, %v1591, 0
  %2055 = vmatprep.subr.mxu0 0.0
  %2056 = vmatpush1.xpose.msra.mxu0 %v2053
  %2057 = vmatprep.subr.mxu0 0.0
  %2058 = vmatpush1.xpose.msra.mxu0 0.0
  %2059 = vmatprep.subr.mxu0 0.0
  %2060 = vmatpush1.xpose.msra.mxu0 0.0
  %2061 = vmatprep.subr.mxu0 0.0
  %2062 = vmatpush1.xpose.msra.mxu0 0.0
  %2063 = vmatprep.subr.mxu0 0.0
  %2064 = vmatpush1.xpose.msra.mxu0 0.0
  %2065 = vmatprep.subr.mxu0 0.0
  %2066 = vmatpush1.xpose.msra.mxu0 0.0
  %2067 = vmatprep.subr.mxu0 0.0
  %2068 = vmatpush1.xpose.msra.mxu0 0.0
  %2069 = vmatprep.subr.mxu0 0.0
  %2070 = vmatpush1.xpose.msra.mxu0 0.0
  %2071 = vmatprep.subr.mxu0 0.0
  %2072 = vmatpush1.xpose.msra.mxu0 0.0
  %2073 = vmatprep.subr.mxu0 0.0
  %2074 = vmatpush1.xpose.msra.mxu0 0.0
  %2075 = vmatprep.subr.mxu0 0.0
  %2076 = vmatpush1.xpose.msra.mxu0 0.0
  %2077 = vmatprep.subr.mxu0 0.0
  %2078 = vmatpush1.xpose.msra.mxu0 0.0
  %2079 = vmatprep.subr.mxu0 0.0
  %2080 = vmatpush1.xpose.msra.mxu0 0.0
  %2081 = vmatprep.subr.mxu0 0.0
  %2082 = vmatpush1.xpose.msra.mxu0 0.0
  %2083 = vmatprep.subr.mxu0 0.0
  %2084 = vmatpush1.xpose.msra.mxu0 0.0
  %2085 = vmatprep.subr.mxu0 0.0
  %2086 = vmatpush1.xpose.msra.mxu0 0.0
  %2087 = vmatprep.subr.mxu0 0.0
  %2088 = vmatpush1.xpose.msra.mxu0 0.0
  %2089 = vmatprep.subr.mxu0 0.0
  %2090 = vmatpush1.xpose.msra.mxu0 0.0
  %2091 = vmatprep.subr.mxu0 0.0
  %2092 = vmatpush1.xpose.msra.mxu0 0.0
  %2093 = vmatprep.subr.mxu0 0.0
  %2094 = vmatpush1.xpose.msra.mxu0 0.0
  %2095 = vmatprep.subr.mxu0 0.0
  %2096 = vmatpush1.xpose.msra.mxu0 0.0
  %2097 = vmatprep.subr.mxu0 0.0
  %2098 = vmatpush1.xpose.msra.mxu0 0.0
  %2099 = vmatprep.subr.mxu0 0.0
  %2100 = vmatpush1.xpose.msra.mxu0 0.0
  %2101 = vmatprep.subr.mxu0 0.0
  %2102 = vmatpush1.xpose.msra.mxu0 0.0
  %2103 = vmatprep.subr.mxu0 0.0
  %2104 = vmatpush1.xpose.msra.mxu0 0.0
  %2105 = vmatprep.subr.mxu0 0.0
  %2106 = vmatpush1.xpose.msra.mxu0 0.0
  %2107 = vmatprep.subr.mxu0 0.0
  %2108 = vmatpush1.xpose.msra.mxu0 0.0
  %2109 = vmatprep.subr.mxu0 0.0
  %2110 = vmatpush1.xpose.msra.mxu0 0.0
  %2111 = vmatprep.subr.mxu0 0.0
  %2112 = vmatpush1.xpose.msra.mxu0 0.0
  %2113 = vmatprep.subr.mxu0 0.0
  %2114 = vmatpush1.xpose.msra.mxu0 0.0
  %2115 = vmatprep.subr.mxu0 0.0
  %2116 = vmatpush1.xpose.msra.mxu0 0.0
  %2117 = vmatprep.subr.mxu0 0.0
  %2118 = vmatpush1.xpose.msra.mxu0 0.0
  %2119 = vmatprep.mubr.f32.mxu0 0.0
  %2120 = vmatmul.mubr.f32.gmra.mrb[0].mxu0 %v2050
  %v2121 = vpop.f32.mrb[0].mxu0
  %v2122 = vadd.f32 0.0, %v2121
  %v2123 = vpop.f32.mrb[0].mxu0
  %2124 = vdwg.mxu0
  %v2126 = vsel %vm904, %v635, 0
  %v2129 = vsel %vm904, %v1592, 0
  %2131 = vmatprep.subr.mxu0 0.0
  %2132 = vmatpush1.xpose.msra.mxu0 %v2129
  %2133 = vmatprep.subr.mxu0 0.0
  %2134 = vmatpush1.xpose.msra.mxu0 0.0
  %2135 = vmatprep.subr.mxu0 0.0
  %2136 = vmatpush1.xpose.msra.mxu0 0.0
  %2137 = vmatprep.subr.mxu0 0.0
  %2138 = vmatpush1.xpose.msra.mxu0 0.0
  %2139 = vmatprep.subr.mxu0 0.0
  %2140 = vmatpush1.xpose.msra.mxu0 0.0
  %2141 = vmatprep.subr.mxu0 0.0
  %2142 = vmatpush1.xpose.msra.mxu0 0.0
  %2143 = vmatprep.subr.mxu0 0.0
  %2144 = vmatpush1.xpose.msra.mxu0 0.0
  %2145 = vmatprep.subr.mxu0 0.0
  %2146 = vmatpush1.xpose.msra.mxu0 0.0
  %2147 = vmatprep.subr.mxu0 0.0
  %2148 = vmatpush1.xpose.msra.mxu0 0.0
  %2149 = vmatprep.subr.mxu0 0.0
  %2150 = vmatpush1.xpose.msra.mxu0 0.0
  %2151 = vmatprep.subr.mxu0 0.0
  %2152 = vmatpush1.xpose.msra.mxu0 0.0
  %2153 = vmatprep.subr.mxu0 0.0
  %2154 = vmatpush1.xpose.msra.mxu0 0.0
  %2155 = vmatprep.subr.mxu0 0.0
  %2156 = vmatpush1.xpose.msra.mxu0 0.0
  %2157 = vmatprep.subr.mxu0 0.0
  %2158 = vmatpush1.xpose.msra.mxu0 0.0
  %2159 = vmatprep.subr.mxu0 0.0
  %2160 = vmatpush1.xpose.msra.mxu0 0.0
  %2161 = vmatprep.subr.mxu0 0.0
  %2162 = vmatpush1.xpose.msra.mxu0 0.0
  %2163 = vmatprep.subr.mxu0 0.0
  %2164 = vmatpush1.xpose.msra.mxu0 0.0
  %2165 = vmatprep.subr.mxu0 0.0
  %2166 = vmatpush1.xpose.msra.mxu0 0.0
  %2167 = vmatprep.subr.mxu0 0.0
  %2168 = vmatpush1.xpose.msra.mxu0 0.0
  %2169 = vmatprep.subr.mxu0 0.0
  %2170 = vmatpush1.xpose.msra.mxu0 0.0
  %2171 = vmatprep.subr.mxu0 0.0
  %2172 = vmatpush1.xpose.msra.mxu0 0.0
  %2173 = vmatprep.subr.mxu0 0.0
  %2174 = vmatpush1.xpose.msra.mxu0 0.0
  %2175 = vmatprep.subr.mxu0 0.0
  %2176 = vmatpush1.xpose.msra.mxu0 0.0
  %2177 = vmatprep.subr.mxu0 0.0
  %2178 = vmatpush1.xpose.msra.mxu0 0.0
  %2179 = vmatprep.subr.mxu0 0.0
  %2180 = vmatpush1.xpose.msra.mxu0 0.0
  %2181 = vmatprep.subr.mxu0 0.0
  %2182 = vmatpush1.xpose.msra.mxu0 0.0
  %2183 = vmatprep.subr.mxu0 0.0
  %2184 = vmatpush1.xpose.msra.mxu0 0.0
  %2185 = vmatprep.subr.mxu0 0.0
  %2186 = vmatpush1.xpose.msra.mxu0 0.0
  %2187 = vmatprep.subr.mxu0 0.0
  %2188 = vmatpush1.xpose.msra.mxu0 0.0
  %2189 = vmatprep.subr.mxu0 0.0
  %2190 = vmatpush1.xpose.msra.mxu0 0.0
  %2191 = vmatprep.subr.mxu0 0.0
  %2192 = vmatpush1.xpose.msra.mxu0 0.0
  %2193 = vmatprep.subr.mxu0 0.0
  %2194 = vmatpush1.xpose.msra.mxu0 0.0
  %2195 = vmatprep.mubr.f32.mxu0 0.0
  %2196 = vmatmul.mubr.f32.gmra.mrb[0].mxu0 %v2126
  %v2197 = vpop.f32.mrb[0].mxu0
  %v2198 = vadd.f32 0.0, %v2197
  %v2199 = vpop.f32.mrb[0].mxu0
  %2200 = vdwg.mxu0
  %2201 = vxpose.xlu0.b32.start [1/16] %v1666, 128
  %2202 = vxpose.xlu0.b32.cont [2/16] %v1818, 128
  %2203 = vxpose.xlu0.b32.cont [3/16] %v1970, 128
  %2204 = vxpose.xlu0.b32.cont [4/16] %v2122, 128
  %2205 = vxpose.xlu0.b32.cont [5/16] 0.0, 128
  %2206 = vxpose.xlu0.b32.cont [6/16] 0.0, 128
  %2207 = vxpose.xlu0.b32.cont [7/16] 0.0, 128
  %2208 = vxpose.xlu0.b32.cont [8/16] 0.0, 128
  %2209 = vxpose.xlu0.b32.cont [9/16] 0.0, 128
  %2210 = vxpose.xlu0.b32.cont [10/16] 0.0, 128
  %2211 = vxpose.xlu0.b32.cont [11/16] 0.0, 128
  %2212 = vxpose.xlu0.b32.cont [12/16] 0.0, 128
  %2213 = vxpose.xlu0.b32.cont [13/16] 0.0, 128
  %2214 = vxpose.xlu0.b32.cont [14/16] 0.0, 128
  %2215 = vxpose.xlu0.b32.cont [15/16] 0.0, 128
  %2216 = vxpose.xlu0.b32.end [16/16] 0.0, 128
  %v2217 = vpop.trf.xlu0
  %v2218 = vpop.trf.xlu0
  %v2219 = vpop.trf.xlu0
  %v2220 = vpop.trf.xlu0
  %v2221 = vpop.trf.xlu0
  %v2222 = vpop.trf.xlu0
  %v2223 = vpop.trf.xlu0
  %v2224 = vpop.trf.xlu0
  %v2225 = vpop.trf.xlu0
  %v2226 = vpop.trf.xlu0
  %v2227 = vpop.trf.xlu0
  %v2228 = vpop.trf.xlu0
  %v2229 = vpop.trf.xlu0
  %v2230 = vpop.trf.xlu0
  %v2231 = vpop.trf.xlu0
  %v2232 = vpop.trf.xlu0
  %2233 = vxpose.xlu0.b32.start [1/16] %v1742, 128
  %2234 = vxpose.xlu0.b32.cont [2/16] %v1894, 128
  %2235 = vxpose.xlu0.b32.cont [3/16] %v2046, 128
  %2236 = vxpose.xlu0.b32.cont [4/16] %v2198, 128
  %2237 = vxpose.xlu0.b32.cont [5/16] 0.0, 128
  %2238 = vxpose.xlu0.b32.cont [6/16] 0.0, 128
  %2239 = vxpose.xlu0.b32.cont [7/16] 0.0, 128
  %2240 = vxpose.xlu0.b32.cont [8/16] 0.0, 128
  %2241 = vxpose.xlu0.b32.cont [9/16] 0.0, 128
  %2242 = vxpose.xlu0.b32.cont [10/16] 0.0, 128
  %2243 = vxpose.xlu0.b32.cont [11/16] 0.0, 128
  %2244 = vxpose.xlu0.b32.cont [12/16] 0.0, 128
  %2245 = vxpose.xlu0.b32.cont [13/16] 0.0, 128
  %2246 = vxpose.xlu0.b32.cont [14/16] 0.0, 128
  %2247 = vxpose.xlu0.b32.cont [15/16] 0.0, 128
  %2248 = vxpose.xlu0.b32.end [16/16] 0.0, 128
  %v2249 = vpop.trf.xlu0
  %v2250 = vpop.trf.xlu0
  %v2251 = vpop.trf.xlu0
  %v2252 = vpop.trf.xlu0
  %v2253 = vpop.trf.xlu0
  %v2254 = vpop.trf.xlu0
  %v2255 = vpop.trf.xlu0
  %v2256 = vpop.trf.xlu0
  %v2257 = vpop.trf.xlu0
  %v2258 = vpop.trf.xlu0
  %v2259 = vpop.trf.xlu0
  %v2260 = vpop.trf.xlu0
  %v2261 = vpop.trf.xlu0
  %v2262 = vpop.trf.xlu0
  %v2263 = vpop.trf.xlu0
  %v2264 = vpop.trf.xlu0
  %v2265 = vld [vmem:[%s6] sm:$0xff]
  %v2266 = vld [vmem:[%s6 + $0x8] sm:$0xff]
  %v2267 = vld [vmem:[%s6 + $0x10] sm:$0xff]
  %v2268 = vld [vmem:[%s6 + $0x18] sm:$0xff]
  %v2269 = vlaneseq
  %v2270 = vshrl.u32 %v2269, 7
  %v2271 = vsub.s32 3, %v2270
  %v2272 = vrot.slane %v160, %v2271
  %v2274 = vsel %vm170, %v2217, 0
  %v2277 = vsel %vm170, %v2249, 0
  %v2280 = vsel %vm170, %v2265, 0
  %v2283 = vsel %vm170, %v2266, 0
  %v2286 = vsel %vm170, %v2267, 0
  %v2289 = vsel %vm170, %v2268, 0
  %2291 = vmatprep.subr.mxu0 0.0
  %2292 = vmatpush1.xpose.msra.mxu0 %v2280
  %2293 = vmatprep.subr.mxu0 0.0
  %2294 = vmatpush1.xpose.msra.mxu0 %v2283
  %2295 = vmatprep.subr.mxu0 0.0
  %2296 = vmatpush1.xpose.msra.mxu0 %v2286
  %2297 = vmatprep.subr.mxu0 0.0
  %2298 = vmatpush1.xpose.msra.mxu0 %v2289
  %2299 = vmatprep.subr.mxu0 0.0
  %2300 = vmatpush1.xpose.msra.mxu0 0.0
  %2301 = vmatprep.subr.mxu0 0.0
  %2302 = vmatpush1.xpose.msra.mxu0 0.0
  %2303 = vmatprep.subr.mxu0 0.0
  %2304 = vmatpush1.xpose.msra.mxu0 0.0
  %2305 = vmatprep.subr.mxu0 0.0
  %2306 = vmatpush1.xpose.msra.mxu0 0.0
  %2307 = vmatprep.subr.mxu0 0.0
  %2308 = vmatpush1.xpose.msra.mxu0 0.0
  %2309 = vmatprep.subr.mxu0 0.0
  %2310 = vmatpush1.xpose.msra.mxu0 0.0
  %2311 = vmatprep.subr.mxu0 0.0
  %2312 = vmatpush1.xpose.msra.mxu0 0.0
  %2313 = vmatprep.subr.mxu0 0.0
  %2314 = vmatpush1.xpose.msra.mxu0 0.0
  %2315 = vmatprep.subr.mxu0 0.0
  %2316 = vmatpush1.xpose.msra.mxu0 0.0
  %2317 = vmatprep.subr.mxu0 0.0
  %2318 = vmatpush1.xpose.msra.mxu0 0.0
  %2319 = vmatprep.subr.mxu0 0.0
  %2320 = vmatpush1.xpose.msra.mxu0 0.0
  %2321 = vmatprep.subr.mxu0 0.0
  %2322 = vmatpush1.xpose.msra.mxu0 0.0
  %2323 = vmatprep.subr.mxu0 0.0
  %2324 = vmatpush1.xpose.msra.mxu0 0.0
  %2325 = vmatprep.subr.mxu0 0.0
  %2326 = vmatpush1.xpose.msra.mxu0 0.0
  %2327 = vmatprep.subr.mxu0 0.0
  %2328 = vmatpush1.xpose.msra.mxu0 0.0
  %2329 = vmatprep.subr.mxu0 0.0
  %2330 = vmatpush1.xpose.msra.mxu0 0.0
  %2331 = vmatprep.subr.mxu0 0.0
  %2332 = vmatpush1.xpose.msra.mxu0 0.0
  %2333 = vmatprep.subr.mxu0 0.0
  %2334 = vmatpush1.xpose.msra.mxu0 0.0
  %2335 = vmatprep.subr.mxu0 0.0
  %2336 = vmatpush1.xpose.msra.mxu0 0.0
  %2337 = vmatprep.subr.mxu0 0.0
  %2338 = vmatpush1.xpose.msra.mxu0 0.0
  %2339 = vmatprep.subr.mxu0 0.0
  %2340 = vmatpush1.xpose.msra.mxu0 0.0
  %2341 = vmatprep.subr.mxu0 0.0
  %2342 = vmatpush1.xpose.msra.mxu0 0.0
  %2343 = vmatprep.subr.mxu0 0.0
  %2344 = vmatpush1.xpose.msra.mxu0 0.0
  %2345 = vmatprep.subr.mxu0 0.0
  %2346 = vmatpush1.xpose.msra.mxu0 0.0
  %2347 = vmatprep.subr.mxu0 0.0
  %2348 = vmatpush1.xpose.msra.mxu0 0.0
  %2349 = vmatprep.subr.mxu0 0.0
  %2350 = vmatpush1.xpose.msra.mxu0 0.0
  %2351 = vmatprep.subr.mxu0 0.0
  %2352 = vmatpush1.xpose.msra.mxu0 0.0
  %2353 = vmatprep.subr.mxu0 0.0
  %2354 = vmatpush1.xpose.msra.mxu0 0.0
  %2355 = vmatprep.mubr.f32.mxu0 0.0
  %2356 = vmatmul.mubr.f32.gmra.mrb[0].mxu0 %v2274
  %v2357 = vpop.f32.mrb[0].mxu0
  %v2358 = vadd.f32 %v2272, %v2357
  %v2359 = vpop.f32.mrb[0].mxu0
  %2360 = vmatprep.mubr.f32.mxu0 0.0
  %2361 = vmatmul.mubr.f32.gmra.mrb[0].mxu0 %v2277
  %v2362 = vpop.f32.mrb[0].mxu0
  %v2363 = vadd.f32 %v2272, %v2362
  %v2364 = vpop.f32.mrb[0].mxu0
  %2365 = vdwg.mxu0
  %v2366 = vadd.f32 %v150, %v2358
  %v2367 = vadd.f32 %v151, %v2363
  %v2368 = vsel %vm170, %v2366, 0.0
  %2369 = vadd.xlane.f32.xlu0 %v2368
  %v2370 = vpop.xlane.xlu0 %2369
  %v2371 = vsel %vm170, %v2367, 0.0
  %2372 = vadd.xlane.f32.xlu0 %v2371
  %v2373 = vpop.xlane.xlu0 %2372
  %v2374 = vrcp.pop 32.0
  %v2375 = vmul.f32 %v2370, %v2374
  %v2376 = vmul.f32 %v2373, %v2374
  %v2377 = vsub.f32 %v2366, %v2375
  %v2378 = vsub.f32 %v2367, %v2376
  %v2379 = vmul.f32 %v2377, %v2377
  %v2380 = vmul.f32 %v2378, %v2378
  %v2381 = vsel %vm170, %v2379, 0.0
  %2382 = vadd.xlane.f32.xlu0 %v2381
  %v2383 = vpop.xlane.xlu0 %2382
  %v2384 = vsel %vm170, %v2380, 0.0
  %2385 = vadd.xlane.f32.xlu0 %v2384
  %v2386 = vpop.xlane.xlu0 %2385
  %v2387 = vmul.f32 %v2383, %v2374
  %v2388 = vmul.f32 %v2386, %v2374
  %v2389 = vadd.f32 %v2387, 1e-05
  %v2390 = vadd.f32 %v2388, 1e-05
  %v2391 = vrsqrt.pop %v2389
  %v2392 = vrsqrt.pop %v2390
  %v2393 = vmul.f32 %v2377, %v2391
  %v2394 = vmul.f32 %v2378, %v2392
  %v2395 = vlaneseq
  %v2396 = vshrl.u32 %v2395, 7
  %v2397 = vsub.s32 4, %v2396
  %v2398 = vrot.slane %v160, %v2397
  %v2399 = vmul.f32 %v2393, %v2398
  %v2400 = vmul.f32 %v2394, %v2398
  %v2401 = vlaneseq
  %v2402 = vshrl.u32 %v2401, 7
  %v2403 = vsub.s32 5, %v2402
  %v2404 = vrot.slane %v160, %v2403
  %v2405 = vadd.f32 %v2399, %v2404
  %v2406 = vadd.f32 %v2400, %v2404
  %v2407 = vld [vmem:[%s7] sm:$0xff]
  %v2408 = vld [vmem:[%s7 + $0x8] sm:$0xff]
  %v2409 = vld [vmem:[%s7 + $0x10] sm:$0xff]
  %v2410 = vld [vmem:[%s7 + $0x18] sm:$0xff]
  %v2411 = vld [vmem:[%s7 + $0x20] sm:$0xff]
  %v2412 = vld [vmem:[%s7 + $0x28] sm:$0xff]
  %v2413 = vld [vmem:[%s7 + $0x30] sm:$0xff]
  %v2414 = vld [vmem:[%s7 + $0x38] sm:$0xff]
  %v2415 = vlaneseq
  %v2416 = vshrl.u32 %v2415, 7
  %v2417 = vsub.s32 6, %v2416
  %v2418 = vrot.slane %v160, %v2417
  %v2420 = vsel %vm170, %v2405, 0
  %v2423 = vsel %vm170, %v2406, 0
  %v2426 = vsel %vm170, %v2407, 0
  %v2429 = vsel %vm170, %v2408, 0
  %v2432 = vsel %vm170, %v2409, 0
  %v2435 = vsel %vm170, %v2410, 0
  %v2438 = vsel %vm170, %v2411, 0
  %v2441 = vsel %vm170, %v2412, 0
  %v2444 = vsel %vm170, %v2413, 0
  %v2447 = vsel %vm170, %v2414, 0
  %2449 = vmatprep.subr.mxu0 0.0
  %2450 = vmatpush1.xpose.msra.mxu0 %v2426
  %2451 = vmatprep.subr.mxu0 0.0
  %2452 = vmatpush1.xpose.msra.mxu0 %v2429
  %2453 = vmatprep.subr.mxu0 0.0
  %2454 = vmatpush1.xpose.msra.mxu0 %v2432
  %2455 = vmatprep.subr.mxu0 0.0
  %2456 = vmatpush1.xpose.msra.mxu0 %v2435
  %2457 = vmatprep.subr.mxu0 0.0
  %2458 = vmatpush1.xpose.msra.mxu0 %v2438
  %2459 = vmatprep.subr.mxu0 0.0
  %2460 = vmatpush1.xpose.msra.mxu0 %v2441
  %2461 = vmatprep.subr.mxu0 0.0
  %2462 = vmatpush1.xpose.msra.mxu0 %v2444
  %2463 = vmatprep.subr.mxu0 0.0
  %2464 = vmatpush1.xpose.msra.mxu0 %v2447
  %2465 = vmatprep.subr.mxu0 0.0
  %2466 = vmatpush1.xpose.msra.mxu0 0.0
  %2467 = vmatprep.subr.mxu0 0.0
  %2468 = vmatpush1.xpose.msra.mxu0 0.0
  %2469 = vmatprep.subr.mxu0 0.0
  %2470 = vmatpush1.xpose.msra.mxu0 0.0
  %2471 = vmatprep.subr.mxu0 0.0
  %2472 = vmatpush1.xpose.msra.mxu0 0.0
  %2473 = vmatprep.subr.mxu0 0.0
  %2474 = vmatpush1.xpose.msra.mxu0 0.0
  %2475 = vmatprep.subr.mxu0 0.0
  %2476 = vmatpush1.xpose.msra.mxu0 0.0
  %2477 = vmatprep.subr.mxu0 0.0
  %2478 = vmatpush1.xpose.msra.mxu0 0.0
  %2479 = vmatprep.subr.mxu0 0.0
  %2480 = vmatpush1.xpose.msra.mxu0 0.0
  %2481 = vmatprep.subr.mxu0 0.0
  %2482 = vmatpush1.xpose.msra.mxu0 0.0
  %2483 = vmatprep.subr.mxu0 0.0
  %2484 = vmatpush1.xpose.msra.mxu0 0.0
  %2485 = vmatprep.subr.mxu0 0.0
  %2486 = vmatpush1.xpose.msra.mxu0 0.0
  %2487 = vmatprep.subr.mxu0 0.0
  %2488 = vmatpush1.xpose.msra.mxu0 0.0
  %2489 = vmatprep.subr.mxu0 0.0
  %2490 = vmatpush1.xpose.msra.mxu0 0.0
  %2491 = vmatprep.subr.mxu0 0.0
  %2492 = vmatpush1.xpose.msra.mxu0 0.0
  %2493 = vmatprep.subr.mxu0 0.0
  %2494 = vmatpush1.xpose.msra.mxu0 0.0
  %2495 = vmatprep.subr.mxu0 0.0
  %2496 = vmatpush1.xpose.msra.mxu0 0.0
  %2497 = vmatprep.subr.mxu0 0.0
  %2498 = vmatpush1.xpose.msra.mxu0 0.0
  %2499 = vmatprep.subr.mxu0 0.0
  %2500 = vmatpush1.xpose.msra.mxu0 0.0
  %2501 = vmatprep.subr.mxu0 0.0
  %2502 = vmatpush1.xpose.msra.mxu0 0.0
  %2503 = vmatprep.subr.mxu0 0.0
  %2504 = vmatpush1.xpose.msra.mxu0 0.0
  %2505 = vmatprep.subr.mxu0 0.0
  %2506 = vmatpush1.xpose.msra.mxu0 0.0
  %2507 = vmatprep.subr.mxu0 0.0
  %2508 = vmatpush1.xpose.msra.mxu0 0.0
  %2509 = vmatprep.subr.mxu0 0.0
  %2510 = vmatpush1.xpose.msra.mxu0 0.0
  %2511 = vmatprep.subr.mxu0 0.0
  %2512 = vmatpush1.xpose.msra.mxu0 0.0
  %2513 = vmatprep.mubr.f32.mxu0 0.0
  %2514 = vmatmul.mubr.f32.gmra.mrb[0].mxu0 %v2420
  %v2515 = vpop.f32.mrb[0].mxu0
  %v2516 = vadd.f32 %v2418, %v2515
  %v2517 = vpop.f32.mrb[0].mxu0
  %2518 = vmatprep.mubr.f32.mxu0 0.0
  %2519 = vmatmul.mubr.f32.gmra.mrb[0].mxu0 %v2423
  %v2520 = vpop.f32.mrb[0].mxu0
  %v2521 = vadd.f32 %v2418, %v2520
  %v2522 = vpop.f32.mrb[0].mxu0
  %2523 = vdwg.mxu0
  %v2524 = vmax.f32 %v2516, 0.0
  %v2525 = vmax.f32 %v2521, 0.0
  %v2526 = vld [vmem:[%s8] sm:$0xff]
  %v2527 = vld [vmem:[%s8 + $0x8] sm:$0xff]
  %v2528 = vld [vmem:[%s8 + $0x10] sm:$0xff]
  %v2529 = vld [vmem:[%s8 + $0x18] sm:$0xff]
  %v2530 = vlaneseq
  %v2531 = vshrl.u32 %v2530, 7
  %v2532 = vsub.s32 7, %v2531
  %v2533 = vrot.slane %v160, %v2532
  %vm2534 = vcmask 523264
  %v2536 = vsel %vm2534, %v2524, 0
  %v2539 = vsel %vm2534, %v2525, 0
  %v2542 = vsel %vm2534, %v2526, 0
  %v2545 = vsel %vm2534, %v2527, 0
  %v2548 = vsel %vm2534, %v2528, 0
  %v2551 = vsel %vm2534, %v2529, 0
  %2553 = vmatprep.subr.mxu0 0.0
  %2554 = vmatpush1.xpose.msra.mxu0 %v2542
  %2555 = vmatprep.subr.mxu0 0.0
  %2556 = vmatpush1.xpose.msra.mxu0 %v2545
  %2557 = vmatprep.subr.mxu0 0.0
  %2558 = vmatpush1.xpose.msra.mxu0 %v2548
  %2559 = vmatprep.subr.mxu0 0.0
  %2560 = vmatpush1.xpose.msra.mxu0 %v2551
  %2561 = vmatprep.subr.mxu0 0.0
  %2562 = vmatpush1.xpose.msra.mxu0 0.0
  %2563 = vmatprep.subr.mxu0 0.0
  %2564 = vmatpush1.xpose.msra.mxu0 0.0
  %2565 = vmatprep.subr.mxu0 0.0
  %2566 = vmatpush1.xpose.msra.mxu0 0.0
  %2567 = vmatprep.subr.mxu0 0.0
  %2568 = vmatpush1.xpose.msra.mxu0 0.0
  %2569 = vmatprep.subr.mxu0 0.0
  %2570 = vmatpush1.xpose.msra.mxu0 0.0
  %2571 = vmatprep.subr.mxu0 0.0
  %2572 = vmatpush1.xpose.msra.mxu0 0.0
  %2573 = vmatprep.subr.mxu0 0.0
  %2574 = vmatpush1.xpose.msra.mxu0 0.0
  %2575 = vmatprep.subr.mxu0 0.0
  %2576 = vmatpush1.xpose.msra.mxu0 0.0
  %2577 = vmatprep.subr.mxu0 0.0
  %2578 = vmatpush1.xpose.msra.mxu0 0.0
  %2579 = vmatprep.subr.mxu0 0.0
  %2580 = vmatpush1.xpose.msra.mxu0 0.0
  %2581 = vmatprep.subr.mxu0 0.0
  %2582 = vmatpush1.xpose.msra.mxu0 0.0
  %2583 = vmatprep.subr.mxu0 0.0
  %2584 = vmatpush1.xpose.msra.mxu0 0.0
  %2585 = vmatprep.subr.mxu0 0.0
  %2586 = vmatpush1.xpose.msra.mxu0 0.0
  %2587 = vmatprep.subr.mxu0 0.0
  %2588 = vmatpush1.xpose.msra.mxu0 0.0
  %2589 = vmatprep.subr.mxu0 0.0
  %2590 = vmatpush1.xpose.msra.mxu0 0.0
  %2591 = vmatprep.subr.mxu0 0.0
  %2592 = vmatpush1.xpose.msra.mxu0 0.0
  %2593 = vmatprep.subr.mxu0 0.0
  %2594 = vmatpush1.xpose.msra.mxu0 0.0
  %2595 = vmatprep.subr.mxu0 0.0
  %2596 = vmatpush1.xpose.msra.mxu0 0.0
  %2597 = vmatprep.subr.mxu0 0.0
  %2598 = vmatpush1.xpose.msra.mxu0 0.0
  %2599 = vmatprep.subr.mxu0 0.0
  %2600 = vmatpush1.xpose.msra.mxu0 0.0
  %2601 = vmatprep.subr.mxu0 0.0
  %2602 = vmatpush1.xpose.msra.mxu0 0.0
  %2603 = vmatprep.subr.mxu0 0.0
  %2604 = vmatpush1.xpose.msra.mxu0 0.0
  %2605 = vmatprep.subr.mxu0 0.0
  %2606 = vmatpush1.xpose.msra.mxu0 0.0
  %2607 = vmatprep.subr.mxu0 0.0
  %2608 = vmatpush1.xpose.msra.mxu0 0.0
  %2609 = vmatprep.subr.mxu0 0.0
  %2610 = vmatpush1.xpose.msra.mxu0 0.0
  %2611 = vmatprep.subr.mxu0 0.0
  %2612 = vmatpush1.xpose.msra.mxu0 0.0
  %2613 = vmatprep.subr.mxu0 0.0
  %2614 = vmatpush1.xpose.msra.mxu0 0.0
  %2615 = vmatprep.subr.mxu0 0.0
  %2616 = vmatpush1.xpose.msra.mxu0 0.0
  %2617 = vmatprep.mubr.f32.mxu0 0.0
  %2618 = vmatmul.mubr.f32.gmra.mrb[0].mxu0 %v2536
  %v2619 = vpop.f32.mrb[0].mxu0
  %v2620 = vadd.f32 %v2533, %v2619
  %v2621 = vpop.f32.mrb[0].mxu0
  %2622 = vmatprep.mubr.f32.mxu0 0.0
  %2623 = vmatmul.mubr.f32.gmra.mrb[0].mxu0 %v2539
  %v2624 = vpop.f32.mrb[0].mxu0
  %v2625 = vadd.f32 %v2533, %v2624
  %v2626 = vpop.f32.mrb[0].mxu0
  %2627 = vdwg.mxu0
  %v2628 = vadd.f32 %v2405, %v2620
  %v2629 = vadd.f32 %v2406, %v2625
  %v2630 = vsel %vm170, %v2628, 0.0
  %2631 = vadd.xlane.f32.xlu0 %v2630
  %v2632 = vpop.xlane.xlu0 %2631
  %v2633 = vsel %vm170, %v2629, 0.0
  %2634 = vadd.xlane.f32.xlu0 %v2633
  %v2635 = vpop.xlane.xlu0 %2634
  %v2636 = vmul.f32 %v2632, %v2374
  %v2637 = vmul.f32 %v2635, %v2374
  %v2638 = vsub.f32 %v2628, %v2636
  %v2639 = vsub.f32 %v2629, %v2637
  %v2640 = vmul.f32 %v2638, %v2638
  %v2641 = vmul.f32 %v2639, %v2639
  %v2642 = vsel %vm170, %v2640, 0.0
  %2643 = vadd.xlane.f32.xlu0 %v2642
  %v2644 = vpop.xlane.xlu0 %2643
  %v2645 = vsel %vm170, %v2641, 0.0
  %2646 = vadd.xlane.f32.xlu0 %v2645
  %v2647 = vpop.xlane.xlu0 %2646
  %v2648 = vmul.f32 %v2644, %v2374
  %v2649 = vmul.f32 %v2647, %v2374
  %v2650 = vadd.f32 %v2648, 1e-05
  %v2651 = vadd.f32 %v2649, 1e-05
  %v2652 = vrsqrt.pop %v2650
  %v2653 = vrsqrt.pop %v2651
  %v2654 = vmul.f32 %v2638, %v2652
  %v2655 = vmul.f32 %v2639, %v2653
  %v2656 = vlaneseq
  %v2657 = vshrl.u32 %v2656, 7
  %v2658 = vsub.s32 0, %v2657
  %v2659 = vrot.slane %v161, %v2658
  %v2660 = vmul.f32 %v2654, %v2659
  %v2661 = vmul.f32 %v2655, %v2659
  %v2662 = vlaneseq
  %v2663 = vshrl.u32 %v2662, 7
  %v2664 = vsub.s32 1, %v2663
  %v2665 = vrot.slane %v161, %v2664
  %v2666 = vadd.f32 %v2660, %v2665
  %v2667 = vadd.f32 %v2661, %v2665
  %s2668 = scalar_lea.vmem %s9, 16
  %v2669 = vld [vmem:[%s2668] sm:$0xff]
  %v2670 = vld [vmem:[%s2668 + $0x8] sm:$0x3]
  %s2671 = scalar_lea.vmem %s5, 96
  %v2672 = vld [vmem:[%s2671] sm:$0xff]
  %v2673 = vld [vmem:[%s2671 + $0x8] sm:$0xff]
  %v2674 = vld [vmem:[%s2671 + $0x10] sm:$0xff]
  %v2675 = vld [vmem:[%s2671 + $0x18] sm:$0xff]
  %v2676 = vlaneseq
  %v2677 = vshrl.u32 %v2676, 7
  %v2678 = vsub.s32 0, %v2677
  %v2679 = vrot.slane %v2669, %v2678
  %v2681 = vsel %vm170, %v2666, 0
  %v2684 = vsel %vm170, %v2667, 0
  %v2687 = vsel %vm170, %v2672, 0
  %v2690 = vsel %vm170, %v2673, 0
  %v2693 = vsel %vm170, %v2674, 0
  %v2696 = vsel %vm170, %v2675, 0
  %2698 = vmatprep.subr.mxu0 0.0
  %2699 = vmatpush1.xpose.msra.mxu0 %v2687
  %2700 = vmatprep.subr.mxu0 0.0
  %2701 = vmatpush1.xpose.msra.mxu0 %v2690
  %2702 = vmatprep.subr.mxu0 0.0
  %2703 = vmatpush1.xpose.msra.mxu0 %v2693
  %2704 = vmatprep.subr.mxu0 0.0
  %2705 = vmatpush1.xpose.msra.mxu0 %v2696
  %2706 = vmatprep.subr.mxu0 0.0
  %2707 = vmatpush1.xpose.msra.mxu0 0.0
  %2708 = vmatprep.subr.mxu0 0.0
  %2709 = vmatpush1.xpose.msra.mxu0 0.0
  %2710 = vmatprep.subr.mxu0 0.0
  %2711 = vmatpush1.xpose.msra.mxu0 0.0
  %2712 = vmatprep.subr.mxu0 0.0
  %2713 = vmatpush1.xpose.msra.mxu0 0.0
  %2714 = vmatprep.subr.mxu0 0.0
  %2715 = vmatpush1.xpose.msra.mxu0 0.0
  %2716 = vmatprep.subr.mxu0 0.0
  %2717 = vmatpush1.xpose.msra.mxu0 0.0
  %2718 = vmatprep.subr.mxu0 0.0
  %2719 = vmatpush1.xpose.msra.mxu0 0.0
  %2720 = vmatprep.subr.mxu0 0.0
  %2721 = vmatpush1.xpose.msra.mxu0 0.0
  %2722 = vmatprep.subr.mxu0 0.0
  %2723 = vmatpush1.xpose.msra.mxu0 0.0
  %2724 = vmatprep.subr.mxu0 0.0
  %2725 = vmatpush1.xpose.msra.mxu0 0.0
  %2726 = vmatprep.subr.mxu0 0.0
  %2727 = vmatpush1.xpose.msra.mxu0 0.0
  %2728 = vmatprep.subr.mxu0 0.0
  %2729 = vmatpush1.xpose.msra.mxu0 0.0
  %2730 = vmatprep.subr.mxu0 0.0
  %2731 = vmatpush1.xpose.msra.mxu0 0.0
  %2732 = vmatprep.subr.mxu0 0.0
  %2733 = vmatpush1.xpose.msra.mxu0 0.0
  %2734 = vmatprep.subr.mxu0 0.0
  %2735 = vmatpush1.xpose.msra.mxu0 0.0
  %2736 = vmatprep.subr.mxu0 0.0
  %2737 = vmatpush1.xpose.msra.mxu0 0.0
  %2738 = vmatprep.subr.mxu0 0.0
  %2739 = vmatpush1.xpose.msra.mxu0 0.0
  %2740 = vmatprep.subr.mxu0 0.0
  %2741 = vmatpush1.xpose.msra.mxu0 0.0
  %2742 = vmatprep.subr.mxu0 0.0
  %2743 = vmatpush1.xpose.msra.mxu0 0.0
  %2744 = vmatprep.subr.mxu0 0.0
  %2745 = vmatpush1.xpose.msra.mxu0 0.0
  %2746 = vmatprep.subr.mxu0 0.0
  %2747 = vmatpush1.xpose.msra.mxu0 0.0
  %2748 = vmatprep.subr.mxu0 0.0
  %2749 = vmatpush1.xpose.msra.mxu0 0.0
  %2750 = vmatprep.subr.mxu0 0.0
  %2751 = vmatpush1.xpose.msra.mxu0 0.0
  %2752 = vmatprep.subr.mxu0 0.0
  %2753 = vmatpush1.xpose.msra.mxu0 0.0
  %2754 = vmatprep.subr.mxu0 0.0
  %2755 = vmatpush1.xpose.msra.mxu0 0.0
  %2756 = vmatprep.subr.mxu0 0.0
  %2757 = vmatpush1.xpose.msra.mxu0 0.0
  %2758 = vmatprep.subr.mxu0 0.0
  %2759 = vmatpush1.xpose.msra.mxu0 0.0
  %2760 = vmatprep.subr.mxu0 0.0
  %2761 = vmatpush1.xpose.msra.mxu0 0.0
  %2762 = vmatprep.mubr.f32.mxu0 0.0
  %2763 = vmatmul.mubr.f32.gmra.mrb[0].mxu0 %v2681
  %v2764 = vpop.f32.mrb[0].mxu0
  %v2765 = vadd.f32 %v2679, %v2764
  %v2766 = vpop.f32.mrb[0].mxu0
  %2767 = vmatprep.mubr.f32.mxu0 0.0
  %2768 = vmatmul.mubr.f32.gmra.mrb[0].mxu0 %v2684
  %v2769 = vpop.f32.mrb[0].mxu0
  %v2770 = vadd.f32 %v2679, %v2769
  %v2771 = vpop.f32.mrb[0].mxu0
  %2772 = vdwg.mxu0
  %s2773 = scalar_lea.vmem %s5, 128
  %v2774 = vld [vmem:[%s2773] sm:$0xff]
  %v2775 = vld [vmem:[%s2773 + $0x8] sm:$0xff]
  %v2776 = vld [vmem:[%s2773 + $0x10] sm:$0xff]
  %v2777 = vld [vmem:[%s2773 + $0x18] sm:$0xff]
  %v2778 = vlaneseq
  %v2779 = vshrl.u32 %v2778, 7
  %v2780 = vsub.s32 1, %v2779
  %v2781 = vrot.slane %v2669, %v2780
  %v2783 = vsel %vm170, %v2774, 0
  %v2786 = vsel %vm170, %v2775, 0
  %v2789 = vsel %vm170, %v2776, 0
  %v2792 = vsel %vm170, %v2777, 0
  %2794 = vmatprep.subr.mxu0 0.0
  %2795 = vmatpush1.xpose.msra.mxu0 %v2783
  %2796 = vmatprep.subr.mxu0 0.0
  %2797 = vmatpush1.xpose.msra.mxu0 %v2786
  %2798 = vmatprep.subr.mxu0 0.0
  %2799 = vmatpush1.xpose.msra.mxu0 %v2789
  %2800 = vmatprep.subr.mxu0 0.0
  %2801 = vmatpush1.xpose.msra.mxu0 %v2792
  %2802 = vmatprep.subr.mxu0 0.0
  %2803 = vmatpush1.xpose.msra.mxu0 0.0
  %2804 = vmatprep.subr.mxu0 0.0
  %2805 = vmatpush1.xpose.msra.mxu0 0.0
  %2806 = vmatprep.subr.mxu0 0.0
  %2807 = vmatpush1.xpose.msra.mxu0 0.0
  %2808 = vmatprep.subr.mxu0 0.0
  %2809 = vmatpush1.xpose.msra.mxu0 0.0
  %2810 = vmatprep.subr.mxu0 0.0
  %2811 = vmatpush1.xpose.msra.mxu0 0.0
  %2812 = vmatprep.subr.mxu0 0.0
  %2813 = vmatpush1.xpose.msra.mxu0 0.0
  %2814 = vmatprep.subr.mxu0 0.0
  %2815 = vmatpush1.xpose.msra.mxu0 0.0
  %2816 = vmatprep.subr.mxu0 0.0
  %2817 = vmatpush1.xpose.msra.mxu0 0.0
  %2818 = vmatprep.subr.mxu0 0.0
  %2819 = vmatpush1.xpose.msra.mxu0 0.0
  %2820 = vmatprep.subr.mxu0 0.0
  %2821 = vmatpush1.xpose.msra.mxu0 0.0
  %2822 = vmatprep.subr.mxu0 0.0
  %2823 = vmatpush1.xpose.msra.mxu0 0.0
  %2824 = vmatprep.subr.mxu0 0.0
  %2825 = vmatpush1.xpose.msra.mxu0 0.0
  %2826 = vmatprep.subr.mxu0 0.0
  %2827 = vmatpush1.xpose.msra.mxu0 0.0
  %2828 = vmatprep.subr.mxu0 0.0
  %2829 = vmatpush1.xpose.msra.mxu0 0.0
  %2830 = vmatprep.subr.mxu0 0.0
  %2831 = vmatpush1.xpose.msra.mxu0 0.0
  %2832 = vmatprep.subr.mxu0 0.0
  %2833 = vmatpush1.xpose.msra.mxu0 0.0
  %2834 = vmatprep.subr.mxu0 0.0
  %2835 = vmatpush1.xpose.msra.mxu0 0.0
  %2836 = vmatprep.subr.mxu0 0.0
  %2837 = vmatpush1.xpose.msra.mxu0 0.0
  %2838 = vmatprep.subr.mxu0 0.0
  %2839 = vmatpush1.xpose.msra.mxu0 0.0
  %2840 = vmatprep.subr.mxu0 0.0
  %2841 = vmatpush1.xpose.msra.mxu0 0.0
  %2842 = vmatprep.subr.mxu0 0.0
  %2843 = vmatpush1.xpose.msra.mxu0 0.0
  %2844 = vmatprep.subr.mxu0 0.0
  %2845 = vmatpush1.xpose.msra.mxu0 0.0
  %2846 = vmatprep.subr.mxu0 0.0
  %2847 = vmatpush1.xpose.msra.mxu0 0.0
  %2848 = vmatprep.subr.mxu0 0.0
  %2849 = vmatpush1.xpose.msra.mxu0 0.0
  %2850 = vmatprep.subr.mxu0 0.0
  %2851 = vmatpush1.xpose.msra.mxu0 0.0
  %2852 = vmatprep.subr.mxu0 0.0
  %2853 = vmatpush1.xpose.msra.mxu0 0.0
  %2854 = vmatprep.subr.mxu0 0.0
  %2855 = vmatpush1.xpose.msra.mxu0 0.0
  %2856 = vmatprep.subr.mxu0 0.0
  %2857 = vmatpush1.xpose.msra.mxu0 0.0
  %2858 = vmatprep.mubr.f32.mxu0 0.0
  %2859 = vmatmul.mubr.f32.gmra.mrb[0].mxu0 %v2681
  %v2860 = vpop.f32.mrb[0].mxu0
  %v2861 = vadd.f32 %v2781, %v2860
  %v2862 = vpop.f32.mrb[0].mxu0
  %2863 = vmatprep.mubr.f32.mxu0 0.0
  %2864 = vmatmul.mubr.f32.gmra.mrb[0].mxu0 %v2684
  %v2865 = vpop.f32.mrb[0].mxu0
  %v2866 = vadd.f32 %v2781, %v2865
  %v2867 = vpop.f32.mrb[0].mxu0
  %2868 = vdwg.mxu0
  %s2869 = scalar_lea.vmem %s5, 160
  %v2870 = vld [vmem:[%s2869] sm:$0xff]
  %v2871 = vld [vmem:[%s2869 + $0x8] sm:$0xff]
  %v2872 = vld [vmem:[%s2869 + $0x10] sm:$0xff]
  %v2873 = vld [vmem:[%s2869 + $0x18] sm:$0xff]
  %v2874 = vlaneseq
  %v2875 = vshrl.u32 %v2874, 7
  %v2876 = vsub.s32 2, %v2875
  %v2877 = vrot.slane %v2669, %v2876
  %v2879 = vsel %vm170, %v2870, 0
  %v2882 = vsel %vm170, %v2871, 0
  %v2885 = vsel %vm170, %v2872, 0
  %v2888 = vsel %vm170, %v2873, 0
  %2890 = vmatprep.subr.mxu0 0.0
  %2891 = vmatpush1.xpose.msra.mxu0 %v2879
  %2892 = vmatprep.subr.mxu0 0.0
  %2893 = vmatpush1.xpose.msra.mxu0 %v2882
  %2894 = vmatprep.subr.mxu0 0.0
  %2895 = vmatpush1.xpose.msra.mxu0 %v2885
  %2896 = vmatprep.subr.mxu0 0.0
  %2897 = vmatpush1.xpose.msra.mxu0 %v2888
  %2898 = vmatprep.subr.mxu0 0.0
  %2899 = vmatpush1.xpose.msra.mxu0 0.0
  %2900 = vmatprep.subr.mxu0 0.0
  %2901 = vmatpush1.xpose.msra.mxu0 0.0
  %2902 = vmatprep.subr.mxu0 0.0
  %2903 = vmatpush1.xpose.msra.mxu0 0.0
  %2904 = vmatprep.subr.mxu0 0.0
  %2905 = vmatpush1.xpose.msra.mxu0 0.0
  %2906 = vmatprep.subr.mxu0 0.0
  %2907 = vmatpush1.xpose.msra.mxu0 0.0
  %2908 = vmatprep.subr.mxu0 0.0
  %2909 = vmatpush1.xpose.msra.mxu0 0.0
  %2910 = vmatprep.subr.mxu0 0.0
  %2911 = vmatpush1.xpose.msra.mxu0 0.0
  %2912 = vmatprep.subr.mxu0 0.0
  %2913 = vmatpush1.xpose.msra.mxu0 0.0
  %2914 = vmatprep.subr.mxu0 0.0
  %2915 = vmatpush1.xpose.msra.mxu0 0.0
  %2916 = vmatprep.subr.mxu0 0.0
  %2917 = vmatpush1.xpose.msra.mxu0 0.0
  %2918 = vmatprep.subr.mxu0 0.0
  %2919 = vmatpush1.xpose.msra.mxu0 0.0
  %2920 = vmatprep.subr.mxu0 0.0
  %2921 = vmatpush1.xpose.msra.mxu0 0.0
  %2922 = vmatprep.subr.mxu0 0.0
  %2923 = vmatpush1.xpose.msra.mxu0 0.0
  %2924 = vmatprep.subr.mxu0 0.0
  %2925 = vmatpush1.xpose.msra.mxu0 0.0
  %2926 = vmatprep.subr.mxu0 0.0
  %2927 = vmatpush1.xpose.msra.mxu0 0.0
  %2928 = vmatprep.subr.mxu0 0.0
  %2929 = vmatpush1.xpose.msra.mxu0 0.0
  %2930 = vmatprep.subr.mxu0 0.0
  %2931 = vmatpush1.xpose.msra.mxu0 0.0
  %2932 = vmatprep.subr.mxu0 0.0
  %2933 = vmatpush1.xpose.msra.mxu0 0.0
  %2934 = vmatprep.subr.mxu0 0.0
  %2935 = vmatpush1.xpose.msra.mxu0 0.0
  %2936 = vmatprep.subr.mxu0 0.0
  %2937 = vmatpush1.xpose.msra.mxu0 0.0
  %2938 = vmatprep.subr.mxu0 0.0
  %2939 = vmatpush1.xpose.msra.mxu0 0.0
  %2940 = vmatprep.subr.mxu0 0.0
  %2941 = vmatpush1.xpose.msra.mxu0 0.0
  %2942 = vmatprep.subr.mxu0 0.0
  %2943 = vmatpush1.xpose.msra.mxu0 0.0
  %2944 = vmatprep.subr.mxu0 0.0
  %2945 = vmatpush1.xpose.msra.mxu0 0.0
  %2946 = vmatprep.subr.mxu0 0.0
  %2947 = vmatpush1.xpose.msra.mxu0 0.0
  %2948 = vmatprep.subr.mxu0 0.0
  %2949 = vmatpush1.xpose.msra.mxu0 0.0
  %2950 = vmatprep.subr.mxu0 0.0
  %2951 = vmatpush1.xpose.msra.mxu0 0.0
  %2952 = vmatprep.subr.mxu0 0.0
  %2953 = vmatpush1.xpose.msra.mxu0 0.0
  %2954 = vmatprep.mubr.f32.mxu0 0.0
  %2955 = vmatmul.mubr.f32.gmra.mrb[0].mxu0 %v2681
  %v2956 = vpop.f32.mrb[0].mxu0
  %v2957 = vadd.f32 %v2877, %v2956
  %v2958 = vpop.f32.mrb[0].mxu0
  %2959 = vmatprep.mubr.f32.mxu0 0.0
  %2960 = vmatmul.mubr.f32.gmra.mrb[0].mxu0 %v2684
  %v2961 = vpop.f32.mrb[0].mxu0
  %v2962 = vadd.f32 %v2877, %v2961
  %v2963 = vpop.f32.mrb[0].mxu0
  %2964 = vdwg.mxu0
  %2965 = vxpose.xlu0.b32.start [1/16] %v2765, 128
  %2966 = vxpose.xlu0.b32.cont [2/16] 0.0, 128
  %2967 = vxpose.xlu0.b32.cont [3/16] 0.0, 128
  %2968 = vxpose.xlu0.b32.cont [4/16] 0.0, 128
  %2969 = vxpose.xlu0.b32.cont [5/16] 0.0, 128
  %2970 = vxpose.xlu0.b32.cont [6/16] 0.0, 128
  %2971 = vxpose.xlu0.b32.cont [7/16] 0.0, 128
  %2972 = vxpose.xlu0.b32.cont [8/16] 0.0, 128
  %2973 = vxpose.xlu0.b32.cont [9/16] 0.0, 128
  %2974 = vxpose.xlu0.b32.cont [10/16] 0.0, 128
  %2975 = vxpose.xlu0.b32.cont [11/16] 0.0, 128
  %2976 = vxpose.xlu0.b32.cont [12/16] 0.0, 128
  %2977 = vxpose.xlu0.b32.cont [13/16] 0.0, 128
  %2978 = vxpose.xlu0.b32.cont [14/16] 0.0, 128
  %2979 = vxpose.xlu0.b32.cont [15/16] 0.0, 128
  %2980 = vxpose.xlu0.b32.end [16/16] 0.0, 128
  %v2981 = vpop.trf.xlu0
  %v2982 = vpop.trf.xlu0
  %v2983 = vpop.trf.xlu0
  %v2984 = vpop.trf.xlu0
  %v2985 = vpop.trf.xlu0
  %v2986 = vpop.trf.xlu0
  %v2987 = vpop.trf.xlu0
  %v2988 = vpop.trf.xlu0
  %v2989 = vpop.trf.xlu0
  %v2990 = vpop.trf.xlu0
  %v2991 = vpop.trf.xlu0
  %v2992 = vpop.trf.xlu0
  %v2993 = vpop.trf.xlu0
  %v2994 = vpop.trf.xlu0
  %v2995 = vpop.trf.xlu0
  %v2996 = vpop.trf.xlu0
  %2997 = vxpose.xlu0.b32.start [1/16] %v2770, 128
  %2998 = vxpose.xlu0.b32.cont [2/16] 0.0, 128
  %2999 = vxpose.xlu0.b32.cont [3/16] 0.0, 128
  %3000 = vxpose.xlu0.b32.cont [4/16] 0.0, 128
  %3001 = vxpose.xlu0.b32.cont [5/16] 0.0, 128
  %3002 = vxpose.xlu0.b32.cont [6/16] 0.0, 128
  %3003 = vxpose.xlu0.b32.cont [7/16] 0.0, 128
  %3004 = vxpose.xlu0.b32.cont [8/16] 0.0, 128
  %3005 = vxpose.xlu0.b32.cont [9/16] 0.0, 128
  %3006 = vxpose.xlu0.b32.cont [10/16] 0.0, 128
  %3007 = vxpose.xlu0.b32.cont [11/16] 0.0, 128
  %3008 = vxpose.xlu0.b32.cont [12/16] 0.0, 128
  %3009 = vxpose.xlu0.b32.cont [13/16] 0.0, 128
  %3010 = vxpose.xlu0.b32.cont [14/16] 0.0, 128
  %3011 = vxpose.xlu0.b32.cont [15/16] 0.0, 128
  %3012 = vxpose.xlu0.b32.end [16/16] 0.0, 128
  %v3013 = vpop.trf.xlu0
  %v3014 = vpop.trf.xlu0
  %v3015 = vpop.trf.xlu0
  %v3016 = vpop.trf.xlu0
  %v3017 = vpop.trf.xlu0
  %v3018 = vpop.trf.xlu0
  %v3019 = vpop.trf.xlu0
  %v3020 = vpop.trf.xlu0
  %v3021 = vpop.trf.xlu0
  %v3022 = vpop.trf.xlu0
  %v3023 = vpop.trf.xlu0
  %v3024 = vpop.trf.xlu0
  %v3025 = vpop.trf.xlu0
  %v3026 = vpop.trf.xlu0
  %v3027 = vpop.trf.xlu0
  %v3028 = vpop.trf.xlu0
  %3029 = vxpose.xlu0.b32.start [1/16] %v2861, 128
  %3030 = vxpose.xlu0.b32.cont [2/16] 0.0, 128
  %3031 = vxpose.xlu0.b32.cont [3/16] 0.0, 128
  %3032 = vxpose.xlu0.b32.cont [4/16] 0.0, 128
  %3033 = vxpose.xlu0.b32.cont [5/16] 0.0, 128
  %3034 = vxpose.xlu0.b32.cont [6/16] 0.0, 128
  %3035 = vxpose.xlu0.b32.cont [7/16] 0.0, 128
  %3036 = vxpose.xlu0.b32.cont [8/16] 0.0, 128
  %3037 = vxpose.xlu0.b32.cont [9/16] 0.0, 128
  %3038 = vxpose.xlu0.b32.cont [10/16] 0.0, 128
  %3039 = vxpose.xlu0.b32.cont [11/16] 0.0, 128
  %3040 = vxpose.xlu0.b32.cont [12/16] 0.0, 128
  %3041 = vxpose.xlu0.b32.cont [13/16] 0.0, 128
  %3042 = vxpose.xlu0.b32.cont [14/16] 0.0, 128
  %3043 = vxpose.xlu0.b32.cont [15/16] 0.0, 128
  %3044 = vxpose.xlu0.b32.end [16/16] 0.0, 128
  %v3045 = vpop.trf.xlu0
  %v3046 = vpop.trf.xlu0
  %v3047 = vpop.trf.xlu0
  %v3048 = vpop.trf.xlu0
  %v3049 = vpop.trf.xlu0
  %v3050 = vpop.trf.xlu0
  %v3051 = vpop.trf.xlu0
  %v3052 = vpop.trf.xlu0
  %v3053 = vpop.trf.xlu0
  %v3054 = vpop.trf.xlu0
  %v3055 = vpop.trf.xlu0
  %v3056 = vpop.trf.xlu0
  %v3057 = vpop.trf.xlu0
  %v3058 = vpop.trf.xlu0
  %v3059 = vpop.trf.xlu0
  %v3060 = vpop.trf.xlu0
  %3061 = vxpose.xlu0.b32.start [1/16] %v2866, 128
  %3062 = vxpose.xlu0.b32.cont [2/16] 0.0, 128
  %3063 = vxpose.xlu0.b32.cont [3/16] 0.0, 128
  %3064 = vxpose.xlu0.b32.cont [4/16] 0.0, 128
  %3065 = vxpose.xlu0.b32.cont [5/16] 0.0, 128
  %3066 = vxpose.xlu0.b32.cont [6/16] 0.0, 128
  %3067 = vxpose.xlu0.b32.cont [7/16] 0.0, 128
  %3068 = vxpose.xlu0.b32.cont [8/16] 0.0, 128
  %3069 = vxpose.xlu0.b32.cont [9/16] 0.0, 128
  %3070 = vxpose.xlu0.b32.cont [10/16] 0.0, 128
  %3071 = vxpose.xlu0.b32.cont [11/16] 0.0, 128
  %3072 = vxpose.xlu0.b32.cont [12/16] 0.0, 128
  %3073 = vxpose.xlu0.b32.cont [13/16] 0.0, 128
  %3074 = vxpose.xlu0.b32.cont [14/16] 0.0, 128
  %3075 = vxpose.xlu0.b32.cont [15/16] 0.0, 128
  %3076 = vxpose.xlu0.b32.end [16/16] 0.0, 128
  %v3077 = vpop.trf.xlu0
  %v3078 = vpop.trf.xlu0
  %v3079 = vpop.trf.xlu0
  %v3080 = vpop.trf.xlu0
  %v3081 = vpop.trf.xlu0
  %v3082 = vpop.trf.xlu0
  %v3083 = vpop.trf.xlu0
  %v3084 = vpop.trf.xlu0
  %v3085 = vpop.trf.xlu0
  %v3086 = vpop.trf.xlu0
  %v3087 = vpop.trf.xlu0
  %v3088 = vpop.trf.xlu0
  %v3089 = vpop.trf.xlu0
  %v3090 = vpop.trf.xlu0
  %v3091 = vpop.trf.xlu0
  %v3092 = vpop.trf.xlu0
  %3093 = vxpose.xlu0.b32.start [1/16] %v2957, 128
  %3094 = vxpose.xlu0.b32.cont [2/16] 0.0, 128
  %3095 = vxpose.xlu0.b32.cont [3/16] 0.0, 128
  %3096 = vxpose.xlu0.b32.cont [4/16] 0.0, 128
  %3097 = vxpose.xlu0.b32.cont [5/16] 0.0, 128
  %3098 = vxpose.xlu0.b32.cont [6/16] 0.0, 128
  %3099 = vxpose.xlu0.b32.cont [7/16] 0.0, 128
  %3100 = vxpose.xlu0.b32.cont [8/16] 0.0, 128
  %3101 = vxpose.xlu0.b32.cont [9/16] 0.0, 128
  %3102 = vxpose.xlu0.b32.cont [10/16] 0.0, 128
  %3103 = vxpose.xlu0.b32.cont [11/16] 0.0, 128
  %3104 = vxpose.xlu0.b32.cont [12/16] 0.0, 128
  %3105 = vxpose.xlu0.b32.cont [13/16] 0.0, 128
  %3106 = vxpose.xlu0.b32.cont [14/16] 0.0, 128
  %3107 = vxpose.xlu0.b32.cont [15/16] 0.0, 128
  %3108 = vxpose.xlu0.b32.end [16/16] 0.0, 128
  %v3109 = vpop.trf.xlu0
  %v3110 = vpop.trf.xlu0
  %v3111 = vpop.trf.xlu0
  %v3112 = vpop.trf.xlu0
  %v3113 = vpop.trf.xlu0
  %v3114 = vpop.trf.xlu0
  %v3115 = vpop.trf.xlu0
  %v3116 = vpop.trf.xlu0
  %v3117 = vpop.trf.xlu0
  %v3118 = vpop.trf.xlu0
  %v3119 = vpop.trf.xlu0
  %v3120 = vpop.trf.xlu0
  %v3121 = vpop.trf.xlu0
  %v3122 = vpop.trf.xlu0
  %v3123 = vpop.trf.xlu0
  %v3124 = vpop.trf.xlu0
  %3125 = vxpose.xlu0.b32.start [1/16] %v2962, 128
  %3126 = vxpose.xlu0.b32.cont [2/16] 0.0, 128
  %3127 = vxpose.xlu0.b32.cont [3/16] 0.0, 128
  %3128 = vxpose.xlu0.b32.cont [4/16] 0.0, 128
  %3129 = vxpose.xlu0.b32.cont [5/16] 0.0, 128
  %3130 = vxpose.xlu0.b32.cont [6/16] 0.0, 128
  %3131 = vxpose.xlu0.b32.cont [7/16] 0.0, 128
  %3132 = vxpose.xlu0.b32.cont [8/16] 0.0, 128
  %3133 = vxpose.xlu0.b32.cont [9/16] 0.0, 128
  %3134 = vxpose.xlu0.b32.cont [10/16] 0.0, 128
  %3135 = vxpose.xlu0.b32.cont [11/16] 0.0, 128
  %3136 = vxpose.xlu0.b32.cont [12/16] 0.0, 128
  %3137 = vxpose.xlu0.b32.cont [13/16] 0.0, 128
  %3138 = vxpose.xlu0.b32.cont [14/16] 0.0, 128
  %3139 = vxpose.xlu0.b32.cont [15/16] 0.0, 128
  %3140 = vxpose.xlu0.b32.end [16/16] 0.0, 128
  %v3141 = vpop.trf.xlu0
  %v3142 = vpop.trf.xlu0
  %v3143 = vpop.trf.xlu0
  %v3144 = vpop.trf.xlu0
  %v3145 = vpop.trf.xlu0
  %v3146 = vpop.trf.xlu0
  %v3147 = vpop.trf.xlu0
  %v3148 = vpop.trf.xlu0
  %v3149 = vpop.trf.xlu0
  %v3150 = vpop.trf.xlu0
  %v3151 = vpop.trf.xlu0
  %v3152 = vpop.trf.xlu0
  %v3153 = vpop.trf.xlu0
  %v3154 = vpop.trf.xlu0
  %v3155 = vpop.trf.xlu0
  %v3156 = vpop.trf.xlu0
  %3157 = vxpose.xlu0.b32.start [1/16] %v2981, 128
  %3158 = vxpose.xlu0.b32.cont [2/16] 0.0, 128
  %3159 = vxpose.xlu0.b32.cont [3/16] 0.0, 128
  %3160 = vxpose.xlu0.b32.cont [4/16] 0.0, 128
  %3161 = vxpose.xlu0.b32.cont [5/16] 0.0, 128
  %3162 = vxpose.xlu0.b32.cont [6/16] 0.0, 128
  %3163 = vxpose.xlu0.b32.cont [7/16] 0.0, 128
  %3164 = vxpose.xlu0.b32.cont [8/16] 0.0, 128
  %3165 = vxpose.xlu0.b32.cont [9/16] 0.0, 128
  %3166 = vxpose.xlu0.b32.cont [10/16] 0.0, 128
  %3167 = vxpose.xlu0.b32.cont [11/16] 0.0, 128
  %3168 = vxpose.xlu0.b32.cont [12/16] 0.0, 128
  %3169 = vxpose.xlu0.b32.cont [13/16] 0.0, 128
  %3170 = vxpose.xlu0.b32.cont [14/16] 0.0, 128
  %3171 = vxpose.xlu0.b32.cont [15/16] 0.0, 128
  %3172 = vxpose.xlu0.b32.end [16/16] 0.0, 128
  %v3173 = vpop.trf.xlu0
  %v3174 = vpop.trf.xlu0
  %v3175 = vpop.trf.xlu0
  %v3176 = vpop.trf.xlu0
  %v3177 = vpop.trf.xlu0
  %v3178 = vpop.trf.xlu0
  %v3179 = vpop.trf.xlu0
  %v3180 = vpop.trf.xlu0
  %v3181 = vpop.trf.xlu0
  %v3182 = vpop.trf.xlu0
  %v3183 = vpop.trf.xlu0
  %v3184 = vpop.trf.xlu0
  %v3185 = vpop.trf.xlu0
  %v3186 = vpop.trf.xlu0
  %v3187 = vpop.trf.xlu0
  %v3188 = vpop.trf.xlu0
  %3189 = vxpose.xlu0.b32.start [1/16] %v3013, 128
  %3190 = vxpose.xlu0.b32.cont [2/16] 0.0, 128
  %3191 = vxpose.xlu0.b32.cont [3/16] 0.0, 128
  %3192 = vxpose.xlu0.b32.cont [4/16] 0.0, 128
  %3193 = vxpose.xlu0.b32.cont [5/16] 0.0, 128
  %3194 = vxpose.xlu0.b32.cont [6/16] 0.0, 128
  %3195 = vxpose.xlu0.b32.cont [7/16] 0.0, 128
  %3196 = vxpose.xlu0.b32.cont [8/16] 0.0, 128
  %3197 = vxpose.xlu0.b32.cont [9/16] 0.0, 128
  %3198 = vxpose.xlu0.b32.cont [10/16] 0.0, 128
  %3199 = vxpose.xlu0.b32.cont [11/16] 0.0, 128
  %3200 = vxpose.xlu0.b32.cont [12/16] 0.0, 128
  %3201 = vxpose.xlu0.b32.cont [13/16] 0.0, 128
  %3202 = vxpose.xlu0.b32.cont [14/16] 0.0, 128
  %3203 = vxpose.xlu0.b32.cont [15/16] 0.0, 128
  %3204 = vxpose.xlu0.b32.end [16/16] 0.0, 128
  %v3205 = vpop.trf.xlu0
  %v3206 = vpop.trf.xlu0
  %v3207 = vpop.trf.xlu0
  %v3208 = vpop.trf.xlu0
  %v3209 = vpop.trf.xlu0
  %v3210 = vpop.trf.xlu0
  %v3211 = vpop.trf.xlu0
  %v3212 = vpop.trf.xlu0
  %v3213 = vpop.trf.xlu0
  %v3214 = vpop.trf.xlu0
  %v3215 = vpop.trf.xlu0
  %v3216 = vpop.trf.xlu0
  %v3217 = vpop.trf.xlu0
  %v3218 = vpop.trf.xlu0
  %v3219 = vpop.trf.xlu0
  %v3220 = vpop.trf.xlu0
  %3221 = vxpose.xlu0.b32.start [1/16] %v2982, 128
  %3222 = vxpose.xlu0.b32.cont [2/16] 0.0, 128
  %3223 = vxpose.xlu0.b32.cont [3/16] 0.0, 128
  %3224 = vxpose.xlu0.b32.cont [4/16] 0.0, 128
  %3225 = vxpose.xlu0.b32.cont [5/16] 0.0, 128
  %3226 = vxpose.xlu0.b32.cont [6/16] 0.0, 128
  %3227 = vxpose.xlu0.b32.cont [7/16] 0.0, 128
  %3228 = vxpose.xlu0.b32.cont [8/16] 0.0, 128
  %3229 = vxpose.xlu0.b32.cont [9/16] 0.0, 128
  %3230 = vxpose.xlu0.b32.cont [10/16] 0.0, 128
  %3231 = vxpose.xlu0.b32.cont [11/16] 0.0, 128
  %3232 = vxpose.xlu0.b32.cont [12/16] 0.0, 128
  %3233 = vxpose.xlu0.b32.cont [13/16] 0.0, 128
  %3234 = vxpose.xlu0.b32.cont [14/16] 0.0, 128
  %3235 = vxpose.xlu0.b32.cont [15/16] 0.0, 128
  %3236 = vxpose.xlu0.b32.end [16/16] 0.0, 128
  %v3237 = vpop.trf.xlu0
  %v3238 = vpop.trf.xlu0
  %v3239 = vpop.trf.xlu0
  %v3240 = vpop.trf.xlu0
  %v3241 = vpop.trf.xlu0
  %v3242 = vpop.trf.xlu0
  %v3243 = vpop.trf.xlu0
  %v3244 = vpop.trf.xlu0
  %v3245 = vpop.trf.xlu0
  %v3246 = vpop.trf.xlu0
  %v3247 = vpop.trf.xlu0
  %v3248 = vpop.trf.xlu0
  %v3249 = vpop.trf.xlu0
  %v3250 = vpop.trf.xlu0
  %v3251 = vpop.trf.xlu0
  %v3252 = vpop.trf.xlu0
  %3253 = vxpose.xlu0.b32.start [1/16] %v3014, 128
  %3254 = vxpose.xlu0.b32.cont [2/16] 0.0, 128
  %3255 = vxpose.xlu0.b32.cont [3/16] 0.0, 128
  %3256 = vxpose.xlu0.b32.cont [4/16] 0.0, 128
  %3257 = vxpose.xlu0.b32.cont [5/16] 0.0, 128
  %3258 = vxpose.xlu0.b32.cont [6/16] 0.0, 128
  %3259 = vxpose.xlu0.b32.cont [7/16] 0.0, 128
  %3260 = vxpose.xlu0.b32.cont [8/16] 0.0, 128
  %3261 = vxpose.xlu0.b32.cont [9/16] 0.0, 128
  %3262 = vxpose.xlu0.b32.cont [10/16] 0.0, 128
  %3263 = vxpose.xlu0.b32.cont [11/16] 0.0, 128
  %3264 = vxpose.xlu0.b32.cont [12/16] 0.0, 128
  %3265 = vxpose.xlu0.b32.cont [13/16] 0.0, 128
  %3266 = vxpose.xlu0.b32.cont [14/16] 0.0, 128
  %3267 = vxpose.xlu0.b32.cont [15/16] 0.0, 128
  %3268 = vxpose.xlu0.b32.end [16/16] 0.0, 128
  %v3269 = vpop.trf.xlu0
  %v3270 = vpop.trf.xlu0
  %v3271 = vpop.trf.xlu0
  %v3272 = vpop.trf.xlu0
  %v3273 = vpop.trf.xlu0
  %v3274 = vpop.trf.xlu0
  %v3275 = vpop.trf.xlu0
  %v3276 = vpop.trf.xlu0
  %v3277 = vpop.trf.xlu0
  %v3278 = vpop.trf.xlu0
  %v3279 = vpop.trf.xlu0
  %v3280 = vpop.trf.xlu0
  %v3281 = vpop.trf.xlu0
  %v3282 = vpop.trf.xlu0
  %v3283 = vpop.trf.xlu0
  %v3284 = vpop.trf.xlu0
  %3285 = vxpose.xlu0.b32.start [1/16] %v2983, 128
  %3286 = vxpose.xlu0.b32.cont [2/16] 0.0, 128
  %3287 = vxpose.xlu0.b32.cont [3/16] 0.0, 128
  %3288 = vxpose.xlu0.b32.cont [4/16] 0.0, 128
  %3289 = vxpose.xlu0.b32.cont [5/16] 0.0, 128
  %3290 = vxpose.xlu0.b32.cont [6/16] 0.0, 128
  %3291 = vxpose.xlu0.b32.cont [7/16] 0.0, 128
  %3292 = vxpose.xlu0.b32.cont [8/16] 0.0, 128
  %3293 = vxpose.xlu0.b32.cont [9/16] 0.0, 128
  %3294 = vxpose.xlu0.b32.cont [10/16] 0.0, 128
  %3295 = vxpose.xlu0.b32.cont [11/16] 0.0, 128
  %3296 = vxpose.xlu0.b32.cont [12/16] 0.0, 128
  %3297 = vxpose.xlu0.b32.cont [13/16] 0.0, 128
  %3298 = vxpose.xlu0.b32.cont [14/16] 0.0, 128
  %3299 = vxpose.xlu0.b32.cont [15/16] 0.0, 128
  %3300 = vxpose.xlu0.b32.end [16/16] 0.0, 128
  %v3301 = vpop.trf.xlu0
  %v3302 = vpop.trf.xlu0
  %v3303 = vpop.trf.xlu0
  %v3304 = vpop.trf.xlu0
  %v3305 = vpop.trf.xlu0
  %v3306 = vpop.trf.xlu0
  %v3307 = vpop.trf.xlu0
  %v3308 = vpop.trf.xlu0
  %v3309 = vpop.trf.xlu0
  %v3310 = vpop.trf.xlu0
  %v3311 = vpop.trf.xlu0
  %v3312 = vpop.trf.xlu0
  %v3313 = vpop.trf.xlu0
  %v3314 = vpop.trf.xlu0
  %v3315 = vpop.trf.xlu0
  %v3316 = vpop.trf.xlu0
  %3317 = vxpose.xlu0.b32.start [1/16] %v3015, 128
  %3318 = vxpose.xlu0.b32.cont [2/16] 0.0, 128
  %3319 = vxpose.xlu0.b32.cont [3/16] 0.0, 128
  %3320 = vxpose.xlu0.b32.cont [4/16] 0.0, 128
  %3321 = vxpose.xlu0.b32.cont [5/16] 0.0, 128
  %3322 = vxpose.xlu0.b32.cont [6/16] 0.0, 128
  %3323 = vxpose.xlu0.b32.cont [7/16] 0.0, 128
  %3324 = vxpose.xlu0.b32.cont [8/16] 0.0, 128
  %3325 = vxpose.xlu0.b32.cont [9/16] 0.0, 128
  %3326 = vxpose.xlu0.b32.cont [10/16] 0.0, 128
  %3327 = vxpose.xlu0.b32.cont [11/16] 0.0, 128
  %3328 = vxpose.xlu0.b32.cont [12/16] 0.0, 128
  %3329 = vxpose.xlu0.b32.cont [13/16] 0.0, 128
  %3330 = vxpose.xlu0.b32.cont [14/16] 0.0, 128
  %3331 = vxpose.xlu0.b32.cont [15/16] 0.0, 128
  %3332 = vxpose.xlu0.b32.end [16/16] 0.0, 128
  %v3333 = vpop.trf.xlu0
  %v3334 = vpop.trf.xlu0
  %v3335 = vpop.trf.xlu0
  %v3336 = vpop.trf.xlu0
  %v3337 = vpop.trf.xlu0
  %v3338 = vpop.trf.xlu0
  %v3339 = vpop.trf.xlu0
  %v3340 = vpop.trf.xlu0
  %v3341 = vpop.trf.xlu0
  %v3342 = vpop.trf.xlu0
  %v3343 = vpop.trf.xlu0
  %v3344 = vpop.trf.xlu0
  %v3345 = vpop.trf.xlu0
  %v3346 = vpop.trf.xlu0
  %v3347 = vpop.trf.xlu0
  %v3348 = vpop.trf.xlu0
  %3349 = vxpose.xlu0.b32.start [1/16] %v2984, 128
  %3350 = vxpose.xlu0.b32.cont [2/16] 0.0, 128
  %3351 = vxpose.xlu0.b32.cont [3/16] 0.0, 128
  %3352 = vxpose.xlu0.b32.cont [4/16] 0.0, 128
  %3353 = vxpose.xlu0.b32.cont [5/16] 0.0, 128
  %3354 = vxpose.xlu0.b32.cont [6/16] 0.0, 128
  %3355 = vxpose.xlu0.b32.cont [7/16] 0.0, 128
  %3356 = vxpose.xlu0.b32.cont [8/16] 0.0, 128
  %3357 = vxpose.xlu0.b32.cont [9/16] 0.0, 128
  %3358 = vxpose.xlu0.b32.cont [10/16] 0.0, 128
  %3359 = vxpose.xlu0.b32.cont [11/16] 0.0, 128
  %3360 = vxpose.xlu0.b32.cont [12/16] 0.0, 128
  %3361 = vxpose.xlu0.b32.cont [13/16] 0.0, 128
  %3362 = vxpose.xlu0.b32.cont [14/16] 0.0, 128
  %3363 = vxpose.xlu0.b32.cont [15/16] 0.0, 128
  %3364 = vxpose.xlu0.b32.end [16/16] 0.0, 128
  %v3365 = vpop.trf.xlu0
  %v3366 = vpop.trf.xlu0
  %v3367 = vpop.trf.xlu0
  %v3368 = vpop.trf.xlu0
  %v3369 = vpop.trf.xlu0
  %v3370 = vpop.trf.xlu0
  %v3371 = vpop.trf.xlu0
  %v3372 = vpop.trf.xlu0
  %v3373 = vpop.trf.xlu0
  %v3374 = vpop.trf.xlu0
  %v3375 = vpop.trf.xlu0
  %v3376 = vpop.trf.xlu0
  %v3377 = vpop.trf.xlu0
  %v3378 = vpop.trf.xlu0
  %v3379 = vpop.trf.xlu0
  %v3380 = vpop.trf.xlu0
  %3381 = vxpose.xlu0.b32.start [1/16] %v3016, 128
  %3382 = vxpose.xlu0.b32.cont [2/16] 0.0, 128
  %3383 = vxpose.xlu0.b32.cont [3/16] 0.0, 128
  %3384 = vxpose.xlu0.b32.cont [4/16] 0.0, 128
  %3385 = vxpose.xlu0.b32.cont [5/16] 0.0, 128
  %3386 = vxpose.xlu0.b32.cont [6/16] 0.0, 128
  %3387 = vxpose.xlu0.b32.cont [7/16] 0.0, 128
  %3388 = vxpose.xlu0.b32.cont [8/16] 0.0, 128
  %3389 = vxpose.xlu0.b32.cont [9/16] 0.0, 128
  %3390 = vxpose.xlu0.b32.cont [10/16] 0.0, 128
  %3391 = vxpose.xlu0.b32.cont [11/16] 0.0, 128
  %3392 = vxpose.xlu0.b32.cont [12/16] 0.0, 128
  %3393 = vxpose.xlu0.b32.cont [13/16] 0.0, 128
  %3394 = vxpose.xlu0.b32.cont [14/16] 0.0, 128
  %3395 = vxpose.xlu0.b32.cont [15/16] 0.0, 128
  %3396 = vxpose.xlu0.b32.end [16/16] 0.0, 128
  %v3397 = vpop.trf.xlu0
  %v3398 = vpop.trf.xlu0
  %v3399 = vpop.trf.xlu0
  %v3400 = vpop.trf.xlu0
  %v3401 = vpop.trf.xlu0
  %v3402 = vpop.trf.xlu0
  %v3403 = vpop.trf.xlu0
  %v3404 = vpop.trf.xlu0
  %v3405 = vpop.trf.xlu0
  %v3406 = vpop.trf.xlu0
  %v3407 = vpop.trf.xlu0
  %v3408 = vpop.trf.xlu0
  %v3409 = vpop.trf.xlu0
  %v3410 = vpop.trf.xlu0
  %v3411 = vpop.trf.xlu0
  %v3412 = vpop.trf.xlu0
  %v3414 = vsel %vm904, %v3173, 0
  %3416 = vmatprep.subr.mxu0 0.0
  %3417 = vmatpush1.msra.mxu0 %v3045
  %3418 = vmatprep.subr.mxu0 0.0
  %3419 = vmatpush1.msra.mxu0 0.0
  %3420 = vmatprep.subr.mxu0 0.0
  %3421 = vmatpush1.msra.mxu0 0.0
  %3422 = vmatprep.subr.mxu0 0.0
  %3423 = vmatpush1.msra.mxu0 0.0
  %3424 = vmatprep.subr.mxu0 0.0
  %3425 = vmatpush1.msra.mxu0 0.0
  %3426 = vmatprep.subr.mxu0 0.0
  %3427 = vmatpush1.msra.mxu0 0.0
  %3428 = vmatprep.subr.mxu0 0.0
  %3429 = vmatpush1.msra.mxu0 0.0
  %3430 = vmatprep.subr.mxu0 0.0
  %3431 = vmatpush1.msra.mxu0 0.0
  %3432 = vmatprep.subr.mxu0 0.0
  %3433 = vmatpush1.msra.mxu0 0.0
  %3434 = vmatprep.subr.mxu0 0.0
  %3435 = vmatpush1.msra.mxu0 0.0
  %3436 = vmatprep.subr.mxu0 0.0
  %3437 = vmatpush1.msra.mxu0 0.0
  %3438 = vmatprep.subr.mxu0 0.0
  %3439 = vmatpush1.msra.mxu0 0.0
  %3440 = vmatprep.subr.mxu0 0.0
  %3441 = vmatpush1.msra.mxu0 0.0
  %3442 = vmatprep.subr.mxu0 0.0
  %3443 = vmatpush1.msra.mxu0 0.0
  %3444 = vmatprep.subr.mxu0 0.0
  %3445 = vmatpush1.msra.mxu0 0.0
  %3446 = vmatprep.subr.mxu0 0.0
  %3447 = vmatpush1.msra.mxu0 0.0
  %3448 = vmatprep.subr.mxu0 0.0
  %3449 = vmatpush1.msra.mxu0 0.0
  %3450 = vmatprep.subr.mxu0 0.0
  %3451 = vmatpush1.msra.mxu0 0.0
  %3452 = vmatprep.subr.mxu0 0.0
  %3453 = vmatpush1.msra.mxu0 0.0
  %3454 = vmatprep.subr.mxu0 0.0
  %3455 = vmatpush1.msra.mxu0 0.0
  %3456 = vmatprep.subr.mxu0 0.0
  %3457 = vmatpush1.msra.mxu0 0.0
  %3458 = vmatprep.subr.mxu0 0.0
  %3459 = vmatpush1.msra.mxu0 0.0
  %3460 = vmatprep.subr.mxu0 0.0
  %3461 = vmatpush1.msra.mxu0 0.0
  %3462 = vmatprep.subr.mxu0 0.0
  %3463 = vmatpush1.msra.mxu0 0.0
  %3464 = vmatprep.subr.mxu0 0.0
  %3465 = vmatpush1.msra.mxu0 0.0
  %3466 = vmatprep.subr.mxu0 0.0
  %3467 = vmatpush1.msra.mxu0 0.0
  %3468 = vmatprep.subr.mxu0 0.0
  %3469 = vmatpush1.msra.mxu0 0.0
  %3470 = vmatprep.subr.mxu0 0.0
  %3471 = vmatpush1.msra.mxu0 0.0
  %3472 = vmatprep.subr.mxu0 0.0
  %3473 = vmatpush1.msra.mxu0 0.0
  %3474 = vmatprep.subr.mxu0 0.0
  %3475 = vmatpush1.msra.mxu0 0.0
  %3476 = vmatprep.subr.mxu0 0.0
  %3477 = vmatpush1.msra.mxu0 0.0
  %3478 = vmatprep.subr.mxu0 0.0
  %3479 = vmatpush1.msra.mxu0 0.0
  %3480 = vmatprep.mubr.f32.mxu0 0.0
  %3481 = vmatmul.mubr.f32.gmra.mrb[0].mxu0 %v3414
  %v3482 = vpop.f32.mrb[0].mxu0
  %v3483 = vadd.f32 0.0, %v3482
  %v3484 = vpop.f32.mrb[0].mxu0
  %3485 = vdwg.mxu0
  %v3487 = vsel %vm904, %v3205, 0
  %3489 = vmatprep.subr.mxu0 0.0
  %3490 = vmatpush1.msra.mxu0 %v3077
  %3491 = vmatprep.subr.mxu0 0.0
  %3492 = vmatpush1.msra.mxu0 0.0
  %3493 = vmatprep.subr.mxu0 0.0
  %3494 = vmatpush1.msra.mxu0 0.0
  %3495 = vmatprep.subr.mxu0 0.0
  %3496 = vmatpush1.msra.mxu0 0.0
  %3497 = vmatprep.subr.mxu0 0.0
  %3498 = vmatpush1.msra.mxu0 0.0
  %3499 = vmatprep.subr.mxu0 0.0
  %3500 = vmatpush1.msra.mxu0 0.0
  %3501 = vmatprep.subr.mxu0 0.0
  %3502 = vmatpush1.msra.mxu0 0.0
  %3503 = vmatprep.subr.mxu0 0.0
  %3504 = vmatpush1.msra.mxu0 0.0
  %3505 = vmatprep.subr.mxu0 0.0
  %3506 = vmatpush1.msra.mxu0 0.0
  %3507 = vmatprep.subr.mxu0 0.0
  %3508 = vmatpush1.msra.mxu0 0.0
  %3509 = vmatprep.subr.mxu0 0.0
  %3510 = vmatpush1.msra.mxu0 0.0
  %3511 = vmatprep.subr.mxu0 0.0
  %3512 = vmatpush1.msra.mxu0 0.0
  %3513 = vmatprep.subr.mxu0 0.0
  %3514 = vmatpush1.msra.mxu0 0.0
  %3515 = vmatprep.subr.mxu0 0.0
  %3516 = vmatpush1.msra.mxu0 0.0
  %3517 = vmatprep.subr.mxu0 0.0
  %3518 = vmatpush1.msra.mxu0 0.0
  %3519 = vmatprep.subr.mxu0 0.0
  %3520 = vmatpush1.msra.mxu0 0.0
  %3521 = vmatprep.subr.mxu0 0.0
  %3522 = vmatpush1.msra.mxu0 0.0
  %3523 = vmatprep.subr.mxu0 0.0
  %3524 = vmatpush1.msra.mxu0 0.0
  %3525 = vmatprep.subr.mxu0 0.0
  %3526 = vmatpush1.msra.mxu0 0.0
  %3527 = vmatprep.subr.mxu0 0.0
  %3528 = vmatpush1.msra.mxu0 0.0
  %3529 = vmatprep.subr.mxu0 0.0
  %3530 = vmatpush1.msra.mxu0 0.0
  %3531 = vmatprep.subr.mxu0 0.0
  %3532 = vmatpush1.msra.mxu0 0.0
  %3533 = vmatprep.subr.mxu0 0.0
  %3534 = vmatpush1.msra.mxu0 0.0
  %3535 = vmatprep.subr.mxu0 0.0
  %3536 = vmatpush1.msra.mxu0 0.0
  %3537 = vmatprep.subr.mxu0 0.0
  %3538 = vmatpush1.msra.mxu0 0.0
  %3539 = vmatprep.subr.mxu0 0.0
  %3540 = vmatpush1.msra.mxu0 0.0
  %3541 = vmatprep.subr.mxu0 0.0
  %3542 = vmatpush1.msra.mxu0 0.0
  %3543 = vmatprep.subr.mxu0 0.0
  %3544 = vmatpush1.msra.mxu0 0.0
  %3545 = vmatprep.subr.mxu0 0.0
  %3546 = vmatpush1.msra.mxu0 0.0
  %3547 = vmatprep.subr.mxu0 0.0
  %3548 = vmatpush1.msra.mxu0 0.0
  %3549 = vmatprep.subr.mxu0 0.0
  %3550 = vmatpush1.msra.mxu0 0.0
  %3551 = vmatprep.subr.mxu0 0.0
  %3552 = vmatpush1.msra.mxu0 0.0
  %3553 = vmatprep.mubr.f32.mxu0 0.0
  %3554 = vmatmul.mubr.f32.gmra.mrb[0].mxu0 %v3487
  %v3555 = vpop.f32.mrb[0].mxu0
  %v3556 = vadd.f32 0.0, %v3555
  %v3557 = vpop.f32.mrb[0].mxu0
  %3558 = vdwg.mxu0
  %v3560 = vsel %vm904, %v3237, 0
  %3562 = vmatprep.subr.mxu0 0.0
  %3563 = vmatpush1.msra.mxu0 %v3046
  %3564 = vmatprep.subr.mxu0 0.0
  %3565 = vmatpush1.msra.mxu0 0.0
  %3566 = vmatprep.subr.mxu0 0.0
  %3567 = vmatpush1.msra.mxu0 0.0
  %3568 = vmatprep.subr.mxu0 0.0
  %3569 = vmatpush1.msra.mxu0 0.0
  %3570 = vmatprep.subr.mxu0 0.0
  %3571 = vmatpush1.msra.mxu0 0.0
  %3572 = vmatprep.subr.mxu0 0.0
  %3573 = vmatpush1.msra.mxu0 0.0
  %3574 = vmatprep.subr.mxu0 0.0
  %3575 = vmatpush1.msra.mxu0 0.0
  %3576 = vmatprep.subr.mxu0 0.0
  %3577 = vmatpush1.msra.mxu0 0.0
  %3578 = vmatprep.subr.mxu0 0.0
  %3579 = vmatpush1.msra.mxu0 0.0
  %3580 = vmatprep.subr.mxu0 0.0
  %3581 = vmatpush1.msra.mxu0 0.0
  %3582 = vmatprep.subr.mxu0 0.0
  %3583 = vmatpush1.msra.mxu0 0.0
  %3584 = vmatprep.subr.mxu0 0.0
  %3585 = vmatpush1.msra.mxu0 0.0
  %3586 = vmatprep.subr.mxu0 0.0
  %3587 = vmatpush1.msra.mxu0 0.0
  %3588 = vmatprep.subr.mxu0 0.0
  %3589 = vmatpush1.msra.mxu0 0.0
  %3590 = vmatprep.subr.mxu0 0.0
  %3591 = vmatpush1.msra.mxu0 0.0
  %3592 = vmatprep.subr.mxu0 0.0
  %3593 = vmatpush1.msra.mxu0 0.0
  %3594 = vmatprep.subr.mxu0 0.0
  %3595 = vmatpush1.msra.mxu0 0.0
  %3596 = vmatprep.subr.mxu0 0.0
  %3597 = vmatpush1.msra.mxu0 0.0
  %3598 = vmatprep.subr.mxu0 0.0
  %3599 = vmatpush1.msra.mxu0 0.0
  %3600 = vmatprep.subr.mxu0 0.0
  %3601 = vmatpush1.msra.mxu0 0.0
  %3602 = vmatprep.subr.mxu0 0.0
  %3603 = vmatpush1.msra.mxu0 0.0
  %3604 = vmatprep.subr.mxu0 0.0
  %3605 = vmatpush1.msra.mxu0 0.0
  %3606 = vmatprep.subr.mxu0 0.0
  %3607 = vmatpush1.msra.mxu0 0.0
  %3608 = vmatprep.subr.mxu0 0.0
  %3609 = vmatpush1.msra.mxu0 0.0
  %3610 = vmatprep.subr.mxu0 0.0
  %3611 = vmatpush1.msra.mxu0 0.0
  %3612 = vmatprep.subr.mxu0 0.0
  %3613 = vmatpush1.msra.mxu0 0.0
  %3614 = vmatprep.subr.mxu0 0.0
  %3615 = vmatpush1.msra.mxu0 0.0
  %3616 = vmatprep.subr.mxu0 0.0
  %3617 = vmatpush1.msra.mxu0 0.0
  %3618 = vmatprep.subr.mxu0 0.0
  %3619 = vmatpush1.msra.mxu0 0.0
  %3620 = vmatprep.subr.mxu0 0.0
  %3621 = vmatpush1.msra.mxu0 0.0
  %3622 = vmatprep.subr.mxu0 0.0
  %3623 = vmatpush1.msra.mxu0 0.0
  %3624 = vmatprep.subr.mxu0 0.0
  %3625 = vmatpush1.msra.mxu0 0.0
  %3626 = vmatprep.mubr.f32.mxu0 0.0
  %3627 = vmatmul.mubr.f32.gmra.mrb[0].mxu0 %v3560
  %v3628 = vpop.f32.mrb[0].mxu0
  %v3629 = vadd.f32 0.0, %v3628
  %v3630 = vpop.f32.mrb[0].mxu0
  %3631 = vdwg.mxu0
  %v3633 = vsel %vm904, %v3269, 0
  %3635 = vmatprep.subr.mxu0 0.0
  %3636 = vmatpush1.msra.mxu0 %v3078
  %3637 = vmatprep.subr.mxu0 0.0
  %3638 = vmatpush1.msra.mxu0 0.0
  %3639 = vmatprep.subr.mxu0 0.0
  %3640 = vmatpush1.msra.mxu0 0.0
  %3641 = vmatprep.subr.mxu0 0.0
  %3642 = vmatpush1.msra.mxu0 0.0
  %3643 = vmatprep.subr.mxu0 0.0
  %3644 = vmatpush1.msra.mxu0 0.0
  %3645 = vmatprep.subr.mxu0 0.0
  %3646 = vmatpush1.msra.mxu0 0.0
  %3647 = vmatprep.subr.mxu0 0.0
  %3648 = vmatpush1.msra.mxu0 0.0
  %3649 = vmatprep.subr.mxu0 0.0
  %3650 = vmatpush1.msra.mxu0 0.0
  %3651 = vmatprep.subr.mxu0 0.0
  %3652 = vmatpush1.msra.mxu0 0.0
  %3653 = vmatprep.subr.mxu0 0.0
  %3654 = vmatpush1.msra.mxu0 0.0
  %3655 = vmatprep.subr.mxu0 0.0
  %3656 = vmatpush1.msra.mxu0 0.0
  %3657 = vmatprep.subr.mxu0 0.0
  %3658 = vmatpush1.msra.mxu0 0.0
  %3659 = vmatprep.subr.mxu0 0.0
  %3660 = vmatpush1.msra.mxu0 0.0
  %3661 = vmatprep.subr.mxu0 0.0
  %3662 = vmatpush1.msra.mxu0 0.0
  %3663 = vmatprep.subr.mxu0 0.0
  %3664 = vmatpush1.msra.mxu0 0.0
  %3665 = vmatprep.subr.mxu0 0.0
  %3666 = vmatpush1.msra.mxu0 0.0
  %3667 = vmatprep.subr.mxu0 0.0
  %3668 = vmatpush1.msra.mxu0 0.0
  %3669 = vmatprep.subr.mxu0 0.0
  %3670 = vmatpush1.msra.mxu0 0.0
  %3671 = vmatprep.subr.mxu0 0.0
  %3672 = vmatpush1.msra.mxu0 0.0
  %3673 = vmatprep.subr.mxu0 0.0
  %3674 = vmatpush1.msra.mxu0 0.0
  %3675 = vmatprep.subr.mxu0 0.0
  %3676 = vmatpush1.msra.mxu0 0.0
  %3677 = vmatprep.subr.mxu0 0.0
  %3678 = vmatpush1.msra.mxu0 0.0
  %3679 = vmatprep.subr.mxu0 0.0
  %3680 = vmatpush1.msra.mxu0 0.0
  %3681 = vmatprep.subr.mxu0 0.0
  %3682 = vmatpush1.msra.mxu0 0.0
  %3683 = vmatprep.subr.mxu0 0.0
  %3684 = vmatpush1.msra.mxu0 0.0
  %3685 = vmatprep.subr.mxu0 0.0
  %3686 = vmatpush1.msra.mxu0 0.0
  %3687 = vmatprep.subr.mxu0 0.0
  %3688 = vmatpush1.msra.mxu0 0.0
  %3689 = vmatprep.subr.mxu0 0.0
  %3690 = vmatpush1.msra.mxu0 0.0
  %3691 = vmatprep.subr.mxu0 0.0
  %3692 = vmatpush1.msra.mxu0 0.0
  %3693 = vmatprep.subr.mxu0 0.0
  %3694 = vmatpush1.msra.mxu0 0.0
  %3695 = vmatprep.subr.mxu0 0.0
  %3696 = vmatpush1.msra.mxu0 0.0
  %3697 = vmatprep.subr.mxu0 0.0
  %3698 = vmatpush1.msra.mxu0 0.0
  %3699 = vmatprep.mubr.f32.mxu0 0.0
  %3700 = vmatmul.mubr.f32.gmra.mrb[0].mxu0 %v3633
  %v3701 = vpop.f32.mrb[0].mxu0
  %v3702 = vadd.f32 0.0, %v3701
  %v3703 = vpop.f32.mrb[0].mxu0
  %3704 = vdwg.mxu0
  %v3706 = vsel %vm904, %v3301, 0
  %3708 = vmatprep.subr.mxu0 0.0
  %3709 = vmatpush1.msra.mxu0 %v3047
  %3710 = vmatprep.subr.mxu0 0.0
  %3711 = vmatpush1.msra.mxu0 0.0
  %3712 = vmatprep.subr.mxu0 0.0
  %3713 = vmatpush1.msra.mxu0 0.0
  %3714 = vmatprep.subr.mxu0 0.0
  %3715 = vmatpush1.msra.mxu0 0.0
  %3716 = vmatprep.subr.mxu0 0.0
  %3717 = vmatpush1.msra.mxu0 0.0
  %3718 = vmatprep.subr.mxu0 0.0
  %3719 = vmatpush1.msra.mxu0 0.0
  %3720 = vmatprep.subr.mxu0 0.0
  %3721 = vmatpush1.msra.mxu0 0.0
  %3722 = vmatprep.subr.mxu0 0.0
  %3723 = vmatpush1.msra.mxu0 0.0
  %3724 = vmatprep.subr.mxu0 0.0
  %3725 = vmatpush1.msra.mxu0 0.0
  %3726 = vmatprep.subr.mxu0 0.0
  %3727 = vmatpush1.msra.mxu0 0.0
  %3728 = vmatprep.subr.mxu0 0.0
  %3729 = vmatpush1.msra.mxu0 0.0
  %3730 = vmatprep.subr.mxu0 0.0
  %3731 = vmatpush1.msra.mxu0 0.0
  %3732 = vmatprep.subr.mxu0 0.0
  %3733 = vmatpush1.msra.mxu0 0.0
  %3734 = vmatprep.subr.mxu0 0.0
  %3735 = vmatpush1.msra.mxu0 0.0
  %3736 = vmatprep.subr.mxu0 0.0
  %3737 = vmatpush1.msra.mxu0 0.0
  %3738 = vmatprep.subr.mxu0 0.0
  %3739 = vmatpush1.msra.mxu0 0.0
  %3740 = vmatprep.subr.mxu0 0.0
  %3741 = vmatpush1.msra.mxu0 0.0
  %3742 = vmatprep.subr.mxu0 0.0
  %3743 = vmatpush1.msra.mxu0 0.0
  %3744 = vmatprep.subr.mxu0 0.0
  %3745 = vmatpush1.msra.mxu0 0.0
  %3746 = vmatprep.subr.mxu0 0.0
  %3747 = vmatpush1.msra.mxu0 0.0
  %3748 = vmatprep.subr.mxu0 0.0
  %3749 = vmatpush1.msra.mxu0 0.0
  %3750 = vmatprep.subr.mxu0 0.0
  %3751 = vmatpush1.msra.mxu0 0.0
  %3752 = vmatprep.subr.mxu0 0.0
  %3753 = vmatpush1.msra.mxu0 0.0
  %3754 = vmatprep.subr.mxu0 0.0
  %3755 = vmatpush1.msra.mxu0 0.0
  %3756 = vmatprep.subr.mxu0 0.0
  %3757 = vmatpush1.msra.mxu0 0.0
  %3758 = vmatprep.subr.mxu0 0.0
  %3759 = vmatpush1.msra.mxu0 0.0
  %3760 = vmatprep.subr.mxu0 0.0
  %3761 = vmatpush1.msra.mxu0 0.0
  %3762 = vmatprep.subr.mxu0 0.0
  %3763 = vmatpush1.msra.mxu0 0.0
  %3764 = vmatprep.subr.mxu0 0.0
  %3765 = vmatpush1.msra.mxu0 0.0
  %3766 = vmatprep.subr.mxu0 0.0
  %3767 = vmatpush1.msra.mxu0 0.0
  %3768 = vmatprep.subr.mxu0 0.0
  %3769 = vmatpush1.msra.mxu0 0.0
  %3770 = vmatprep.subr.mxu0 0.0
  %3771 = vmatpush1.msra.mxu0 0.0
  %3772 = vmatprep.mubr.f32.mxu0 0.0
  %3773 = vmatmul.mubr.f32.gmra.mrb[0].mxu0 %v3706
  %v3774 = vpop.f32.mrb[0].mxu0
  %v3775 = vadd.f32 0.0, %v3774
  %v3776 = vpop.f32.mrb[0].mxu0
  %3777 = vdwg.mxu0
  %v3779 = vsel %vm904, %v3333, 0
  %3781 = vmatprep.subr.mxu0 0.0
  %3782 = vmatpush1.msra.mxu0 %v3079
  %3783 = vmatprep.subr.mxu0 0.0
  %3784 = vmatpush1.msra.mxu0 0.0
  %3785 = vmatprep.subr.mxu0 0.0
  %3786 = vmatpush1.msra.mxu0 0.0
  %3787 = vmatprep.subr.mxu0 0.0
  %3788 = vmatpush1.msra.mxu0 0.0
  %3789 = vmatprep.subr.mxu0 0.0
  %3790 = vmatpush1.msra.mxu0 0.0
  %3791 = vmatprep.subr.mxu0 0.0
  %3792 = vmatpush1.msra.mxu0 0.0
  %3793 = vmatprep.subr.mxu0 0.0
  %3794 = vmatpush1.msra.mxu0 0.0
  %3795 = vmatprep.subr.mxu0 0.0
  %3796 = vmatpush1.msra.mxu0 0.0
  %3797 = vmatprep.subr.mxu0 0.0
  %3798 = vmatpush1.msra.mxu0 0.0
  %3799 = vmatprep.subr.mxu0 0.0
  %3800 = vmatpush1.msra.mxu0 0.0
  %3801 = vmatprep.subr.mxu0 0.0
  %3802 = vmatpush1.msra.mxu0 0.0
  %3803 = vmatprep.subr.mxu0 0.0
  %3804 = vmatpush1.msra.mxu0 0.0
  %3805 = vmatprep.subr.mxu0 0.0
  %3806 = vmatpush1.msra.mxu0 0.0
  %3807 = vmatprep.subr.mxu0 0.0
  %3808 = vmatpush1.msra.mxu0 0.0
  %3809 = vmatprep.subr.mxu0 0.0
  %3810 = vmatpush1.msra.mxu0 0.0
  %3811 = vmatprep.subr.mxu0 0.0
  %3812 = vmatpush1.msra.mxu0 0.0
  %3813 = vmatprep.subr.mxu0 0.0
  %3814 = vmatpush1.msra.mxu0 0.0
  %3815 = vmatprep.subr.mxu0 0.0
  %3816 = vmatpush1.msra.mxu0 0.0
  %3817 = vmatprep.subr.mxu0 0.0
  %3818 = vmatpush1.msra.mxu0 0.0
  %3819 = vmatprep.subr.mxu0 0.0
  %3820 = vmatpush1.msra.mxu0 0.0
  %3821 = vmatprep.subr.mxu0 0.0
  %3822 = vmatpush1.msra.mxu0 0.0
  %3823 = vmatprep.subr.mxu0 0.0
  %3824 = vmatpush1.msra.mxu0 0.0
  %3825 = vmatprep.subr.mxu0 0.0
  %3826 = vmatpush1.msra.mxu0 0.0
  %3827 = vmatprep.subr.mxu0 0.0
  %3828 = vmatpush1.msra.mxu0 0.0
  %3829 = vmatprep.subr.mxu0 0.0
  %3830 = vmatpush1.msra.mxu0 0.0
  %3831 = vmatprep.subr.mxu0 0.0
  %3832 = vmatpush1.msra.mxu0 0.0
  %3833 = vmatprep.subr.mxu0 0.0
  %3834 = vmatpush1.msra.mxu0 0.0
  %3835 = vmatprep.subr.mxu0 0.0
  %3836 = vmatpush1.msra.mxu0 0.0
  %3837 = vmatprep.subr.mxu0 0.0
  %3838 = vmatpush1.msra.mxu0 0.0
  %3839 = vmatprep.subr.mxu0 0.0
  %3840 = vmatpush1.msra.mxu0 0.0
  %3841 = vmatprep.subr.mxu0 0.0
  %3842 = vmatpush1.msra.mxu0 0.0
  %3843 = vmatprep.subr.mxu0 0.0
  %3844 = vmatpush1.msra.mxu0 0.0
  %3845 = vmatprep.mubr.f32.mxu0 0.0
  %3846 = vmatmul.mubr.f32.gmra.mrb[0].mxu0 %v3779
  %v3847 = vpop.f32.mrb[0].mxu0
  %v3848 = vadd.f32 0.0, %v3847
  %v3849 = vpop.f32.mrb[0].mxu0
  %3850 = vdwg.mxu0
  %v3852 = vsel %vm904, %v3365, 0
  %3854 = vmatprep.subr.mxu0 0.0
  %3855 = vmatpush1.msra.mxu0 %v3048
  %3856 = vmatprep.subr.mxu0 0.0
  %3857 = vmatpush1.msra.mxu0 0.0
  %3858 = vmatprep.subr.mxu0 0.0
  %3859 = vmatpush1.msra.mxu0 0.0
  %3860 = vmatprep.subr.mxu0 0.0
  %3861 = vmatpush1.msra.mxu0 0.0
  %3862 = vmatprep.subr.mxu0 0.0
  %3863 = vmatpush1.msra.mxu0 0.0
  %3864 = vmatprep.subr.mxu0 0.0
  %3865 = vmatpush1.msra.mxu0 0.0
  %3866 = vmatprep.subr.mxu0 0.0
  %3867 = vmatpush1.msra.mxu0 0.0
  %3868 = vmatprep.subr.mxu0 0.0
  %3869 = vmatpush1.msra.mxu0 0.0
  %3870 = vmatprep.subr.mxu0 0.0
  %3871 = vmatpush1.msra.mxu0 0.0
  %3872 = vmatprep.subr.mxu0 0.0
  %3873 = vmatpush1.msra.mxu0 0.0
  %3874 = vmatprep.subr.mxu0 0.0
  %3875 = vmatpush1.msra.mxu0 0.0
  %3876 = vmatprep.subr.mxu0 0.0
  %3877 = vmatpush1.msra.mxu0 0.0
  %3878 = vmatprep.subr.mxu0 0.0
  %3879 = vmatpush1.msra.mxu0 0.0
  %3880 = vmatprep.subr.mxu0 0.0
  %3881 = vmatpush1.msra.mxu0 0.0
  %3882 = vmatprep.subr.mxu0 0.0
  %3883 = vmatpush1.msra.mxu0 0.0
  %3884 = vmatprep.subr.mxu0 0.0
  %3885 = vmatpush1.msra.mxu0 0.0
  %3886 = vmatprep.subr.mxu0 0.0
  %3887 = vmatpush1.msra.mxu0 0.0
  %3888 = vmatprep.subr.mxu0 0.0
  %3889 = vmatpush1.msra.mxu0 0.0
  %3890 = vmatprep.subr.mxu0 0.0
  %3891 = vmatpush1.msra.mxu0 0.0
  %3892 = vmatprep.subr.mxu0 0.0
  %3893 = vmatpush1.msra.mxu0 0.0
  %3894 = vmatprep.subr.mxu0 0.0
  %3895 = vmatpush1.msra.mxu0 0.0
  %3896 = vmatprep.subr.mxu0 0.0
  %3897 = vmatpush1.msra.mxu0 0.0
  %3898 = vmatprep.subr.mxu0 0.0
  %3899 = vmatpush1.msra.mxu0 0.0
  %3900 = vmatprep.subr.mxu0 0.0
  %3901 = vmatpush1.msra.mxu0 0.0
  %3902 = vmatprep.subr.mxu0 0.0
  %3903 = vmatpush1.msra.mxu0 0.0
  %3904 = vmatprep.subr.mxu0 0.0
  %3905 = vmatpush1.msra.mxu0 0.0
  %3906 = vmatprep.subr.mxu0 0.0
  %3907 = vmatpush1.msra.mxu0 0.0
  %3908 = vmatprep.subr.mxu0 0.0
  %3909 = vmatpush1.msra.mxu0 0.0
  %3910 = vmatprep.subr.mxu0 0.0
  %3911 = vmatpush1.msra.mxu0 0.0
  %3912 = vmatprep.subr.mxu0 0.0
  %3913 = vmatpush1.msra.mxu0 0.0
  %3914 = vmatprep.subr.mxu0 0.0
  %3915 = vmatpush1.msra.mxu0 0.0
  %3916 = vmatprep.subr.mxu0 0.0
  %3917 = vmatpush1.msra.mxu0 0.0
  %3918 = vmatprep.mubr.f32.mxu0 0.0
  %3919 = vmatmul.mubr.f32.gmra.mrb[0].mxu0 %v3852
  %v3920 = vpop.f32.mrb[0].mxu0
  %v3921 = vadd.f32 0.0, %v3920
  %v3922 = vpop.f32.mrb[0].mxu0
  %3923 = vdwg.mxu0
  %v3925 = vsel %vm904, %v3397, 0
  %3927 = vmatprep.subr.mxu0 0.0
  %3928 = vmatpush1.msra.mxu0 %v3080
  %3929 = vmatprep.subr.mxu0 0.0
  %3930 = vmatpush1.msra.mxu0 0.0
  %3931 = vmatprep.subr.mxu0 0.0
  %3932 = vmatpush1.msra.mxu0 0.0
  %3933 = vmatprep.subr.mxu0 0.0
  %3934 = vmatpush1.msra.mxu0 0.0
  %3935 = vmatprep.subr.mxu0 0.0
  %3936 = vmatpush1.msra.mxu0 0.0
  %3937 = vmatprep.subr.mxu0 0.0
  %3938 = vmatpush1.msra.mxu0 0.0
  %3939 = vmatprep.subr.mxu0 0.0
  %3940 = vmatpush1.msra.mxu0 0.0
  %3941 = vmatprep.subr.mxu0 0.0
  %3942 = vmatpush1.msra.mxu0 0.0
  %3943 = vmatprep.subr.mxu0 0.0
  %3944 = vmatpush1.msra.mxu0 0.0
  %3945 = vmatprep.subr.mxu0 0.0
  %3946 = vmatpush1.msra.mxu0 0.0
  %3947 = vmatprep.subr.mxu0 0.0
  %3948 = vmatpush1.msra.mxu0 0.0
  %3949 = vmatprep.subr.mxu0 0.0
  %3950 = vmatpush1.msra.mxu0 0.0
  %3951 = vmatprep.subr.mxu0 0.0
  %3952 = vmatpush1.msra.mxu0 0.0
  %3953 = vmatprep.subr.mxu0 0.0
  %3954 = vmatpush1.msra.mxu0 0.0
  %3955 = vmatprep.subr.mxu0 0.0
  %3956 = vmatpush1.msra.mxu0 0.0
  %3957 = vmatprep.subr.mxu0 0.0
  %3958 = vmatpush1.msra.mxu0 0.0
  %3959 = vmatprep.subr.mxu0 0.0
  %3960 = vmatpush1.msra.mxu0 0.0
  %3961 = vmatprep.subr.mxu0 0.0
  %3962 = vmatpush1.msra.mxu0 0.0
  %3963 = vmatprep.subr.mxu0 0.0
  %3964 = vmatpush1.msra.mxu0 0.0
  %3965 = vmatprep.subr.mxu0 0.0
  %3966 = vmatpush1.msra.mxu0 0.0
  %3967 = vmatprep.subr.mxu0 0.0
  %3968 = vmatpush1.msra.mxu0 0.0
  %3969 = vmatprep.subr.mxu0 0.0
  %3970 = vmatpush1.msra.mxu0 0.0
  %3971 = vmatprep.subr.mxu0 0.0
  %3972 = vmatpush1.msra.mxu0 0.0
  %3973 = vmatprep.subr.mxu0 0.0
  %3974 = vmatpush1.msra.mxu0 0.0
  %3975 = vmatprep.subr.mxu0 0.0
  %3976 = vmatpush1.msra.mxu0 0.0
  %3977 = vmatprep.subr.mxu0 0.0
  %3978 = vmatpush1.msra.mxu0 0.0
  %3979 = vmatprep.subr.mxu0 0.0
  %3980 = vmatpush1.msra.mxu0 0.0
  %3981 = vmatprep.subr.mxu0 0.0
  %3982 = vmatpush1.msra.mxu0 0.0
  %3983 = vmatprep.subr.mxu0 0.0
  %3984 = vmatpush1.msra.mxu0 0.0
  %3985 = vmatprep.subr.mxu0 0.0
  %3986 = vmatpush1.msra.mxu0 0.0
  %3987 = vmatprep.subr.mxu0 0.0
  %3988 = vmatpush1.msra.mxu0 0.0
  %3989 = vmatprep.subr.mxu0 0.0
  %3990 = vmatpush1.msra.mxu0 0.0
  %3991 = vmatprep.mubr.f32.mxu0 0.0
  %3992 = vmatmul.mubr.f32.gmra.mrb[0].mxu0 %v3925
  %v3993 = vpop.f32.mrb[0].mxu0
  %v3994 = vadd.f32 0.0, %v3993
  %v3995 = vpop.f32.mrb[0].mxu0
  %3996 = vdwg.mxu0
  %v3997 = vmul.f32 %v3483, 0.35355338
  %v3998 = vmul.f32 %v3556, 0.35355338
  %v3999 = vmul.f32 %v3629, 0.35355338
  %v4000 = vmul.f32 %v3702, 0.35355338
  %v4001 = vmul.f32 %v3775, 0.35355338
  %v4002 = vmul.f32 %v3848, 0.35355338
  %v4003 = vmul.f32 %v3921, 0.35355338
  %v4004 = vmul.f32 %v3994, 0.35355338
  %v4005 = vadd.f32 %v3997, %v152
  %v4006 = vadd.f32 %v3998, %v153
  %v4007 = vadd.f32 %v3999, %v154
  %v4008 = vadd.f32 %v4000, %v155
  %v4009 = vadd.f32 %v4001, %v156
  %v4010 = vadd.f32 %v4002, %v157
  %v4011 = vadd.f32 %v4003, %v158
  %v4012 = vadd.f32 %v4004, %v159
  %v4013 = vsel %vm904, %v4005, -inf
  %4014 = vmax.xlane.f32.xlu0 %v4013
  %v4015 = vpop.xlane.xlu0 %4014
  %v4016 = vsel %vm904, %v4006, -inf
  %4017 = vmax.xlane.f32.xlu0 %v4016
  %v4018 = vpop.xlane.xlu0 %4017
  %v4019 = vsel %vm904, %v4007, -inf
  %4020 = vmax.xlane.f32.xlu0 %v4019
  %v4021 = vpop.xlane.xlu0 %4020
  %v4022 = vsel %vm904, %v4008, -inf
  %4023 = vmax.xlane.f32.xlu0 %v4022
  %v4024 = vpop.xlane.xlu0 %4023
  %v4025 = vsel %vm904, %v4009, -inf
  %4026 = vmax.xlane.f32.xlu0 %v4025
  %v4027 = vpop.xlane.xlu0 %4026
  %v4028 = vsel %vm904, %v4010, -inf
  %4029 = vmax.xlane.f32.xlu0 %v4028
  %v4030 = vpop.xlane.xlu0 %4029
  %v4031 = vsel %vm904, %v4011, -inf
  %4032 = vmax.xlane.f32.xlu0 %v4031
  %v4033 = vpop.xlane.xlu0 %4032
  %v4034 = vsel %vm904, %v4012, -inf
  %4035 = vmax.xlane.f32.xlu0 %v4034
  %v4036 = vpop.xlane.xlu0 %4035
  %v4037 = vsub.f32 %v4005, %v4015
  %v4038 = vsub.f32 %v4006, %v4018
  %v4039 = vsub.f32 %v4007, %v4021
  %v4040 = vsub.f32 %v4008, %v4024
  %v4041 = vsub.f32 %v4009, %v4027
  %v4042 = vsub.f32 %v4010, %v4030
  %v4043 = vsub.f32 %v4011, %v4033
  %v4044 = vsub.f32 %v4012, %v4036
  %v4045 = vmul.f32 %v4037, 1.442695
  %v4046 = vpow.pop %v4045
  %v4047 = vmul.f32 %v4038, 1.442695
  %v4048 = vpow.pop %v4047
  %v4049 = vmul.f32 %v4039, 1.442695
  %v4050 = vpow.pop %v4049
  %v4051 = vmul.f32 %v4040, 1.442695
  %v4052 = vpow.pop %v4051
  %v4053 = vmul.f32 %v4041, 1.442695
  %v4054 = vpow.pop %v4053
  %v4055 = vmul.f32 %v4042, 1.442695
  %v4056 = vpow.pop %v4055
  %v4057 = vmul.f32 %v4043, 1.442695
  %v4058 = vpow.pop %v4057
  %v4059 = vmul.f32 %v4044, 1.442695
  %v4060 = vpow.pop %v4059
  %v4061 = vsel %vm904, %v4046, 0.0
  %4062 = vadd.xlane.f32.xlu0 %v4061
  %v4063 = vpop.xlane.xlu0 %4062
  %v4064 = vsel %vm904, %v4048, 0.0
  %4065 = vadd.xlane.f32.xlu0 %v4064
  %v4066 = vpop.xlane.xlu0 %4065
  %v4067 = vsel %vm904, %v4050, 0.0
  %4068 = vadd.xlane.f32.xlu0 %v4067
  %v4069 = vpop.xlane.xlu0 %4068
  %v4070 = vsel %vm904, %v4052, 0.0
  %4071 = vadd.xlane.f32.xlu0 %v4070
  %v4072 = vpop.xlane.xlu0 %4071
  %v4073 = vsel %vm904, %v4054, 0.0
  %4074 = vadd.xlane.f32.xlu0 %v4073
  %v4075 = vpop.xlane.xlu0 %4074
  %v4076 = vsel %vm904, %v4056, 0.0
  %4077 = vadd.xlane.f32.xlu0 %v4076
  %v4078 = vpop.xlane.xlu0 %4077
  %v4079 = vsel %vm904, %v4058, 0.0
  %4080 = vadd.xlane.f32.xlu0 %v4079
  %v4081 = vpop.xlane.xlu0 %4080
  %v4082 = vsel %vm904, %v4060, 0.0
  %4083 = vadd.xlane.f32.xlu0 %v4082
  %v4084 = vpop.xlane.xlu0 %4083
  %v4085 = vrcp.pop %v4063
  %v4086 = vrcp.pop %v4066
  %v4087 = vrcp.pop %v4069
  %v4088 = vrcp.pop %v4072
  %v4089 = vrcp.pop %v4075
  %v4090 = vrcp.pop %v4078
  %v4091 = vrcp.pop %v4081
  %v4092 = vrcp.pop %v4084
  %v4093 = vmul.f32 %v4046, %v4085
  %v4094 = vmul.f32 %v4048, %v4086
  %v4095 = vmul.f32 %v4050, %v4087
  %v4096 = vmul.f32 %v4052, %v4088
  %v4097 = vmul.f32 %v4054, %v4089
  %v4098 = vmul.f32 %v4056, %v4090
  %v4099 = vmul.f32 %v4058, %v4091
  %v4100 = vmul.f32 %v4060, %v4092
  %v4102 = vsel %vm904, %v3109, 0
  %v4105 = vsel %vm904, %v4093, 0
  %4107 = vmatprep.subr.mxu0 0.0
  %4108 = vmatpush1.xpose.msra.mxu0 %v4105
  %4109 = vmatprep.subr.mxu0 0.0
  %4110 = vmatpush1.xpose.msra.mxu0 0.0
  %4111 = vmatprep.subr.mxu0 0.0
  %4112 = vmatpush1.xpose.msra.mxu0 0.0
  %4113 = vmatprep.subr.mxu0 0.0
  %4114 = vmatpush1.xpose.msra.mxu0 0.0
  %4115 = vmatprep.subr.mxu0 0.0
  %4116 = vmatpush1.xpose.msra.mxu0 0.0
  %4117 = vmatprep.subr.mxu0 0.0
  %4118 = vmatpush1.xpose.msra.mxu0 0.0
  %4119 = vmatprep.subr.mxu0 0.0
  %4120 = vmatpush1.xpose.msra.mxu0 0.0
  %4121 = vmatprep.subr.mxu0 0.0
  %4122 = vmatpush1.xpose.msra.mxu0 0.0
  %4123 = vmatprep.subr.mxu0 0.0
  %4124 = vmatpush1.xpose.msra.mxu0 0.0
  %4125 = vmatprep.subr.mxu0 0.0
  %4126 = vmatpush1.xpose.msra.mxu0 0.0
  %4127 = vmatprep.subr.mxu0 0.0
  %4128 = vmatpush1.xpose.msra.mxu0 0.0
  %4129 = vmatprep.subr.mxu0 0.0
  %4130 = vmatpush1.xpose.msra.mxu0 0.0
  %4131 = vmatprep.subr.mxu0 0.0
  %4132 = vmatpush1.xpose.msra.mxu0 0.0
  %4133 = vmatprep.subr.mxu0 0.0
  %4134 = vmatpush1.xpose.msra.mxu0 0.0
  %4135 = vmatprep.subr.mxu0 0.0
  %4136 = vmatpush1.xpose.msra.mxu0 0.0
  %4137 = vmatprep.subr.mxu0 0.0
  %4138 = vmatpush1.xpose.msra.mxu0 0.0
  %4139 = vmatprep.subr.mxu0 0.0
  %4140 = vmatpush1.xpose.msra.mxu0 0.0
  %4141 = vmatprep.subr.mxu0 0.0
  %4142 = vmatpush1.xpose.msra.mxu0 0.0
  %4143 = vmatprep.subr.mxu0 0.0
  %4144 = vmatpush1.xpose.msra.mxu0 0.0
  %4145 = vmatprep.subr.mxu0 0.0
  %4146 = vmatpush1.xpose.msra.mxu0 0.0
  %4147 = vmatprep.subr.mxu0 0.0
  %4148 = vmatpush1.xpose.msra.mxu0 0.0
  %4149 = vmatprep.subr.mxu0 0.0
  %4150 = vmatpush1.xpose.msra.mxu0 0.0
  %4151 = vmatprep.subr.mxu0 0.0
  %4152 = vmatpush1.xpose.msra.mxu0 0.0
  %4153 = vmatprep.subr.mxu0 0.0
  %4154 = vmatpush1.xpose.msra.mxu0 0.0
  %4155 = vmatprep.subr.mxu0 0.0
  %4156 = vmatpush1.xpose.msra.mxu0 0.0
  %4157 = vmatprep.subr.mxu0 0.0
  %4158 = vmatpush1.xpose.msra.mxu0 0.0
  %4159 = vmatprep.subr.mxu0 0.0
  %4160 = vmatpush1.xpose.msra.mxu0 0.0
  %4161 = vmatprep.subr.mxu0 0.0
  %4162 = vmatpush1.xpose.msra.mxu0 0.0
  %4163 = vmatprep.subr.mxu0 0.0
  %4164 = vmatpush1.xpose.msra.mxu0 0.0
  %4165 = vmatprep.subr.mxu0 0.0
  %4166 = vmatpush1.xpose.msra.mxu0 0.0
  %4167 = vmatprep.subr.mxu0 0.0
  %4168 = vmatpush1.xpose.msra.mxu0 0.0
  %4169 = vmatprep.subr.mxu0 0.0
  %4170 = vmatpush1.xpose.msra.mxu0 0.0
  %4171 = vmatprep.mubr.f32.mxu0 0.0
  %4172 = vmatmul.mubr.f32.gmra.mrb[0].mxu0 %v4102
  %v4173 = vpop.f32.mrb[0].mxu0
  %v4174 = vadd.f32 0.0, %v4173
  %v4175 = vpop.f32.mrb[0].mxu0
  %4176 = vdwg.mxu0
  %v4178 = vsel %vm904, %v3141, 0
  %v4181 = vsel %vm904, %v4094, 0
  %4183 = vmatprep.subr.mxu0 0.0
  %4184 = vmatpush1.xpose.msra.mxu0 %v4181
  %4185 = vmatprep.subr.mxu0 0.0
  %4186 = vmatpush1.xpose.msra.mxu0 0.0
  %4187 = vmatprep.subr.mxu0 0.0
  %4188 = vmatpush1.xpose.msra.mxu0 0.0
  %4189 = vmatprep.subr.mxu0 0.0
  %4190 = vmatpush1.xpose.msra.mxu0 0.0
  %4191 = vmatprep.subr.mxu0 0.0
  %4192 = vmatpush1.xpose.msra.mxu0 0.0
  %4193 = vmatprep.subr.mxu0 0.0
  %4194 = vmatpush1.xpose.msra.mxu0 0.0
  %4195 = vmatprep.subr.mxu0 0.0
  %4196 = vmatpush1.xpose.msra.mxu0 0.0
  %4197 = vmatprep.subr.mxu0 0.0
  %4198 = vmatpush1.xpose.msra.mxu0 0.0
  %4199 = vmatprep.subr.mxu0 0.0
  %4200 = vmatpush1.xpose.msra.mxu0 0.0
  %4201 = vmatprep.subr.mxu0 0.0
  %4202 = vmatpush1.xpose.msra.mxu0 0.0
  %4203 = vmatprep.subr.mxu0 0.0
  %4204 = vmatpush1.xpose.msra.mxu0 0.0
  %4205 = vmatprep.subr.mxu0 0.0
  %4206 = vmatpush1.xpose.msra.mxu0 0.0
  %4207 = vmatprep.subr.mxu0 0.0
  %4208 = vmatpush1.xpose.msra.mxu0 0.0
  %4209 = vmatprep.subr.mxu0 0.0
  %4210 = vmatpush1.xpose.msra.mxu0 0.0
  %4211 = vmatprep.subr.mxu0 0.0
  %4212 = vmatpush1.xpose.msra.mxu0 0.0
  %4213 = vmatprep.subr.mxu0 0.0
  %4214 = vmatpush1.xpose.msra.mxu0 0.0
  %4215 = vmatprep.subr.mxu0 0.0
  %4216 = vmatpush1.xpose.msra.mxu0 0.0
  %4217 = vmatprep.subr.mxu0 0.0
  %4218 = vmatpush1.xpose.msra.mxu0 0.0
  %4219 = vmatprep.subr.mxu0 0.0
  %4220 = vmatpush1.xpose.msra.mxu0 0.0
  %4221 = vmatprep.subr.mxu0 0.0
  %4222 = vmatpush1.xpose.msra.mxu0 0.0
  %4223 = vmatprep.subr.mxu0 0.0
  %4224 = vmatpush1.xpose.msra.mxu0 0.0
  %4225 = vmatprep.subr.mxu0 0.0
  %4226 = vmatpush1.xpose.msra.mxu0 0.0
  %4227 = vmatprep.subr.mxu0 0.0
  %4228 = vmatpush1.xpose.msra.mxu0 0.0
  %4229 = vmatprep.subr.mxu0 0.0
  %4230 = vmatpush1.xpose.msra.mxu0 0.0
  %4231 = vmatprep.subr.mxu0 0.0
  %4232 = vmatpush1.xpose.msra.mxu0 0.0
  %4233 = vmatprep.subr.mxu0 0.0
  %4234 = vmatpush1.xpose.msra.mxu0 0.0
  %4235 = vmatprep.subr.mxu0 0.0
  %4236 = vmatpush1.xpose.msra.mxu0 0.0
  %4237 = vmatprep.subr.mxu0 0.0
  %4238 = vmatpush1.xpose.msra.mxu0 0.0
  %4239 = vmatprep.subr.mxu0 0.0
  %4240 = vmatpush1.xpose.msra.mxu0 0.0
  %4241 = vmatprep.subr.mxu0 0.0
  %4242 = vmatpush1.xpose.msra.mxu0 0.0
  %4243 = vmatprep.subr.mxu0 0.0
  %4244 = vmatpush1.xpose.msra.mxu0 0.0
  %4245 = vmatprep.subr.mxu0 0.0
  %4246 = vmatpush1.xpose.msra.mxu0 0.0
  %4247 = vmatprep.mubr.f32.mxu0 0.0
  %4248 = vmatmul.mubr.f32.gmra.mrb[0].mxu0 %v4178
  %v4249 = vpop.f32.mrb[0].mxu0
  %v4250 = vadd.f32 0.0, %v4249
  %v4251 = vpop.f32.mrb[0].mxu0
  %4252 = vdwg.mxu0
  %v4254 = vsel %vm904, %v3110, 0
  %v4257 = vsel %vm904, %v4095, 0
  %4259 = vmatprep.subr.mxu0 0.0
  %4260 = vmatpush1.xpose.msra.mxu0 %v4257
  %4261 = vmatprep.subr.mxu0 0.0
  %4262 = vmatpush1.xpose.msra.mxu0 0.0
  %4263 = vmatprep.subr.mxu0 0.0
  %4264 = vmatpush1.xpose.msra.mxu0 0.0
  %4265 = vmatprep.subr.mxu0 0.0
  %4266 = vmatpush1.xpose.msra.mxu0 0.0
  %4267 = vmatprep.subr.mxu0 0.0
  %4268 = vmatpush1.xpose.msra.mxu0 0.0
  %4269 = vmatprep.subr.mxu0 0.0
  %4270 = vmatpush1.xpose.msra.mxu0 0.0
  %4271 = vmatprep.subr.mxu0 0.0
  %4272 = vmatpush1.xpose.msra.mxu0 0.0
  %4273 = vmatprep.subr.mxu0 0.0
  %4274 = vmatpush1.xpose.msra.mxu0 0.0
  %4275 = vmatprep.subr.mxu0 0.0
  %4276 = vmatpush1.xpose.msra.mxu0 0.0
  %4277 = vmatprep.subr.mxu0 0.0
  %4278 = vmatpush1.xpose.msra.mxu0 0.0
  %4279 = vmatprep.subr.mxu0 0.0
  %4280 = vmatpush1.xpose.msra.mxu0 0.0
  %4281 = vmatprep.subr.mxu0 0.0
  %4282 = vmatpush1.xpose.msra.mxu0 0.0
  %4283 = vmatprep.subr.mxu0 0.0
  %4284 = vmatpush1.xpose.msra.mxu0 0.0
  %4285 = vmatprep.subr.mxu0 0.0
  %4286 = vmatpush1.xpose.msra.mxu0 0.0
  %4287 = vmatprep.subr.mxu0 0.0
  %4288 = vmatpush1.xpose.msra.mxu0 0.0
  %4289 = vmatprep.subr.mxu0 0.0
  %4290 = vmatpush1.xpose.msra.mxu0 0.0
  %4291 = vmatprep.subr.mxu0 0.0
  %4292 = vmatpush1.xpose.msra.mxu0 0.0
  %4293 = vmatprep.subr.mxu0 0.0
  %4294 = vmatpush1.xpose.msra.mxu0 0.0
  %4295 = vmatprep.subr.mxu0 0.0
  %4296 = vmatpush1.xpose.msra.mxu0 0.0
  %4297 = vmatprep.subr.mxu0 0.0
  %4298 = vmatpush1.xpose.msra.mxu0 0.0
  %4299 = vmatprep.subr.mxu0 0.0
  %4300 = vmatpush1.xpose.msra.mxu0 0.0
  %4301 = vmatprep.subr.mxu0 0.0
  %4302 = vmatpush1.xpose.msra.mxu0 0.0
  %4303 = vmatprep.subr.mxu0 0.0
  %4304 = vmatpush1.xpose.msra.mxu0 0.0
  %4305 = vmatprep.subr.mxu0 0.0
  %4306 = vmatpush1.xpose.msra.mxu0 0.0
  %4307 = vmatprep.subr.mxu0 0.0
  %4308 = vmatpush1.xpose.msra.mxu0 0.0
  %4309 = vmatprep.subr.mxu0 0.0
  %4310 = vmatpush1.xpose.msra.mxu0 0.0
  %4311 = vmatprep.subr.mxu0 0.0
  %4312 = vmatpush1.xpose.msra.mxu0 0.0
  %4313 = vmatprep.subr.mxu0 0.0
  %4314 = vmatpush1.xpose.msra.mxu0 0.0
  %4315 = vmatprep.subr.mxu0 0.0
  %4316 = vmatpush1.xpose.msra.mxu0 0.0
  %4317 = vmatprep.subr.mxu0 0.0
  %4318 = vmatpush1.xpose.msra.mxu0 0.0
  %4319 = vmatprep.subr.mxu0 0.0
  %4320 = vmatpush1.xpose.msra.mxu0 0.0
  %4321 = vmatprep.subr.mxu0 0.0
  %4322 = vmatpush1.xpose.msra.mxu0 0.0
  %4323 = vmatprep.mubr.f32.mxu0 0.0
  %4324 = vmatmul.mubr.f32.gmra.mrb[0].mxu0 %v4254
  %v4325 = vpop.f32.mrb[0].mxu0
  %v4326 = vadd.f32 0.0, %v4325
  %v4327 = vpop.f32.mrb[0].mxu0
  %4328 = vdwg.mxu0
  %v4330 = vsel %vm904, %v3142, 0
  %v4333 = vsel %vm904, %v4096, 0
  %4335 = vmatprep.subr.mxu0 0.0
  %4336 = vmatpush1.xpose.msra.mxu0 %v4333
  %4337 = vmatprep.subr.mxu0 0.0
  %4338 = vmatpush1.xpose.msra.mxu0 0.0
  %4339 = vmatprep.subr.mxu0 0.0
  %4340 = vmatpush1.xpose.msra.mxu0 0.0
  %4341 = vmatprep.subr.mxu0 0.0
  %4342 = vmatpush1.xpose.msra.mxu0 0.0
  %4343 = vmatprep.subr.mxu0 0.0
  %4344 = vmatpush1.xpose.msra.mxu0 0.0
  %4345 = vmatprep.subr.mxu0 0.0
  %4346 = vmatpush1.xpose.msra.mxu0 0.0
  %4347 = vmatprep.subr.mxu0 0.0
  %4348 = vmatpush1.xpose.msra.mxu0 0.0
  %4349 = vmatprep.subr.mxu0 0.0
  %4350 = vmatpush1.xpose.msra.mxu0 0.0
  %4351 = vmatprep.subr.mxu0 0.0
  %4352 = vmatpush1.xpose.msra.mxu0 0.0
  %4353 = vmatprep.subr.mxu0 0.0
  %4354 = vmatpush1.xpose.msra.mxu0 0.0
  %4355 = vmatprep.subr.mxu0 0.0
  %4356 = vmatpush1.xpose.msra.mxu0 0.0
  %4357 = vmatprep.subr.mxu0 0.0
  %4358 = vmatpush1.xpose.msra.mxu0 0.0
  %4359 = vmatprep.subr.mxu0 0.0
  %4360 = vmatpush1.xpose.msra.mxu0 0.0
  %4361 = vmatprep.subr.mxu0 0.0
  %4362 = vmatpush1.xpose.msra.mxu0 0.0
  %4363 = vmatprep.subr.mxu0 0.0
  %4364 = vmatpush1.xpose.msra.mxu0 0.0
  %4365 = vmatprep.subr.mxu0 0.0
  %4366 = vmatpush1.xpose.msra.mxu0 0.0
  %4367 = vmatprep.subr.mxu0 0.0
  %4368 = vmatpush1.xpose.msra.mxu0 0.0
  %4369 = vmatprep.subr.mxu0 0.0
  %4370 = vmatpush1.xpose.msra.mxu0 0.0
  %4371 = vmatprep.subr.mxu0 0.0
  %4372 = vmatpush1.xpose.msra.mxu0 0.0
  %4373 = vmatprep.subr.mxu0 0.0
  %4374 = vmatpush1.xpose.msra.mxu0 0.0
  %4375 = vmatprep.subr.mxu0 0.0
  %4376 = vmatpush1.xpose.msra.mxu0 0.0
  %4377 = vmatprep.subr.mxu0 0.0
  %4378 = vmatpush1.xpose.msra.mxu0 0.0
  %4379 = vmatprep.subr.mxu0 0.0
  %4380 = vmatpush1.xpose.msra.mxu0 0.0
  %4381 = vmatprep.subr.mxu0 0.0
  %4382 = vmatpush1.xpose.msra.mxu0 0.0
  %4383 = vmatprep.subr.mxu0 0.0
  %4384 = vmatpush1.xpose.msra.mxu0 0.0
  %4385 = vmatprep.subr.mxu0 0.0
  %4386 = vmatpush1.xpose.msra.mxu0 0.0
  %4387 = vmatprep.subr.mxu0 0.0
  %4388 = vmatpush1.xpose.msra.mxu0 0.0
  %4389 = vmatprep.subr.mxu0 0.0
  %4390 = vmatpush1.xpose.msra.mxu0 0.0
  %4391 = vmatprep.subr.mxu0 0.0
  %4392 = vmatpush1.xpose.msra.mxu0 0.0
  %4393 = vmatprep.subr.mxu0 0.0
  %4394 = vmatpush1.xpose.msra.mxu0 0.0
  %4395 = vmatprep.subr.mxu0 0.0
  %4396 = vmatpush1.xpose.msra.mxu0 0.0
  %4397 = vmatprep.subr.mxu0 0.0
  %4398 = vmatpush1.xpose.msra.mxu0 0.0
  %4399 = vmatprep.mubr.f32.mxu0 0.0
  %4400 = vmatmul.mubr.f32.gmra.mrb[0].mxu0 %v4330
  %v4401 = vpop.f32.mrb[0].mxu0
  %v4402 = vadd.f32 0.0, %v4401
  %v4403 = vpop.f32.mrb[0].mxu0
  %4404 = vdwg.mxu0
  %v4406 = vsel %vm904, %v3111, 0
  %v4409 = vsel %vm904, %v4097, 0
  %4411 = vmatprep.subr.mxu0 0.0
  %4412 = vmatpush1.xpose.msra.mxu0 %v4409
  %4413 = vmatprep.subr.mxu0 0.0
  %4414 = vmatpush1.xpose.msra.mxu0 0.0
  %4415 = vmatprep.subr.mxu0 0.0
  %4416 = vmatpush1.xpose.msra.mxu0 0.0
  %4417 = vmatprep.subr.mxu0 0.0
  %4418 = vmatpush1.xpose.msra.mxu0 0.0
  %4419 = vmatprep.subr.mxu0 0.0
  %4420 = vmatpush1.xpose.msra.mxu0 0.0
  %4421 = vmatprep.subr.mxu0 0.0
  %4422 = vmatpush1.xpose.msra.mxu0 0.0
  %4423 = vmatprep.subr.mxu0 0.0
  %4424 = vmatpush1.xpose.msra.mxu0 0.0
  %4425 = vmatprep.subr.mxu0 0.0
  %4426 = vmatpush1.xpose.msra.mxu0 0.0
  %4427 = vmatprep.subr.mxu0 0.0
  %4428 = vmatpush1.xpose.msra.mxu0 0.0
  %4429 = vmatprep.subr.mxu0 0.0
  %4430 = vmatpush1.xpose.msra.mxu0 0.0
  %4431 = vmatprep.subr.mxu0 0.0
  %4432 = vmatpush1.xpose.msra.mxu0 0.0
  %4433 = vmatprep.subr.mxu0 0.0
  %4434 = vmatpush1.xpose.msra.mxu0 0.0
  %4435 = vmatprep.subr.mxu0 0.0
  %4436 = vmatpush1.xpose.msra.mxu0 0.0
  %4437 = vmatprep.subr.mxu0 0.0
  %4438 = vmatpush1.xpose.msra.mxu0 0.0
  %4439 = vmatprep.subr.mxu0 0.0
  %4440 = vmatpush1.xpose.msra.mxu0 0.0
  %4441 = vmatprep.subr.mxu0 0.0
  %4442 = vmatpush1.xpose.msra.mxu0 0.0
  %4443 = vmatprep.subr.mxu0 0.0
  %4444 = vmatpush1.xpose.msra.mxu0 0.0
  %4445 = vmatprep.subr.mxu0 0.0
  %4446 = vmatpush1.xpose.msra.mxu0 0.0
  %4447 = vmatprep.subr.mxu0 0.0
  %4448 = vmatpush1.xpose.msra.mxu0 0.0
  %4449 = vmatprep.subr.mxu0 0.0
  %4450 = vmatpush1.xpose.msra.mxu0 0.0
  %4451 = vmatprep.subr.mxu0 0.0
  %4452 = vmatpush1.xpose.msra.mxu0 0.0
  %4453 = vmatprep.subr.mxu0 0.0
  %4454 = vmatpush1.xpose.msra.mxu0 0.0
  %4455 = vmatprep.subr.mxu0 0.0
  %4456 = vmatpush1.xpose.msra.mxu0 0.0
  %4457 = vmatprep.subr.mxu0 0.0
  %4458 = vmatpush1.xpose.msra.mxu0 0.0
  %4459 = vmatprep.subr.mxu0 0.0
  %4460 = vmatpush1.xpose.msra.mxu0 0.0
  %4461 = vmatprep.subr.mxu0 0.0
  %4462 = vmatpush1.xpose.msra.mxu0 0.0
  %4463 = vmatprep.subr.mxu0 0.0
  %4464 = vmatpush1.xpose.msra.mxu0 0.0
  %4465 = vmatprep.subr.mxu0 0.0
  %4466 = vmatpush1.xpose.msra.mxu0 0.0
  %4467 = vmatprep.subr.mxu0 0.0
  %4468 = vmatpush1.xpose.msra.mxu0 0.0
  %4469 = vmatprep.subr.mxu0 0.0
  %4470 = vmatpush1.xpose.msra.mxu0 0.0
  %4471 = vmatprep.subr.mxu0 0.0
  %4472 = vmatpush1.xpose.msra.mxu0 0.0
  %4473 = vmatprep.subr.mxu0 0.0
  %4474 = vmatpush1.xpose.msra.mxu0 0.0
  %4475 = vmatprep.mubr.f32.mxu0 0.0
  %4476 = vmatmul.mubr.f32.gmra.mrb[0].mxu0 %v4406
  %v4477 = vpop.f32.mrb[0].mxu0
  %v4478 = vadd.f32 0.0, %v4477
  %v4479 = vpop.f32.mrb[0].mxu0
  %4480 = vdwg.mxu0
  %v4482 = vsel %vm904, %v3143, 0
  %v4485 = vsel %vm904, %v4098, 0
  %4487 = vmatprep.subr.mxu0 0.0
  %4488 = vmatpush1.xpose.msra.mxu0 %v4485
  %4489 = vmatprep.subr.mxu0 0.0
  %4490 = vmatpush1.xpose.msra.mxu0 0.0
  %4491 = vmatprep.subr.mxu0 0.0
  %4492 = vmatpush1.xpose.msra.mxu0 0.0
  %4493 = vmatprep.subr.mxu0 0.0
  %4494 = vmatpush1.xpose.msra.mxu0 0.0
  %4495 = vmatprep.subr.mxu0 0.0
  %4496 = vmatpush1.xpose.msra.mxu0 0.0
  %4497 = vmatprep.subr.mxu0 0.0
  %4498 = vmatpush1.xpose.msra.mxu0 0.0
  %4499 = vmatprep.subr.mxu0 0.0
  %4500 = vmatpush1.xpose.msra.mxu0 0.0
  %4501 = vmatprep.subr.mxu0 0.0
  %4502 = vmatpush1.xpose.msra.mxu0 0.0
  %4503 = vmatprep.subr.mxu0 0.0
  %4504 = vmatpush1.xpose.msra.mxu0 0.0
  %4505 = vmatprep.subr.mxu0 0.0
  %4506 = vmatpush1.xpose.msra.mxu0 0.0
  %4507 = vmatprep.subr.mxu0 0.0
  %4508 = vmatpush1.xpose.msra.mxu0 0.0
  %4509 = vmatprep.subr.mxu0 0.0
  %4510 = vmatpush1.xpose.msra.mxu0 0.0
  %4511 = vmatprep.subr.mxu0 0.0
  %4512 = vmatpush1.xpose.msra.mxu0 0.0
  %4513 = vmatprep.subr.mxu0 0.0
  %4514 = vmatpush1.xpose.msra.mxu0 0.0
  %4515 = vmatprep.subr.mxu0 0.0
  %4516 = vmatpush1.xpose.msra.mxu0 0.0
  %4517 = vmatprep.subr.mxu0 0.0
  %4518 = vmatpush1.xpose.msra.mxu0 0.0
  %4519 = vmatprep.subr.mxu0 0.0
  %4520 = vmatpush1.xpose.msra.mxu0 0.0
  %4521 = vmatprep.subr.mxu0 0.0
  %4522 = vmatpush1.xpose.msra.mxu0 0.0
  %4523 = vmatprep.subr.mxu0 0.0
  %4524 = vmatpush1.xpose.msra.mxu0 0.0
  %4525 = vmatprep.subr.mxu0 0.0
  %4526 = vmatpush1.xpose.msra.mxu0 0.0
  %4527 = vmatprep.subr.mxu0 0.0
  %4528 = vmatpush1.xpose.msra.mxu0 0.0
  %4529 = vmatprep.subr.mxu0 0.0
  %4530 = vmatpush1.xpose.msra.mxu0 0.0
  %4531 = vmatprep.subr.mxu0 0.0
  %4532 = vmatpush1.xpose.msra.mxu0 0.0
  %4533 = vmatprep.subr.mxu0 0.0
  %4534 = vmatpush1.xpose.msra.mxu0 0.0
  %4535 = vmatprep.subr.mxu0 0.0
  %4536 = vmatpush1.xpose.msra.mxu0 0.0
  %4537 = vmatprep.subr.mxu0 0.0
  %4538 = vmatpush1.xpose.msra.mxu0 0.0
  %4539 = vmatprep.subr.mxu0 0.0
  %4540 = vmatpush1.xpose.msra.mxu0 0.0
  %4541 = vmatprep.subr.mxu0 0.0
  %4542 = vmatpush1.xpose.msra.mxu0 0.0
  %4543 = vmatprep.subr.mxu0 0.0
  %4544 = vmatpush1.xpose.msra.mxu0 0.0
  %4545 = vmatprep.subr.mxu0 0.0
  %4546 = vmatpush1.xpose.msra.mxu0 0.0
  %4547 = vmatprep.subr.mxu0 0.0
  %4548 = vmatpush1.xpose.msra.mxu0 0.0
  %4549 = vmatprep.subr.mxu0 0.0
  %4550 = vmatpush1.xpose.msra.mxu0 0.0
  %4551 = vmatprep.mubr.f32.mxu0 0.0
  %4552 = vmatmul.mubr.f32.gmra.mrb[0].mxu0 %v4482
  %v4553 = vpop.f32.mrb[0].mxu0
  %v4554 = vadd.f32 0.0, %v4553
  %v4555 = vpop.f32.mrb[0].mxu0
  %4556 = vdwg.mxu0
  %v4558 = vsel %vm904, %v3112, 0
  %v4561 = vsel %vm904, %v4099, 0
  %4563 = vmatprep.subr.mxu0 0.0
  %4564 = vmatpush1.xpose.msra.mxu0 %v4561
  %4565 = vmatprep.subr.mxu0 0.0
  %4566 = vmatpush1.xpose.msra.mxu0 0.0
  %4567 = vmatprep.subr.mxu0 0.0
  %4568 = vmatpush1.xpose.msra.mxu0 0.0
  %4569 = vmatprep.subr.mxu0 0.0
  %4570 = vmatpush1.xpose.msra.mxu0 0.0
  %4571 = vmatprep.subr.mxu0 0.0
  %4572 = vmatpush1.xpose.msra.mxu0 0.0
  %4573 = vmatprep.subr.mxu0 0.0
  %4574 = vmatpush1.xpose.msra.mxu0 0.0
  %4575 = vmatprep.subr.mxu0 0.0
  %4576 = vmatpush1.xpose.msra.mxu0 0.0
  %4577 = vmatprep.subr.mxu0 0.0
  %4578 = vmatpush1.xpose.msra.mxu0 0.0
  %4579 = vmatprep.subr.mxu0 0.0
  %4580 = vmatpush1.xpose.msra.mxu0 0.0
  %4581 = vmatprep.subr.mxu0 0.0
  %4582 = vmatpush1.xpose.msra.mxu0 0.0
  %4583 = vmatprep.subr.mxu0 0.0
  %4584 = vmatpush1.xpose.msra.mxu0 0.0
  %4585 = vmatprep.subr.mxu0 0.0
  %4586 = vmatpush1.xpose.msra.mxu0 0.0
  %4587 = vmatprep.subr.mxu0 0.0
  %4588 = vmatpush1.xpose.msra.mxu0 0.0
  %4589 = vmatprep.subr.mxu0 0.0
  %4590 = vmatpush1.xpose.msra.mxu0 0.0
  %4591 = vmatprep.subr.mxu0 0.0
  %4592 = vmatpush1.xpose.msra.mxu0 0.0
  %4593 = vmatprep.subr.mxu0 0.0
  %4594 = vmatpush1.xpose.msra.mxu0 0.0
  %4595 = vmatprep.subr.mxu0 0.0
  %4596 = vmatpush1.xpose.msra.mxu0 0.0
  %4597 = vmatprep.subr.mxu0 0.0
  %4598 = vmatpush1.xpose.msra.mxu0 0.0
  %4599 = vmatprep.subr.mxu0 0.0
  %4600 = vmatpush1.xpose.msra.mxu0 0.0
  %4601 = vmatprep.subr.mxu0 0.0
  %4602 = vmatpush1.xpose.msra.mxu0 0.0
  %4603 = vmatprep.subr.mxu0 0.0
  %4604 = vmatpush1.xpose.msra.mxu0 0.0
  %4605 = vmatprep.subr.mxu0 0.0
  %4606 = vmatpush1.xpose.msra.mxu0 0.0
  %4607 = vmatprep.subr.mxu0 0.0
  %4608 = vmatpush1.xpose.msra.mxu0 0.0
  %4609 = vmatprep.subr.mxu0 0.0
  %4610 = vmatpush1.xpose.msra.mxu0 0.0
  %4611 = vmatprep.subr.mxu0 0.0
  %4612 = vmatpush1.xpose.msra.mxu0 0.0
  %4613 = vmatprep.subr.mxu0 0.0
  %4614 = vmatpush1.xpose.msra.mxu0 0.0
  %4615 = vmatprep.subr.mxu0 0.0
  %4616 = vmatpush1.xpose.msra.mxu0 0.0
  %4617 = vmatprep.subr.mxu0 0.0
  %4618 = vmatpush1.xpose.msra.mxu0 0.0
  %4619 = vmatprep.subr.mxu0 0.0
  %4620 = vmatpush1.xpose.msra.mxu0 0.0
  %4621 = vmatprep.subr.mxu0 0.0
  %4622 = vmatpush1.xpose.msra.mxu0 0.0
  %4623 = vmatprep.subr.mxu0 0.0
  %4624 = vmatpush1.xpose.msra.mxu0 0.0
  %4625 = vmatprep.subr.mxu0 0.0
  %4626 = vmatpush1.xpose.msra.mxu0 0.0
  %4627 = vmatprep.mubr.f32.mxu0 0.0
  %4628 = vmatmul.mubr.f32.gmra.mrb[0].mxu0 %v4558
  %v4629 = vpop.f32.mrb[0].mxu0
  %v4630 = vadd.f32 0.0, %v4629
  %v4631 = vpop.f32.mrb[0].mxu0
  %4632 = vdwg.mxu0
  %v4634 = vsel %vm904, %v3144, 0
  %v4637 = vsel %vm904, %v4100, 0
  %4639 = vmatprep.subr.mxu0 0.0
  %4640 = vmatpush1.xpose.msra.mxu0 %v4637
  %4641 = vmatprep.subr.mxu0 0.0
  %4642 = vmatpush1.xpose.msra.mxu0 0.0
  %4643 = vmatprep.subr.mxu0 0.0
  %4644 = vmatpush1.xpose.msra.mxu0 0.0
  %4645 = vmatprep.subr.mxu0 0.0
  %4646 = vmatpush1.xpose.msra.mxu0 0.0
  %4647 = vmatprep.subr.mxu0 0.0
  %4648 = vmatpush1.xpose.msra.mxu0 0.0
  %4649 = vmatprep.subr.mxu0 0.0
  %4650 = vmatpush1.xpose.msra.mxu0 0.0
  %4651 = vmatprep.subr.mxu0 0.0
  %4652 = vmatpush1.xpose.msra.mxu0 0.0
  %4653 = vmatprep.subr.mxu0 0.0
  %4654 = vmatpush1.xpose.msra.mxu0 0.0
  %4655 = vmatprep.subr.mxu0 0.0
  %4656 = vmatpush1.xpose.msra.mxu0 0.0
  %4657 = vmatprep.subr.mxu0 0.0
  %4658 = vmatpush1.xpose.msra.mxu0 0.0
  %4659 = vmatprep.subr.mxu0 0.0
  %4660 = vmatpush1.xpose.msra.mxu0 0.0
  %4661 = vmatprep.subr.mxu0 0.0
  %4662 = vmatpush1.xpose.msra.mxu0 0.0
  %4663 = vmatprep.subr.mxu0 0.0
  %4664 = vmatpush1.xpose.msra.mxu0 0.0
  %4665 = vmatprep.subr.mxu0 0.0
  %4666 = vmatpush1.xpose.msra.mxu0 0.0
  %4667 = vmatprep.subr.mxu0 0.0
  %4668 = vmatpush1.xpose.msra.mxu0 0.0
  %4669 = vmatprep.subr.mxu0 0.0
  %4670 = vmatpush1.xpose.msra.mxu0 0.0
  %4671 = vmatprep.subr.mxu0 0.0
  %4672 = vmatpush1.xpose.msra.mxu0 0.0
  %4673 = vmatprep.subr.mxu0 0.0
  %4674 = vmatpush1.xpose.msra.mxu0 0.0
  %4675 = vmatprep.subr.mxu0 0.0
  %4676 = vmatpush1.xpose.msra.mxu0 0.0
  %4677 = vmatprep.subr.mxu0 0.0
  %4678 = vmatpush1.xpose.msra.mxu0 0.0
  %4679 = vmatprep.subr.mxu0 0.0
  %4680 = vmatpush1.xpose.msra.mxu0 0.0
  %4681 = vmatprep.subr.mxu0 0.0
  %4682 = vmatpush1.xpose.msra.mxu0 0.0
  %4683 = vmatprep.subr.mxu0 0.0
  %4684 = vmatpush1.xpose.msra.mxu0 0.0
  %4685 = vmatprep.subr.mxu0 0.0
  %4686 = vmatpush1.xpose.msra.mxu0 0.0
  %4687 = vmatprep.subr.mxu0 0.0
  %4688 = vmatpush1.xpose.msra.mxu0 0.0
  %4689 = vmatprep.subr.mxu0 0.0
  %4690 = vmatpush1.xpose.msra.mxu0 0.0
  %4691 = vmatprep.subr.mxu0 0.0
  %4692 = vmatpush1.xpose.msra.mxu0 0.0
  %4693 = vmatprep.subr.mxu0 0.0
  %4694 = vmatpush1.xpose.msra.mxu0 0.0
  %4695 = vmatprep.subr.mxu0 0.0
  %4696 = vmatpush1.xpose.msra.mxu0 0.0
  %4697 = vmatprep.subr.mxu0 0.0
  %4698 = vmatpush1.xpose.msra.mxu0 0.0
  %4699 = vmatprep.subr.mxu0 0.0
  %4700 = vmatpush1.xpose.msra.mxu0 0.0
  %4701 = vmatprep.subr.mxu0 0.0
  %4702 = vmatpush1.xpose.msra.mxu0 0.0
  %4703 = vmatprep.mubr.f32.mxu0 0.0
  %4704 = vmatmul.mubr.f32.gmra.mrb[0].mxu0 %v4634
  %v4705 = vpop.f32.mrb[0].mxu0
  %v4706 = vadd.f32 0.0, %v4705
  %v4707 = vpop.f32.mrb[0].mxu0
  %4708 = vdwg.mxu0
  %4709 = vxpose.xlu0.b32.start [1/16] %v4174, 128
  %4710 = vxpose.xlu0.b32.cont [2/16] %v4326, 128
  %4711 = vxpose.xlu0.b32.cont [3/16] %v4478, 128
  %4712 = vxpose.xlu0.b32.cont [4/16] %v4630, 128
  %4713 = vxpose.xlu0.b32.cont [5/16] 0.0, 128
  %4714 = vxpose.xlu0.b32.cont [6/16] 0.0, 128
  %4715 = vxpose.xlu0.b32.cont [7/16] 0.0, 128
  %4716 = vxpose.xlu0.b32.cont [8/16] 0.0, 128
  %4717 = vxpose.xlu0.b32.cont [9/16] 0.0, 128
  %4718 = vxpose.xlu0.b32.cont [10/16] 0.0, 128
  %4719 = vxpose.xlu0.b32.cont [11/16] 0.0, 128
  %4720 = vxpose.xlu0.b32.cont [12/16] 0.0, 128
  %4721 = vxpose.xlu0.b32.cont [13/16] 0.0, 128
  %4722 = vxpose.xlu0.b32.cont [14/16] 0.0, 128
  %4723 = vxpose.xlu0.b32.cont [15/16] 0.0, 128
  %4724 = vxpose.xlu0.b32.end [16/16] 0.0, 128
  %v4725 = vpop.trf.xlu0
  %v4726 = vpop.trf.xlu0
  %v4727 = vpop.trf.xlu0
  %v4728 = vpop.trf.xlu0
  %v4729 = vpop.trf.xlu0
  %v4730 = vpop.trf.xlu0
  %v4731 = vpop.trf.xlu0
  %v4732 = vpop.trf.xlu0
  %v4733 = vpop.trf.xlu0
  %v4734 = vpop.trf.xlu0
  %v4735 = vpop.trf.xlu0
  %v4736 = vpop.trf.xlu0
  %v4737 = vpop.trf.xlu0
  %v4738 = vpop.trf.xlu0
  %v4739 = vpop.trf.xlu0
  %v4740 = vpop.trf.xlu0
  %4741 = vxpose.xlu0.b32.start [1/16] %v4250, 128
  %4742 = vxpose.xlu0.b32.cont [2/16] %v4402, 128
  %4743 = vxpose.xlu0.b32.cont [3/16] %v4554, 128
  %4744 = vxpose.xlu0.b32.cont [4/16] %v4706, 128
  %4745 = vxpose.xlu0.b32.cont [5/16] 0.0, 128
  %4746 = vxpose.xlu0.b32.cont [6/16] 0.0, 128
  %4747 = vxpose.xlu0.b32.cont [7/16] 0.0, 128
  %4748 = vxpose.xlu0.b32.cont [8/16] 0.0, 128
  %4749 = vxpose.xlu0.b32.cont [9/16] 0.0, 128
  %4750 = vxpose.xlu0.b32.cont [10/16] 0.0, 128
  %4751 = vxpose.xlu0.b32.cont [11/16] 0.0, 128
  %4752 = vxpose.xlu0.b32.cont [12/16] 0.0, 128
  %4753 = vxpose.xlu0.b32.cont [13/16] 0.0, 128
  %4754 = vxpose.xlu0.b32.cont [14/16] 0.0, 128
  %4755 = vxpose.xlu0.b32.cont [15/16] 0.0, 128
  %4756 = vxpose.xlu0.b32.end [16/16] 0.0, 128
  %v4757 = vpop.trf.xlu0
  %v4758 = vpop.trf.xlu0
  %v4759 = vpop.trf.xlu0
  %v4760 = vpop.trf.xlu0
  %v4761 = vpop.trf.xlu0
  %v4762 = vpop.trf.xlu0
  %v4763 = vpop.trf.xlu0
  %v4764 = vpop.trf.xlu0
  %v4765 = vpop.trf.xlu0
  %v4766 = vpop.trf.xlu0
  %v4767 = vpop.trf.xlu0
  %v4768 = vpop.trf.xlu0
  %v4769 = vpop.trf.xlu0
  %v4770 = vpop.trf.xlu0
  %v4771 = vpop.trf.xlu0
  %v4772 = vpop.trf.xlu0
  %s4773 = scalar_lea.vmem %s6, 32
  %v4774 = vld [vmem:[%s4773] sm:$0xff]
  %v4775 = vld [vmem:[%s4773 + $0x8] sm:$0xff]
  %v4776 = vld [vmem:[%s4773 + $0x10] sm:$0xff]
  %v4777 = vld [vmem:[%s4773 + $0x18] sm:$0xff]
  %v4778 = vlaneseq
  %v4779 = vshrl.u32 %v4778, 7
  %v4780 = vsub.s32 3, %v4779
  %v4781 = vrot.slane %v2669, %v4780
  %v4783 = vsel %vm170, %v4725, 0
  %v4786 = vsel %vm170, %v4757, 0
  %v4789 = vsel %vm170, %v4774, 0
  %v4792 = vsel %vm170, %v4775, 0
  %v4795 = vsel %vm170, %v4776, 0
  %v4798 = vsel %vm170, %v4777, 0
  %4800 = vmatprep.subr.mxu0 0.0
  %4801 = vmatpush1.xpose.msra.mxu0 %v4789
  %4802 = vmatprep.subr.mxu0 0.0
  %4803 = vmatpush1.xpose.msra.mxu0 %v4792
  %4804 = vmatprep.subr.mxu0 0.0
  %4805 = vmatpush1.xpose.msra.mxu0 %v4795
  %4806 = vmatprep.subr.mxu0 0.0
  %4807 = vmatpush1.xpose.msra.mxu0 %v4798
  %4808 = vmatprep.subr.mxu0 0.0
  %4809 = vmatpush1.xpose.msra.mxu0 0.0
  %4810 = vmatprep.subr.mxu0 0.0
  %4811 = vmatpush1.xpose.msra.mxu0 0.0
  %4812 = vmatprep.subr.mxu0 0.0
  %4813 = vmatpush1.xpose.msra.mxu0 0.0
  %4814 = vmatprep.subr.mxu0 0.0
  %4815 = vmatpush1.xpose.msra.mxu0 0.0
  %4816 = vmatprep.subr.mxu0 0.0
  %4817 = vmatpush1.xpose.msra.mxu0 0.0
  %4818 = vmatprep.subr.mxu0 0.0
  %4819 = vmatpush1.xpose.msra.mxu0 0.0
  %4820 = vmatprep.subr.mxu0 0.0
  %4821 = vmatpush1.xpose.msra.mxu0 0.0
  %4822 = vmatprep.subr.mxu0 0.0
  %4823 = vmatpush1.xpose.msra.mxu0 0.0
  %4824 = vmatprep.subr.mxu0 0.0
  %4825 = vmatpush1.xpose.msra.mxu0 0.0
  %4826 = vmatprep.subr.mxu0 0.0
  %4827 = vmatpush1.xpose.msra.mxu0 0.0
  %4828 = vmatprep.subr.mxu0 0.0
  %4829 = vmatpush1.xpose.msra.mxu0 0.0
  %4830 = vmatprep.subr.mxu0 0.0
  %4831 = vmatpush1.xpose.msra.mxu0 0.0
  %4832 = vmatprep.subr.mxu0 0.0
  %4833 = vmatpush1.xpose.msra.mxu0 0.0
  %4834 = vmatprep.subr.mxu0 0.0
  %4835 = vmatpush1.xpose.msra.mxu0 0.0
  %4836 = vmatprep.subr.mxu0 0.0
  %4837 = vmatpush1.xpose.msra.mxu0 0.0
  %4838 = vmatprep.subr.mxu0 0.0
  %4839 = vmatpush1.xpose.msra.mxu0 0.0
  %4840 = vmatprep.subr.mxu0 0.0
  %4841 = vmatpush1.xpose.msra.mxu0 0.0
  %4842 = vmatprep.subr.mxu0 0.0
  %4843 = vmatpush1.xpose.msra.mxu0 0.0
  %4844 = vmatprep.subr.mxu0 0.0
  %4845 = vmatpush1.xpose.msra.mxu0 0.0
  %4846 = vmatprep.subr.mxu0 0.0
  %4847 = vmatpush1.xpose.msra.mxu0 0.0
  %4848 = vmatprep.subr.mxu0 0.0
  %4849 = vmatpush1.xpose.msra.mxu0 0.0
  %4850 = vmatprep.subr.mxu0 0.0
  %4851 = vmatpush1.xpose.msra.mxu0 0.0
  %4852 = vmatprep.subr.mxu0 0.0
  %4853 = vmatpush1.xpose.msra.mxu0 0.0
  %4854 = vmatprep.subr.mxu0 0.0
  %4855 = vmatpush1.xpose.msra.mxu0 0.0
  %4856 = vmatprep.subr.mxu0 0.0
  %4857 = vmatpush1.xpose.msra.mxu0 0.0
  %4858 = vmatprep.subr.mxu0 0.0
  %4859 = vmatpush1.xpose.msra.mxu0 0.0
  %4860 = vmatprep.subr.mxu0 0.0
  %4861 = vmatpush1.xpose.msra.mxu0 0.0
  %4862 = vmatprep.subr.mxu0 0.0
  %4863 = vmatpush1.xpose.msra.mxu0 0.0
  %4864 = vmatprep.mubr.f32.mxu0 0.0
  %4865 = vmatmul.mubr.f32.gmra.mrb[0].mxu0 %v4783
  %v4866 = vpop.f32.mrb[0].mxu0
  %v4867 = vadd.f32 %v4781, %v4866
  %v4868 = vpop.f32.mrb[0].mxu0
  %4869 = vmatprep.mubr.f32.mxu0 0.0
  %4870 = vmatmul.mubr.f32.gmra.mrb[0].mxu0 %v4786
  %v4871 = vpop.f32.mrb[0].mxu0
  %v4872 = vadd.f32 %v4781, %v4871
  %v4873 = vpop.f32.mrb[0].mxu0
  %4874 = vdwg.mxu0
  %v4875 = vadd.f32 %v2666, %v4867
  %v4876 = vadd.f32 %v2667, %v4872
  %v4877 = vsel %vm170, %v4875, 0.0
  %4878 = vadd.xlane.f32.xlu0 %v4877
  %v4879 = vpop.xlane.xlu0 %4878
  %v4880 = vsel %vm170, %v4876, 0.0
  %4881 = vadd.xlane.f32.xlu0 %v4880
  %v4882 = vpop.xlane.xlu0 %4881
  %v4883 = vmul.f32 %v4879, %v2374
  %v4884 = vmul.f32 %v4882, %v2374
  %v4885 = vsub.f32 %v4875, %v4883
  %v4886 = vsub.f32 %v4876, %v4884
  %v4887 = vmul.f32 %v4885, %v4885
  %v4888 = vmul.f32 %v4886, %v4886
  %v4889 = vsel %vm170, %v4887, 0.0
  %4890 = vadd.xlane.f32.xlu0 %v4889
  %v4891 = vpop.xlane.xlu0 %4890
  %v4892 = vsel %vm170, %v4888, 0.0
  %4893 = vadd.xlane.f32.xlu0 %v4892
  %v4894 = vpop.xlane.xlu0 %4893
  %v4895 = vmul.f32 %v4891, %v2374
  %v4896 = vmul.f32 %v4894, %v2374
  %v4897 = vadd.f32 %v4895, 1e-05
  %v4898 = vadd.f32 %v4896, 1e-05
  %v4899 = vrsqrt.pop %v4897
  %v4900 = vrsqrt.pop %v4898
  %v4901 = vmul.f32 %v4885, %v4899
  %v4902 = vmul.f32 %v4886, %v4900
  %v4903 = vlaneseq
  %v4904 = vshrl.u32 %v4903, 7
  %v4905 = vsub.s32 4, %v4904
  %v4906 = vrot.slane %v2669, %v4905
  %v4907 = vmul.f32 %v4901, %v4906
  %v4908 = vmul.f32 %v4902, %v4906
  %v4909 = vlaneseq
  %v4910 = vshrl.u32 %v4909, 7
  %v4911 = vsub.s32 5, %v4910
  %v4912 = vrot.slane %v2669, %v4911
  %v4913 = vadd.f32 %v4907, %v4912
  %v4914 = vadd.f32 %v4908, %v4912
  %s4915 = scalar_lea.vmem %s7, 64
  %v4916 = vld [vmem:[%s4915] sm:$0xff]
  %v4917 = vld [vmem:[%s4915 + $0x8] sm:$0xff]
  %v4918 = vld [vmem:[%s4915 + $0x10] sm:$0xff]
  %v4919 = vld [vmem:[%s4915 + $0x18] sm:$0xff]
  %v4920 = vld [vmem:[%s4915 + $0x20] sm:$0xff]
  %v4921 = vld [vmem:[%s4915 + $0x28] sm:$0xff]
  %v4922 = vld [vmem:[%s4915 + $0x30] sm:$0xff]
  %v4923 = vld [vmem:[%s4915 + $0x38] sm:$0xff]
  %v4924 = vlaneseq
  %v4925 = vshrl.u32 %v4924, 7
  %v4926 = vsub.s32 6, %v4925
  %v4927 = vrot.slane %v2669, %v4926
  %v4929 = vsel %vm170, %v4913, 0
  %v4932 = vsel %vm170, %v4914, 0
  %v4935 = vsel %vm170, %v4916, 0
  %v4938 = vsel %vm170, %v4917, 0
  %v4941 = vsel %vm170, %v4918, 0
  %v4944 = vsel %vm170, %v4919, 0
  %v4947 = vsel %vm170, %v4920, 0
  %v4950 = vsel %vm170, %v4921, 0
  %v4953 = vsel %vm170, %v4922, 0
  %v4956 = vsel %vm170, %v4923, 0
  %4958 = vmatprep.subr.mxu0 0.0
  %4959 = vmatpush1.xpose.msra.mxu0 %v4935
  %4960 = vmatprep.subr.mxu0 0.0
  %4961 = vmatpush1.xpose.msra.mxu0 %v4938
  %4962 = vmatprep.subr.mxu0 0.0
  %4963 = vmatpush1.xpose.msra.mxu0 %v4941
  %4964 = vmatprep.subr.mxu0 0.0
  %4965 = vmatpush1.xpose.msra.mxu0 %v4944
  %4966 = vmatprep.subr.mxu0 0.0
  %4967 = vmatpush1.xpose.msra.mxu0 %v4947
  %4968 = vmatprep.subr.mxu0 0.0
  %4969 = vmatpush1.xpose.msra.mxu0 %v4950
  %4970 = vmatprep.subr.mxu0 0.0
  %4971 = vmatpush1.xpose.msra.mxu0 %v4953
  %4972 = vmatprep.subr.mxu0 0.0
  %4973 = vmatpush1.xpose.msra.mxu0 %v4956
  %4974 = vmatprep.subr.mxu0 0.0
  %4975 = vmatpush1.xpose.msra.mxu0 0.0
  %4976 = vmatprep.subr.mxu0 0.0
  %4977 = vmatpush1.xpose.msra.mxu0 0.0
  %4978 = vmatprep.subr.mxu0 0.0
  %4979 = vmatpush1.xpose.msra.mxu0 0.0
  %4980 = vmatprep.subr.mxu0 0.0
  %4981 = vmatpush1.xpose.msra.mxu0 0.0
  %4982 = vmatprep.subr.mxu0 0.0
  %4983 = vmatpush1.xpose.msra.mxu0 0.0
  %4984 = vmatprep.subr.mxu0 0.0
  %4985 = vmatpush1.xpose.msra.mxu0 0.0
  %4986 = vmatprep.subr.mxu0 0.0
  %4987 = vmatpush1.xpose.msra.mxu0 0.0
  %4988 = vmatprep.subr.mxu0 0.0
  %4989 = vmatpush1.xpose.msra.mxu0 0.0
  %4990 = vmatprep.subr.mxu0 0.0
  %4991 = vmatpush1.xpose.msra.mxu0 0.0
  %4992 = vmatprep.subr.mxu0 0.0
  %4993 = vmatpush1.xpose.msra.mxu0 0.0
  %4994 = vmatprep.subr.mxu0 0.0
  %4995 = vmatpush1.xpose.msra.mxu0 0.0
  %4996 = vmatprep.subr.mxu0 0.0
  %4997 = vmatpush1.xpose.msra.mxu0 0.0
  %4998 = vmatprep.subr.mxu0 0.0
  %4999 = vmatpush1.xpose.msra.mxu0 0.0
  %5000 = vmatprep.subr.mxu0 0.0
  %5001 = vmatpush1.xpose.msra.mxu0 0.0
  %5002 = vmatprep.subr.mxu0 0.0
  %5003 = vmatpush1.xpose.msra.mxu0 0.0
  %5004 = vmatprep.subr.mxu0 0.0
  %5005 = vmatpush1.xpose.msra.mxu0 0.0
  %5006 = vmatprep.subr.mxu0 0.0
  %5007 = vmatpush1.xpose.msra.mxu0 0.0
  %5008 = vmatprep.subr.mxu0 0.0
  %5009 = vmatpush1.xpose.msra.mxu0 0.0
  %5010 = vmatprep.subr.mxu0 0.0
  %5011 = vmatpush1.xpose.msra.mxu0 0.0
  %5012 = vmatprep.subr.mxu0 0.0
  %5013 = vmatpush1.xpose.msra.mxu0 0.0
  %5014 = vmatprep.subr.mxu0 0.0
  %5015 = vmatpush1.xpose.msra.mxu0 0.0
  %5016 = vmatprep.subr.mxu0 0.0
  %5017 = vmatpush1.xpose.msra.mxu0 0.0
  %5018 = vmatprep.subr.mxu0 0.0
  %5019 = vmatpush1.xpose.msra.mxu0 0.0
  %5020 = vmatprep.subr.mxu0 0.0
  %5021 = vmatpush1.xpose.msra.mxu0 0.0
  %5022 = vmatprep.mubr.f32.mxu0 0.0
  %5023 = vmatmul.mubr.f32.gmra.mrb[0].mxu0 %v4929
  %v5024 = vpop.f32.mrb[0].mxu0
  %v5025 = vadd.f32 %v4927, %v5024
  %v5026 = vpop.f32.mrb[0].mxu0
  %5027 = vmatprep.mubr.f32.mxu0 0.0
  %5028 = vmatmul.mubr.f32.gmra.mrb[0].mxu0 %v4932
  %v5029 = vpop.f32.mrb[0].mxu0
  %v5030 = vadd.f32 %v4927, %v5029
  %v5031 = vpop.f32.mrb[0].mxu0
  %5032 = vdwg.mxu0
  %v5033 = vmax.f32 %v5025, 0.0
  %v5034 = vmax.f32 %v5030, 0.0
  %s5035 = scalar_lea.vmem %s8, 32
  %v5036 = vld [vmem:[%s5035] sm:$0xff]
  %v5037 = vld [vmem:[%s5035 + $0x8] sm:$0xff]
  %v5038 = vld [vmem:[%s5035 + $0x10] sm:$0xff]
  %v5039 = vld [vmem:[%s5035 + $0x18] sm:$0xff]
  %v5040 = vlaneseq
  %v5041 = vshrl.u32 %v5040, 7
  %v5042 = vsub.s32 7, %v5041
  %v5043 = vrot.slane %v2669, %v5042
  %v5045 = vsel %vm2534, %v5033, 0
  %v5048 = vsel %vm2534, %v5034, 0
  %v5051 = vsel %vm2534, %v5036, 0
  %v5054 = vsel %vm2534, %v5037, 0
  %v5057 = vsel %vm2534, %v5038, 0
  %v5060 = vsel %vm2534, %v5039, 0
  %5062 = vmatprep.subr.mxu0 0.0
  %5063 = vmatpush1.xpose.msra.mxu0 %v5051
  %5064 = vmatprep.subr.mxu0 0.0
  %5065 = vmatpush1.xpose.msra.mxu0 %v5054
  %5066 = vmatprep.subr.mxu0 0.0
  %5067 = vmatpush1.xpose.msra.mxu0 %v5057
  %5068 = vmatprep.subr.mxu0 0.0
  %5069 = vmatpush1.xpose.msra.mxu0 %v5060
  %5070 = vmatprep.subr.mxu0 0.0
  %5071 = vmatpush1.xpose.msra.mxu0 0.0
  %5072 = vmatprep.subr.mxu0 0.0
  %5073 = vmatpush1.xpose.msra.mxu0 0.0
  %5074 = vmatprep.subr.mxu0 0.0
  %5075 = vmatpush1.xpose.msra.mxu0 0.0
  %5076 = vmatprep.subr.mxu0 0.0
  %5077 = vmatpush1.xpose.msra.mxu0 0.0
  %5078 = vmatprep.subr.mxu0 0.0
  %5079 = vmatpush1.xpose.msra.mxu0 0.0
  %5080 = vmatprep.subr.mxu0 0.0
  %5081 = vmatpush1.xpose.msra.mxu0 0.0
  %5082 = vmatprep.subr.mxu0 0.0
  %5083 = vmatpush1.xpose.msra.mxu0 0.0
  %5084 = vmatprep.subr.mxu0 0.0
  %5085 = vmatpush1.xpose.msra.mxu0 0.0
  %5086 = vmatprep.subr.mxu0 0.0
  %5087 = vmatpush1.xpose.msra.mxu0 0.0
  %5088 = vmatprep.subr.mxu0 0.0
  %5089 = vmatpush1.xpose.msra.mxu0 0.0
  %5090 = vmatprep.subr.mxu0 0.0
  %5091 = vmatpush1.xpose.msra.mxu0 0.0
  %5092 = vmatprep.subr.mxu0 0.0
  %5093 = vmatpush1.xpose.msra.mxu0 0.0
  %5094 = vmatprep.subr.mxu0 0.0
  %5095 = vmatpush1.xpose.msra.mxu0 0.0
  %5096 = vmatprep.subr.mxu0 0.0
  %5097 = vmatpush1.xpose.msra.mxu0 0.0
  %5098 = vmatprep.subr.mxu0 0.0
  %5099 = vmatpush1.xpose.msra.mxu0 0.0
  %5100 = vmatprep.subr.mxu0 0.0
  %5101 = vmatpush1.xpose.msra.mxu0 0.0
  %5102 = vmatprep.subr.mxu0 0.0
  %5103 = vmatpush1.xpose.msra.mxu0 0.0
  %5104 = vmatprep.subr.mxu0 0.0
  %5105 = vmatpush1.xpose.msra.mxu0 0.0
  %5106 = vmatprep.subr.mxu0 0.0
  %5107 = vmatpush1.xpose.msra.mxu0 0.0
  %5108 = vmatprep.subr.mxu0 0.0
  %5109 = vmatpush1.xpose.msra.mxu0 0.0
  %5110 = vmatprep.subr.mxu0 0.0
  %5111 = vmatpush1.xpose.msra.mxu0 0.0
  %5112 = vmatprep.subr.mxu0 0.0
  %5113 = vmatpush1.xpose.msra.mxu0 0.0
  %5114 = vmatprep.subr.mxu0 0.0
  %5115 = vmatpush1.xpose.msra.mxu0 0.0
  %5116 = vmatprep.subr.mxu0 0.0
  %5117 = vmatpush1.xpose.msra.mxu0 0.0
  %5118 = vmatprep.subr.mxu0 0.0
  %5119 = vmatpush1.xpose.msra.mxu0 0.0
  %5120 = vmatprep.subr.mxu0 0.0
  %5121 = vmatpush1.xpose.msra.mxu0 0.0
  %5122 = vmatprep.subr.mxu0 0.0
  %5123 = vmatpush1.xpose.msra.mxu0 0.0
  %5124 = vmatprep.subr.mxu0 0.0
  %5125 = vmatpush1.xpose.msra.mxu0 0.0
  %5126 = vmatprep.mubr.f32.mxu0 0.0
  %5127 = vmatmul.mubr.f32.gmra.mrb[0].mxu0 %v5045
  %v5128 = vpop.f32.mrb[0].mxu0
  %v5129 = vadd.f32 %v5043, %v5128
  %v5130 = vpop.f32.mrb[0].mxu0
  %5131 = vmatprep.mubr.f32.mxu0 0.0
  %5132 = vmatmul.mubr.f32.gmra.mrb[0].mxu0 %v5048
  %v5133 = vpop.f32.mrb[0].mxu0
  %v5134 = vadd.f32 %v5043, %v5133
  %v5135 = vpop.f32.mrb[0].mxu0
  %5136 = vdwg.mxu0
  %v5137 = vadd.f32 %v4913, %v5129
  %v5138 = vadd.f32 %v4914, %v5134
  %v5139 = vsel %vm170, %v5137, 0.0
  %5140 = vadd.xlane.f32.xlu0 %v5139
  %v5141 = vpop.xlane.xlu0 %5140
  %v5142 = vsel %vm170, %v5138, 0.0
  %5143 = vadd.xlane.f32.xlu0 %v5142
  %v5144 = vpop.xlane.xlu0 %5143
  %v5145 = vmul.f32 %v5141, %v2374
  %v5146 = vmul.f32 %v5144, %v2374
  %v5147 = vsub.f32 %v5137, %v5145
  %v5148 = vsub.f32 %v5138, %v5146
  %v5149 = vmul.f32 %v5147, %v5147
  %v5150 = vmul.f32 %v5148, %v5148
  %v5151 = vsel %vm170, %v5149, 0.0
  %5152 = vadd.xlane.f32.xlu0 %v5151
  %v5153 = vpop.xlane.xlu0 %5152
  %v5154 = vsel %vm170, %v5150, 0.0
  %5155 = vadd.xlane.f32.xlu0 %v5154
  %v5156 = vpop.xlane.xlu0 %5155
  %v5157 = vmul.f32 %v5153, %v2374
  %v5158 = vmul.f32 %v5156, %v2374
  %v5159 = vadd.f32 %v5157, 1e-05
  %v5160 = vadd.f32 %v5158, 1e-05
  %v5161 = vrsqrt.pop %v5159
  %v5162 = vrsqrt.pop %v5160
  %v5163 = vmul.f32 %v5147, %v5161
  %v5164 = vmul.f32 %v5148, %v5162
  %v5165 = vlaneseq
  %v5166 = vshrl.u32 %v5165, 7
  %v5167 = vsub.s32 0, %v5166
  %v5168 = vrot.slane %v2670, %v5167
  %v5169 = vmul.f32 %v5163, %v5168
  %v5170 = vmul.f32 %v5164, %v5168
  %v5171 = vlaneseq
  %v5172 = vshrl.u32 %v5171, 7
  %v5173 = vsub.s32 1, %v5172
  %v5174 = vrot.slane %v2670, %v5173
  %v5175 = vadd.f32 %v5169, %v5174
  %v5176 = vadd.f32 %v5170, %v5174
  %v5177 = vld [vmem:[%s10] sm:$0xff]
  %v5178 = vld [vmem:[%s10 + $0x8] sm:$0xff]
  %v5179 = vld [vmem:[%s10 + $0x10] sm:$0xff]
  %v5180 = vld [vmem:[%s10 + $0x18] sm:$0xff]
  %v5181 = vld [vmem:[%s10 + $0x20] sm:$0xff]
  %v5182 = vld [vmem:[%s10 + $0x28] sm:$0xff]
  %v5183 = vld [vmem:[%s10 + $0x30] sm:$0xff]
  %v5184 = vld [vmem:[%s10 + $0x38] sm:$0xff]
  %v5185 = vld [vmem:[%s10 + $0x40] sm:$0xff]
  %v5186 = vld [vmem:[%s10 + $0x48] sm:$0xff]
  %v5187 = vld [vmem:[%s10 + $0x50] sm:$0xff]
  %v5188 = vld [vmem:[%s10 + $0x58] sm:$0xff]
  %v5189 = vld [vmem:[%s10 + $0x60] sm:$0xff]
  %v5190 = vld [vmem:[%s10 + $0x68] sm:$0xff]
  %v5191 = vld [vmem:[%s10 + $0x70] sm:$0xff]
  %v5192 = vld [vmem:[%s10 + $0x78] sm:$0xff]
  %v5193 = vlaneseq
  %v5194 = vshrl.u32 %v5193, 7
  %v5195 = vsub.s32 1, %v5194
  %v5196 = vrot.slane %v41, %v5195
  %v5198 = vsel %vm170, %v5175, 0
  %v5201 = vsel %vm170, %v5176, 0
  %v5204 = vsel %vm170, %v5177, 0
  %v5207 = vsel %vm170, %v5178, 0
  %v5210 = vsel %vm170, %v5179, 0
  %v5213 = vsel %vm170, %v5180, 0
  %v5216 = vsel %vm170, %v5181, 0
  %v5219 = vsel %vm170, %v5182, 0
  %v5222 = vsel %vm170, %v5183, 0
  %v5225 = vsel %vm170, %v5184, 0
  %v5228 = vsel %vm170, %v5185, 0
  %v5231 = vsel %vm170, %v5186, 0
  %v5234 = vsel %vm170, %v5187, 0
  %v5237 = vsel %vm170, %v5188, 0
  %v5240 = vsel %vm170, %v5189, 0
  %v5243 = vsel %vm170, %v5190, 0
  %v5246 = vsel %vm170, %v5191, 0
  %v5249 = vsel %vm170, %v5192, 0
  %5251 = vmatprep.subr.mxu0 0.0
  %5252 = vmatpush1.xpose.msra.mxu0 %v5204
  %5253 = vmatprep.subr.mxu0 0.0
  %5254 = vmatpush1.xpose.msra.mxu0 %v5207
  %5255 = vmatprep.subr.mxu0 0.0
  %5256 = vmatpush1.xpose.msra.mxu0 %v5210
  %5257 = vmatprep.subr.mxu0 0.0
  %5258 = vmatpush1.xpose.msra.mxu0 %v5213
  %5259 = vmatprep.subr.mxu0 0.0
  %5260 = vmatpush1.xpose.msra.mxu0 %v5216
  %5261 = vmatprep.subr.mxu0 0.0
  %5262 = vmatpush1.xpose.msra.mxu0 %v5219
  %5263 = vmatprep.subr.mxu0 0.0
  %5264 = vmatpush1.xpose.msra.mxu0 %v5222
  %5265 = vmatprep.subr.mxu0 0.0
  %5266 = vmatpush1.xpose.msra.mxu0 %v5225
  %5267 = vmatprep.subr.mxu0 0.0
  %5268 = vmatpush1.xpose.msra.mxu0 %v5228
  %5269 = vmatprep.subr.mxu0 0.0
  %5270 = vmatpush1.xpose.msra.mxu0 %v5231
  %5271 = vmatprep.subr.mxu0 0.0
  %5272 = vmatpush1.xpose.msra.mxu0 %v5234
  %5273 = vmatprep.subr.mxu0 0.0
  %5274 = vmatpush1.xpose.msra.mxu0 %v5237
  %5275 = vmatprep.subr.mxu0 0.0
  %5276 = vmatpush1.xpose.msra.mxu0 %v5240
  %5277 = vmatprep.subr.mxu0 0.0
  %5278 = vmatpush1.xpose.msra.mxu0 %v5243
  %5279 = vmatprep.subr.mxu0 0.0
  %5280 = vmatpush1.xpose.msra.mxu0 %v5246
  %5281 = vmatprep.subr.mxu0 0.0
  %5282 = vmatpush1.xpose.msra.mxu0 %v5249
  %5283 = vmatprep.subr.mxu0 0.0
  %5284 = vmatpush1.xpose.msra.mxu0 0.0
  %5285 = vmatprep.subr.mxu0 0.0
  %5286 = vmatpush1.xpose.msra.mxu0 0.0
  %5287 = vmatprep.subr.mxu0 0.0
  %5288 = vmatpush1.xpose.msra.mxu0 0.0
  %5289 = vmatprep.subr.mxu0 0.0
  %5290 = vmatpush1.xpose.msra.mxu0 0.0
  %5291 = vmatprep.subr.mxu0 0.0
  %5292 = vmatpush1.xpose.msra.mxu0 0.0
  %5293 = vmatprep.subr.mxu0 0.0
  %5294 = vmatpush1.xpose.msra.mxu0 0.0
  %5295 = vmatprep.subr.mxu0 0.0
  %5296 = vmatpush1.xpose.msra.mxu0 0.0
  %5297 = vmatprep.subr.mxu0 0.0
  %5298 = vmatpush1.xpose.msra.mxu0 0.0
  %5299 = vmatprep.subr.mxu0 0.0
  %5300 = vmatpush1.xpose.msra.mxu0 0.0
  %5301 = vmatprep.subr.mxu0 0.0
  %5302 = vmatpush1.xpose.msra.mxu0 0.0
  %5303 = vmatprep.subr.mxu0 0.0
  %5304 = vmatpush1.xpose.msra.mxu0 0.0
  %5305 = vmatprep.subr.mxu0 0.0
  %5306 = vmatpush1.xpose.msra.mxu0 0.0
  %5307 = vmatprep.subr.mxu0 0.0
  %5308 = vmatpush1.xpose.msra.mxu0 0.0
  %5309 = vmatprep.subr.mxu0 0.0
  %5310 = vmatpush1.xpose.msra.mxu0 0.0
  %5311 = vmatprep.subr.mxu0 0.0
  %5312 = vmatpush1.xpose.msra.mxu0 0.0
  %5313 = vmatprep.subr.mxu0 0.0
  %5314 = vmatpush1.xpose.msra.mxu0 0.0
  %5315 = vmatprep.mubr.f32.mxu0 0.0
  %5316 = vmatmul.mubr.f32.gmra.mrb[0].mxu0 %v5198
  %v5317 = vpop.f32.mrb[0].mxu0
  %v5318 = vadd.f32 %v5196, %v5317
  %v5319 = vpop.f32.mrb[0].mxu0
  %5320 = vmatprep.mubr.f32.mxu0 0.0
  %5321 = vmatmul.mubr.f32.gmra.mrb[0].mxu0 %v5201
  %v5322 = vpop.f32.mrb[0].mxu0
  %v5323 = vadd.f32 %v5196, %v5322
  %v5324 = vpop.f32.mrb[0].mxu0
  %5325 = vdwg.mxu0
  %v5326 = vsub.f32 0.0, %v5318
  %v5327 = vsub.f32 0.0, %v5323
  %v5328 = vmul.f32 %v5326, 1.442695
  %v5329 = vpow.pop %v5328
  %v5330 = vmul.f32 %v5327, 1.442695
  %v5331 = vpow.pop %v5330
  %v5332 = vadd.f32 %v5329, 1.0
  %v5333 = vadd.f32 %v5331, 1.0
  %v5334 = vrcp.pop %v5332
  %v5335 = vmul.f32 1.0, %v5334
  %v5336 = vrcp.pop %v5333
  %v5337 = vmul.f32 1.0, %v5336
  %5338 = vst [vmem:[%s12] sm:$0xff] %v5335
  %5339 = vst [vmem:[%s12 + $0x8] sm:$0xff] %v5337
  %v5340 = vld [vmem:[%s11] sm:$0xff]
  %v5341 = vld [vmem:[%s11 + $0x8] sm:$0xff]
  %v5342 = vld [vmem:[%s11 + $0x10] sm:$0xff]
  %v5343 = vld [vmem:[%s11 + $0x18] sm:$0xff]
  %v5344 = vld [vmem:[%s11 + $0x20] sm:$0xff]
  %v5345 = vld [vmem:[%s11 + $0x28] sm:$0xff]
  %v5346 = vld [vmem:[%s11 + $0x30] sm:$0xff]
  %v5347 = vld [vmem:[%s11 + $0x38] sm:$0xff]
  %v5348 = vld [vmem:[%s11 + $0x40] sm:$0xff]
  %v5349 = vld [vmem:[%s11 + $0x48] sm:$0xff]
  %v5350 = vld [vmem:[%s11 + $0x50] sm:$0xff]
  %v5351 = vld [vmem:[%s11 + $0x58] sm:$0xff]
  %v5352 = vld [vmem:[%s11 + $0x60] sm:$0xff]
  %v5353 = vld [vmem:[%s11 + $0x68] sm:$0xff]
  %v5354 = vld [vmem:[%s11 + $0x70] sm:$0xff]
  %v5355 = vld [vmem:[%s11 + $0x78] sm:$0xff]
  %v5356 = vlaneseq
  %v5357 = vshrl.u32 %v5356, 7
  %v5358 = vsub.s32 2, %v5357
  %v5359 = vrot.slane %v41, %v5358
  %5360 = vmatprep.subr.mxu0 0.0
  %5361 = vmatpush1.xpose.msra.mxu0 %v5340
  %5362 = vmatprep.subr.mxu0 0.0
  %5363 = vmatpush1.xpose.msra.mxu0 %v5341
  %5364 = vmatprep.subr.mxu0 0.0
  %5365 = vmatpush1.xpose.msra.mxu0 %v5342
  %5366 = vmatprep.subr.mxu0 0.0
  %5367 = vmatpush1.xpose.msra.mxu0 %v5343
  %5368 = vmatprep.subr.mxu0 0.0
  %5369 = vmatpush1.xpose.msra.mxu0 %v5344
  %5370 = vmatprep.subr.mxu0 0.0
  %5371 = vmatpush1.xpose.msra.mxu0 %v5345
  %5372 = vmatprep.subr.mxu0 0.0
  %5373 = vmatpush1.xpose.msra.mxu0 %v5346
  %5374 = vmatprep.subr.mxu0 0.0
  %5375 = vmatpush1.xpose.msra.mxu0 %v5347
  %5376 = vmatprep.subr.mxu0 0.0
  %5377 = vmatpush1.xpose.msra.mxu0 %v5348
  %5378 = vmatprep.subr.mxu0 0.0
  %5379 = vmatpush1.xpose.msra.mxu0 %v5349
  %5380 = vmatprep.subr.mxu0 0.0
  %5381 = vmatpush1.xpose.msra.mxu0 %v5350
  %5382 = vmatprep.subr.mxu0 0.0
  %5383 = vmatpush1.xpose.msra.mxu0 %v5351
  %5384 = vmatprep.subr.mxu0 0.0
  %5385 = vmatpush1.xpose.msra.mxu0 %v5352
  %5386 = vmatprep.subr.mxu0 0.0
  %5387 = vmatpush1.xpose.msra.mxu0 %v5353
  %5388 = vmatprep.subr.mxu0 0.0
  %5389 = vmatpush1.xpose.msra.mxu0 %v5354
  %5390 = vmatprep.subr.mxu0 0.0
  %5391 = vmatpush1.xpose.msra.mxu0 %v5355
  %5392 = vmatprep.subr.mxu0 0.0
  %5393 = vmatpush1.xpose.msra.mxu0 0.0
  %5394 = vmatprep.subr.mxu0 0.0
  %5395 = vmatpush1.xpose.msra.mxu0 0.0
  %5396 = vmatprep.subr.mxu0 0.0
  %5397 = vmatpush1.xpose.msra.mxu0 0.0
  %5398 = vmatprep.subr.mxu0 0.0
  %5399 = vmatpush1.xpose.msra.mxu0 0.0
  %5400 = vmatprep.subr.mxu0 0.0
  %5401 = vmatpush1.xpose.msra.mxu0 0.0
  %5402 = vmatprep.subr.mxu0 0.0
  %5403 = vmatpush1.xpose.msra.mxu0 0.0
  %5404 = vmatprep.subr.mxu0 0.0
  %5405 = vmatpush1.xpose.msra.mxu0 0.0
  %5406 = vmatprep.subr.mxu0 0.0
  %5407 = vmatpush1.xpose.msra.mxu0 0.0
  %5408 = vmatprep.subr.mxu0 0.0
  %5409 = vmatpush1.xpose.msra.mxu0 0.0
  %5410 = vmatprep.subr.mxu0 0.0
  %5411 = vmatpush1.xpose.msra.mxu0 0.0
  %5412 = vmatprep.subr.mxu0 0.0
  %5413 = vmatpush1.xpose.msra.mxu0 0.0
  %5414 = vmatprep.subr.mxu0 0.0
  %5415 = vmatpush1.xpose.msra.mxu0 0.0
  %5416 = vmatprep.subr.mxu0 0.0
  %5417 = vmatpush1.xpose.msra.mxu0 0.0
  %5418 = vmatprep.subr.mxu0 0.0
  %5419 = vmatpush1.xpose.msra.mxu0 0.0
  %5420 = vmatprep.subr.mxu0 0.0
  %5421 = vmatpush1.xpose.msra.mxu0 0.0
  %5422 = vmatprep.subr.mxu0 0.0
  %5423 = vmatpush1.xpose.msra.mxu0 0.0
  %5424 = vmatprep.mubr.f32.mxu0 0.0
  %5425 = vmatmul.mubr.f32.gmra.mrb[0].mxu0 %v5318
  %v5426 = vpop.f32.mrb[0].mxu0
  %v5427 = vadd.f32 %v5359, %v5426
  %v5428 = vpop.f32.mrb[0].mxu0
  %5429 = vmatprep.mubr.f32.mxu0 0.0
  %5430 = vmatmul.mubr.f32.gmra.mrb[0].mxu0 %v5323
  %v5431 = vpop.f32.mrb[0].mxu0
  %v5432 = vadd.f32 %v5359, %v5431
  %v5433 = vpop.f32.mrb[0].mxu0
  %5434 = vdwg.mxu0
  %s5435 = scalar_lea.vmem %s12, 16
  %5436 = vst [vmem:[%s5435] sm:$0xff] %v5427
  %5437 = vst [vmem:[%s5435 + $0x8] sm:$0xff] %v5432
  // Predicated region
  $region50: #{timeseries_transformer_forward.1} parent=0 // pred_check
    _
  $region51: #{timeseries_transformer_forward.1} parent=0 // pred_check_branch
    %5439 = sbr.rel (0) target = $region53
  $region52: #{timeseries_transformer_forward.1} parent=0 // pred_region
    _
  $region53: #{timeseries_transformer_forward.1} parent=0 // pred_fallthru
    _
  // Predicated region
  $region54: #{timeseries_transformer_forward.1} parent=0 // pred_check
    _
  $region55: #{timeseries_transformer_forward.1} parent=0 // pred_check_branch
    %5441 = sbr.rel (0) target = $region57
  $region56: #{timeseries_transformer_forward.1} parent=0 // pred_region
    _
  $region57: #{timeseries_transformer_forward.1} parent=0 // pred_fallthru
    _

</llo_original>
